<compile_context>
chip_gen: v7x
topology: tpu7x:2x2x1
jax: 0.10.0
libtpu: 0.0.40
codegen_flags: <defaults>
</compile_context>

<pallas_src>
import functools

import jax
import jax.numpy as jnp
from jax import lax
from jax.experimental import pallas as pl
from jax.experimental.pallas import tpu as pltpu

POOL_SIZES = (5, 9, 13)      # realized as a cascade of k=5 pools (SPPF equivalence)
CASCADE_K = 5
P = CASCADE_K // 2           # halo per cascade stage (2)
BN_EPS = 1e-5
MM_DTYPE = jnp.bfloat16      # MXU operand dtype (f32 accumulation)


def _spp_kernel(x_ref, colw_ref, w1_ref, b1_ref, w2_ref, b2_ref, o_ref,
                *, H, W, pool_dtype):
    # x_ref:    (1, H*W, Cin)       bf16, one image, flat channels-last
    # colw_ref: (H*W, 1)            int32, (flat index) mod W (host precomputed)
    # w1_ref:   (Cin, Cmid)         bf16, 1x1 conv #1 with BN folded in
    # b1_ref:   (1, Cmid)           f32
    # w2_ref:   (2, 2*Cmid, Cout)   bf16, 1x1 conv #2 split into 2 paired slabs
    # b2_ref:   (1, Cout)           f32
    # o_ref:    (1, H*W, Cout)
    HW = H * W
    shifts = tuple(d for d in range(-P, P + 1) if d != 0)
    neg_inf = float("-inf")

    # Tiny per-position edge masks, shape (HW, 1), broadcast over the lane
    # (channel) axis inside jnp.where -- no full-size (H,W,C) masks.
    fi = lax.broadcasted_iota(jnp.int32, (HW, 1), 0)          # flat spatial index
    colw = colw_ref[...]                                      # (HW, 1): index mod W
    row_ok = {d: (fi < (H - d) * W) if d > 0 else (fi >= (-d) * W) for d in shifts}
    col_ok = {d: (colw < (W - d)) if d > 0 else (colw >= (-d)) for d in shifts}

    def pool5(v):
        # Stride-1 k=5 max pool with -inf padding, separable.  Shifts on the
        # flat (HW, C) layout are XLU sublane rolls (by d*W vertically, d
        # horizontally); wrapped-in values land only at masked positions, and
        # the d = 0 seed keeps every in-image position finite.
        r = v
        for d in shifts:                                       # vertical (row) pass
            s = pltpu.roll(v, shift=(-d * W) % HW, axis=0)
            r = jnp.maximum(r, jnp.where(row_ok[d], s, neg_inf))
        c = r
        for d in shifts:                                       # horizontal (col) pass
            s = pltpu.roll(r, shift=(-d) % HW, axis=0)
            c = jnp.maximum(c, jnp.where(col_ok[d], s, neg_inf))
        return c

    # ---- stage 1: 1x1 conv (channel matmul) + folded BN + SiLU ----
    y = jnp.dot(x_ref[0], w1_ref[...], preferred_element_type=jnp.float32) + b1_ref[...]
    t = y * jax.nn.sigmoid(y)                                  # (HW, Cmid) f32

    # ---- stages 2+3 fused: SPPF cascade + slab-paired second 1x1 conv ----
    p5 = pool5(t.astype(pool_dtype))
    # pair 0: [t, p5] @ w2[:, :2*Cmid, :]  (K = 2*Cmid; lane-dim concat is cheap)
    z = jnp.dot(jnp.concatenate([t.astype(MM_DTYPE), p5.astype(MM_DTYPE)], axis=1),
                w2_ref[0], preferred_element_type=jnp.float32)
    p9 = pool5(p5)
    p13 = pool5(p9)
    # pair 1: [p9, p13] @ w2[:, 2*Cmid:, :]
    z = z + jnp.dot(jnp.concatenate([p9.astype(MM_DTYPE), p13.astype(MM_DTYPE)], axis=1),
                    w2_ref[1], preferred_element_type=jnp.float32)

    # ---- epilogue: bias + SiLU ----
    z = z + b2_ref[...]
    o_ref[0] = (z * jax.nn.sigmoid(z)).astype(o_ref.dtype)


def _vmem_limit_bytes(HW, Cin, Cmid, Cout, out_itemsize):
    est = (
        2 * HW * Cin * 2                          # input block (bf16, double-buffered)
        + 2 * HW * Cout * out_itemsize            # output block (double-buffered)
        + 2 * HW * 128 * 4                        # column-index block (1 lane, padded)
        + 2 * ((Cin * Cmid + 4 * Cmid * Cout) * 2 + (Cmid + Cout) * 4)  # weights/biases
        + (8 * HW * Cmid + 3 * HW * Cout) * 4     # f32 live temps (t, pooled, rolls, z)
        + 6 * HW * Cmid * 2                       # bf16 matmul operands / paired concats
    )
    try:
        # 64 MiB per core on v7x, 128 MiB on v5e/v6e.
        phys = int(pltpu.get_tpu_info().vmem_capacity_bytes)
    except Exception:
        phys = 64 << 20                           # unknown -> assume smallest (v7x)
    cap = (phys * 3) // 4                         # headroom for compiler-internal scratch
    return int(min(cap, max(32 << 20, 2 * est)))


def spp_pallas(x, w1_eff, b1_eff, w2_eff, b2_eff, *,
               channels_last=False, out_dtype=jnp.float32, pool_dtype=jnp.float32):
    """SPP forward.  x is NCHW by default (matches the torch module); pass
    channels_last=True / out_dtype=bf16 to drop the boundary transposes and
    halve output writeback when the surrounding net is channels-last."""
    if channels_last:
        N, H, W, Cin = x.shape
        x_nhwc = x
    else:
        N, Cin, H, W = x.shape
        x_nhwc = jnp.transpose(x, (0, 2, 3, 1))
    HW = H * W
    Cmid = w1_eff.shape[1]
    Cout = w2_eff.shape[1]

    # Flat (N, H*W, C) at the kernel boundary; the merge of contiguous H, W is a
    # metadata-only reshape (no relayout), and the bf16 cast fuses with it.
    x_flat = x_nhwc.reshape(N, HW, Cin).astype(MM_DTYPE)
    w1 = w1_eff.astype(MM_DTYPE)
    w2 = w2_eff.reshape(2, 2 * Cmid, Cout).astype(MM_DTYPE)   # pairs: [t,p5] / [p9,p13]
    b1 = b1_eff.reshape(1, Cmid).astype(jnp.float32)
    b2 = b2_eff.reshape(1, Cout).astype(jnp.float32)
    colw = (jnp.arange(HW, dtype=jnp.int32) % W).reshape(HW, 1)

    kernel = functools.partial(_spp_kernel, H=H, W=W, pool_dtype=pool_dtype)

    out_flat = pl.pallas_call(
        kernel,
        out_shape=jax.ShapeDtypeStruct((N, HW, Cout), out_dtype),
        grid=(N,),
        in_specs=[
            pl.BlockSpec((1, HW, Cin), lambda n: (n, 0, 0)),
            pl.BlockSpec((HW, 1), lambda n: (0, 0)),
            pl.BlockSpec((Cin, Cmid), lambda n: (0, 0)),
            pl.BlockSpec((1, Cmid), lambda n: (0, 0)),
            pl.BlockSpec((2, 2 * Cmid, Cout), lambda n: (0, 0, 0)),
            pl.BlockSpec((1, Cout), lambda n: (0, 0)),
        ],
        out_specs=pl.BlockSpec((1, HW, Cout), lambda n: (n, 0, 0)),
        compiler_params=pltpu.CompilerParams(
            dimension_semantics=("parallel",),      # batch -> both TCs on v7x
            vmem_limit_bytes=_vmem_limit_bytes(HW, Cin, Cmid, Cout,
                                               jnp.dtype(out_dtype).itemsize),
        ),
    )(x_flat, colw, w1, b1, w2, b2)

    out = out_flat.reshape(N, H, W, Cout)           # metadata-only split
    if not channels_last:
        out = jnp.transpose(out, (0, 3, 1, 2))
    return out


def _fold_cbs(key, cin, cout):
    """Deterministic Conv2d(1x1) + BatchNorm2d(eval) params, folded into (W, b)."""
    k0, k1, k2, k3, k4, k5 = jax.random.split(key, 6)
    w_conv = 0.1 * jax.random.normal(k0, (cout, cin), jnp.float32)   # torch (Cout,Cin,1,1)
    b_conv = 0.1 * jax.random.normal(k1, (cout,), jnp.float32)
    gamma = 1.0 + 0.1 * jax.random.normal(k2, (cout,), jnp.float32)
    beta = 0.1 * jax.random.normal(k3, (cout,), jnp.float32)
    r_mean = 0.05 * jax.random.normal(k4, (cout,), jnp.float32)
    r_var = 1.0 + 0.1 * jnp.abs(jax.random.normal(k5, (cout,), jnp.float32))
    scale = gamma / jnp.sqrt(r_var + BN_EPS)
    w_eff = w_conv.T * scale[None, :]          # (Cin, Cout), channels-last matmul
    b_eff = (b_conv - r_mean) * scale + beta
    return w_eff, b_eff


def init_spp_params(key, in_channel, out_channel):
    mid = out_channel // 2
    cat_c = mid * (len(POOL_SIZES) + 1)
    k1, k2 = jax.random.split(key)
    w1_eff, b1_eff = _fold_cbs(k1, in_channel, mid)
    w2_eff, b2_eff = _fold_cbs(k2, cat_c, out_channel)
    return w1_eff, b1_eff, w2_eff, b2_eff


def spp_reference(x_nchw, w1_eff, b1_eff, w2_eff, b2_eff):
    """Plain-JAX f32 reference with the original module's math (NCHW in / out)."""
    x = jnp.transpose(x_nchw, (0, 2, 3, 1)).astype(jnp.float32)
    t = jnp.einsum('nhwc,cd->nhwd', x, w1_eff) + b1_eff
    t = t * jax.nn.sigmoid(t)
    feats = [t]
    for k in POOL_SIZES:
        p = k // 2
        pooled = lax.reduce_window(
            t, -jnp.inf, lax.max,
            window_dimensions=(1, k, k, 1),
            window_strides=(1, 1, 1, 1),
            padding=((0, 0), (p, p), (p, p), (0, 0)))
        feats.append(pooled)
    cat = jnp.concatenate(feats, axis=-1)
    o = jnp.einsum('nhwc,cd->nhwd', cat, w2_eff) + b2_eff
    o = o * jax.nn.sigmoid(o)
    return jnp.transpose(o, (0, 3, 1, 2))


if __name__ == "__main__":
    key = jax.random.PRNGKey(0)

    # Two small configs: one with tiny (unaligned) channels, one with
    # lane-aligned Cmid=128 exercising the paired K=256 matmul path.
    configs = [
        # (N, Cin, H, W, Cout)
        (2, 8, 16, 16, 16),     # Cmid = 8
        (1, 16, 8, 8, 256),     # Cmid = 128
    ]
    for i, (N, Cin, H, W, Cout) in enumerate(configs):
        kx, kp = jax.random.split(jax.random.fold_in(key, i))
        x = jax.random.normal(kx, (N, Cin, H, W), jnp.float32)
        params = init_spp_params(kp, Cin, Cout)

        out = jax.block_until_ready(spp_pallas(x, *params))
        ref = spp_reference(x, *params)

        assert out.shape == (N, Cout, H, W), out.shape
        # Kernel uses bf16 MXU operands (f32 accumulation) -> compare at
        # bf16-level tolerance against the pure-f32 reference.
        if not bool(jnp.allclose(out, ref, rtol=5e-2, atol=5e-2)):
            raise AssertionError(
                f"config {i}: Pallas/reference mismatch, max abs err = "
                f"{float(jnp.max(jnp.abs(out - ref)))}")
    print("KERNEL_OK")
</pallas_src>

<mosaic_0001>
module attributes {stable_mosaic.version = 11 : i64} {
  func.func @_spp_kernel(%arg0: i32, %arg1: memref<1x256x8xbf16, #tpu.memory_space<vmem>>, %arg2: memref<256x1xi32, #tpu.memory_space<vmem>>, %arg3: memref<8x8xbf16, #tpu.memory_space<vmem>>, %arg4: memref<1x8xf32, #tpu.memory_space<vmem>>, %arg5: memref<2x16x16xbf16, #tpu.memory_space<vmem>>, %arg6: memref<1x16xf32, #tpu.memory_space<vmem>>, %arg7: memref<1x256x16xf32, #tpu.memory_space<vmem>>) attributes {dimension_semantics = [#tpu.dimension_semantics<parallel>], iteration_bounds = array<i64: 2>, scalar_prefetch = 0 : i64, scratch_operands = 0 : i64, tpu.core_type = #tpu.core_type<tc>, window_params = [{transform_indices = @transform_0, window_bounds = array<i64: 1, 256, 8>}, {pipeline_mode = #tpu.pipeline_mode<synchronous>, transform_indices = @transform_1, window_bounds = array<i64: 256, 1>}, {pipeline_mode = #tpu.pipeline_mode<synchronous>, transform_indices = @transform_2, window_bounds = array<i64: 8, 8>}, {pipeline_mode = #tpu.pipeline_mode<synchronous>, transform_indices = @transform_3, window_bounds = array<i64: 1, 8>}, {pipeline_mode = #tpu.pipeline_mode<synchronous>, transform_indices = @transform_4, window_bounds = array<i64: 2, 16, 16>}, {pipeline_mode = #tpu.pipeline_mode<synchronous>, transform_indices = @transform_5, window_bounds = array<i64: 1, 16>}, {transform_indices = @transform_6, window_bounds = array<i64: 1, 256, 16>}]} {
    %0 = tpu.iota {dimensions = array<i32: 0>} : vector<256x1xi32>
    %c0 = arith.constant 0 : index
    %c0_0 = arith.constant 0 : index
    %1 = vector.load %arg2[%c0, %c0_0] : memref<256x1xi32, #tpu.memory_space<vmem>>, vector<256x1xi32>
    %c32_i32 = arith.constant 32 : i32
    %2 = vector.broadcast %c32_i32 : i32 to vector<256x1xi32>
    %3 = arith.cmpi sge, %0, %2 : vector<256x1xi32>
    %c16_i32 = arith.constant 16 : i32
    %4 = vector.broadcast %c16_i32 : i32 to vector<256x1xi32>
    %5 = arith.cmpi sge, %0, %4 : vector<256x1xi32>
    %c240_i32 = arith.constant 240 : i32
    %6 = vector.broadcast %c240_i32 : i32 to vector<256x1xi32>
    %7 = arith.cmpi slt, %0, %6 : vector<256x1xi32>
    %c224_i32 = arith.constant 224 : i32
    %8 = vector.broadcast %c224_i32 : i32 to vector<256x1xi32>
    %9 = arith.cmpi slt, %0, %8 : vector<256x1xi32>
    %c2_i32 = arith.constant 2 : i32
    %10 = vector.broadcast %c2_i32 : i32 to vector<256x1xi32>
    %11 = arith.cmpi sge, %1, %10 : vector<256x1xi32>
    %c1_i32 = arith.constant 1 : i32
    %12 = vector.broadcast %c1_i32 : i32 to vector<256x1xi32>
    %13 = arith.cmpi sge, %1, %12 : vector<256x1xi32>
    %c15_i32 = arith.constant 15 : i32
    %14 = vector.broadcast %c15_i32 : i32 to vector<256x1xi32>
    %15 = arith.cmpi slt, %1, %14 : vector<256x1xi32>
    %c14_i32 = arith.constant 14 : i32
    %16 = vector.broadcast %c14_i32 : i32 to vector<256x1xi32>
    %17 = arith.cmpi slt, %1, %16 : vector<256x1xi32>
    %c0_1 = arith.constant 0 : index
    %c0_2 = arith.constant 0 : index
    %c0_3 = arith.constant 0 : index
    %18 = vector.load %arg1[%c0_1, %c0_2, %c0_3] : memref<1x256x8xbf16, #tpu.memory_space<vmem>>, vector<1x256x8xbf16>
    %19 = vector.shape_cast %18 : vector<1x256x8xbf16> to vector<256x8xbf16>
    %c0_4 = arith.constant 0 : index
    %c0_5 = arith.constant 0 : index
    %20 = vector.load %arg3[%c0_4, %c0_5] : memref<8x8xbf16, #tpu.memory_space<vmem>>, vector<8x8xbf16>
    %cst = arith.constant dense<0.000000e+00> : vector<256x8xf32>
    %21 = tpu.matmul %19, %20, %cst {dimension_numbers = #tpu.dot_dimension_numbers<[1], [0], [0], [1], [0, 0, 1, 1], [], []>} : vector<256x8xbf16>, vector<8x8xbf16>, vector<256x8xf32> -> vector<256x8xf32>
    %c0_6 = arith.constant 0 : index
    %c0_7 = arith.constant 0 : index
    %22 = vector.load %arg4[%c0_6, %c0_7] : memref<1x8xf32, #tpu.memory_space<vmem>>, vector<1x8xf32>
    %23 = vector.broadcast %22 : vector<1x8xf32> to vector<256x8xf32>
    %24 = arith.addf %21, %23 : vector<256x8xf32>
    %25 = arith.negf %24 : vector<256x8xf32>
    %26 = math.exp %25 : vector<256x8xf32>
    %cst_8 = arith.constant 1.000000e+00 : f32
    %27 = vector.broadcast %cst_8 : f32 to vector<256x8xf32>
    %28 = arith.addf %27, %26 : vector<256x8xf32>
    %29 = arith.divf %27, %28 : vector<256x8xf32>
    %30 = arith.mulf %24, %29 : vector<256x8xf32>
    %c32_i32_9 = arith.constant 32 : i32
    %31 = tpu.dynamic_rotate %30 by %c32_i32_9 dim 0 : vector<256x8xf32>, i32 -> vector<256x8xf32>
    %cst_10 = arith.constant 0xFF800000 : f32
    %32 = vector.shape_cast %3 : vector<256x1xi1> to vector<256x1xi1>
    %33 = vector.broadcast %32 : vector<256x1xi1> to vector<256x8xi1>
    %34 = vector.broadcast %cst_10 : f32 to vector<256x8xf32>
    %35 = arith.select %33, %31, %34 : vector<256x8xi1>, vector<256x8xf32>
    %36 = arith.maximumf %30, %35 : vector<256x8xf32>
    %c16_i32_11 = arith.constant 16 : i32
    %37 = tpu.dynamic_rotate %30 by %c16_i32_11 dim 0 : vector<256x8xf32>, i32 -> vector<256x8xf32>
    %cst_12 = arith.constant 0xFF800000 : f32
    %38 = vector.shape_cast %5 : vector<256x1xi1> to vector<256x1xi1>
    %39 = vector.broadcast %38 : vector<256x1xi1> to vector<256x8xi1>
    %40 = vector.broadcast %cst_12 : f32 to vector<256x8xf32>
    %41 = arith.select %39, %37, %40 : vector<256x8xi1>, vector<256x8xf32>
    %42 = arith.maximumf %36, %41 : vector<256x8xf32>
    %c240_i32_13 = arith.constant 240 : i32
    %43 = tpu.dynamic_rotate %30 by %c240_i32_13 dim 0 : vector<256x8xf32>, i32 -> vector<256x8xf32>
    %cst_14 = arith.constant 0xFF800000 : f32
    %44 = vector.shape_cast %7 : vector<256x1xi1> to vector<256x1xi1>
    %45 = vector.broadcast %44 : vector<256x1xi1> to vector<256x8xi1>
    %46 = vector.broadcast %cst_14 : f32 to vector<256x8xf32>
    %47 = arith.select %45, %43, %46 : vector<256x8xi1>, vector<256x8xf32>
    %48 = arith.maximumf %42, %47 : vector<256x8xf32>
    %c224_i32_15 = arith.constant 224 : i32
    %49 = tpu.dynamic_rotate %30 by %c224_i32_15 dim 0 : vector<256x8xf32>, i32 -> vector<256x8xf32>
    %cst_16 = arith.constant 0xFF800000 : f32
    %50 = vector.shape_cast %9 : vector<256x1xi1> to vector<256x1xi1>
    %51 = vector.broadcast %50 : vector<256x1xi1> to vector<256x8xi1>
    %52 = vector.broadcast %cst_16 : f32 to vector<256x8xf32>
    %53 = arith.select %51, %49, %52 : vector<256x8xi1>, vector<256x8xf32>
    %54 = arith.maximumf %48, %53 : vector<256x8xf32>
    %c2_i32_17 = arith.constant 2 : i32
    %55 = tpu.dynamic_rotate %54 by %c2_i32_17 dim 0 : vector<256x8xf32>, i32 -> vector<256x8xf32>
    %cst_18 = arith.constant 0xFF800000 : f32
    %56 = vector.shape_cast %11 : vector<256x1xi1> to vector<256x1xi1>
    %57 = vector.broadcast %56 : vector<256x1xi1> to vector<256x8xi1>
    %58 = vector.broadcast %cst_18 : f32 to vector<256x8xf32>
    %59 = arith.select %57, %55, %58 : vector<256x8xi1>, vector<256x8xf32>
    %60 = arith.maximumf %54, %59 : vector<256x8xf32>
    %c1_i32_19 = arith.constant 1 : i32
    %61 = tpu.dynamic_rotate %54 by %c1_i32_19 dim 0 : vector<256x8xf32>, i32 -> vector<256x8xf32>
    %cst_20 = arith.constant 0xFF800000 : f32
    %62 = vector.shape_cast %13 : vector<256x1xi1> to vector<256x1xi1>
    %63 = vector.broadcast %62 : vector<256x1xi1> to vector<256x8xi1>
    %64 = vector.broadcast %cst_20 : f32 to vector<256x8xf32>
    %65 = arith.select %63, %61, %64 : vector<256x8xi1>, vector<256x8xf32>
    %66 = arith.maximumf %60, %65 : vector<256x8xf32>
    %c255_i32 = arith.constant 255 : i32
    %67 = tpu.dynamic_rotate %54 by %c255_i32 dim 0 : vector<256x8xf32>, i32 -> vector<256x8xf32>
    %cst_21 = arith.constant 0xFF800000 : f32
    %68 = vector.shape_cast %15 : vector<256x1xi1> to vector<256x1xi1>
    %69 = vector.broadcast %68 : vector<256x1xi1> to vector<256x8xi1>
    %70 = vector.broadcast %cst_21 : f32 to vector<256x8xf32>
    %71 = arith.select %69, %67, %70 : vector<256x8xi1>, vector<256x8xf32>
    %72 = arith.maximumf %66, %71 : vector<256x8xf32>
    %c254_i32 = arith.constant 254 : i32
    %73 = tpu.dynamic_rotate %54 by %c254_i32 dim 0 : vector<256x8xf32>, i32 -> vector<256x8xf32>
    %cst_22 = arith.constant 0xFF800000 : f32
    %74 = vector.shape_cast %17 : vector<256x1xi1> to vector<256x1xi1>
    %75 = vector.broadcast %74 : vector<256x1xi1> to vector<256x8xi1>
    %76 = vector.broadcast %cst_22 : f32 to vector<256x8xf32>
    %77 = arith.select %75, %73, %76 : vector<256x8xi1>, vector<256x8xf32>
    %78 = arith.maximumf %72, %77 : vector<256x8xf32>
    %79 = arith.truncf %30 : vector<256x8xf32> to vector<256x8xbf16>
    %80 = arith.truncf %78 : vector<256x8xf32> to vector<256x8xbf16>
    %81 = tpu.concatenate %79, %80 in 1 : vector<256x8xbf16>, vector<256x8xbf16> -> vector<256x16xbf16>
    %c0_23 = arith.constant 0 : index
    %c0_24 = arith.constant 0 : index
    %c0_25 = arith.constant 0 : index
    %82 = vector.load %arg5[%c0_23, %c0_24, %c0_25] : memref<2x16x16xbf16, #tpu.memory_space<vmem>>, vector<1x16x16xbf16>
    %83 = vector.shape_cast %82 : vector<1x16x16xbf16> to vector<16x16xbf16>
    %cst_26 = arith.constant dense<0.000000e+00> : vector<256x16xf32>
    %84 = tpu.matmul %81, %83, %cst_26 {dimension_numbers = #tpu.dot_dimension_numbers<[1], [0], [0], [1], [0, 0, 1, 1], [], []>} : vector<256x16xbf16>, vector<16x16xbf16>, vector<256x16xf32> -> vector<256x16xf32>
    %c32_i32_27 = arith.constant 32 : i32
    %85 = tpu.dynamic_rotate %78 by %c32_i32_27 dim 0 : vector<256x8xf32>, i32 -> vector<256x8xf32>
    %cst_28 = arith.constant 0xFF800000 : f32
    %86 = vector.shape_cast %3 : vector<256x1xi1> to vector<256x1xi1>
    %87 = vector.broadcast %86 : vector<256x1xi1> to vector<256x8xi1>
    %88 = vector.broadcast %cst_28 : f32 to vector<256x8xf32>
    %89 = arith.select %87, %85, %88 : vector<256x8xi1>, vector<256x8xf32>
    %90 = arith.maximumf %78, %89 : vector<256x8xf32>
    %c16_i32_29 = arith.constant 16 : i32
    %91 = tpu.dynamic_rotate %78 by %c16_i32_29 dim 0 : vector<256x8xf32>, i32 -> vector<256x8xf32>
    %cst_30 = arith.constant 0xFF800000 : f32
    %92 = vector.shape_cast %5 : vector<256x1xi1> to vector<256x1xi1>
    %93 = vector.broadcast %92 : vector<256x1xi1> to vector<256x8xi1>
    %94 = vector.broadcast %cst_30 : f32 to vector<256x8xf32>
    %95 = arith.select %93, %91, %94 : vector<256x8xi1>, vector<256x8xf32>
    %96 = arith.maximumf %90, %95 : vector<256x8xf32>
    %c240_i32_31 = arith.constant 240 : i32
    %97 = tpu.dynamic_rotate %78 by %c240_i32_31 dim 0 : vector<256x8xf32>, i32 -> vector<256x8xf32>
    %cst_32 = arith.constant 0xFF800000 : f32
    %98 = vector.shape_cast %7 : vector<256x1xi1> to vector<256x1xi1>
    %99 = vector.broadcast %98 : vector<256x1xi1> to vector<256x8xi1>
    %100 = vector.broadcast %cst_32 : f32 to vector<256x8xf32>
    %101 = arith.select %99, %97, %100 : vector<256x8xi1>, vector<256x8xf32>
    %102 = arith.maximumf %96, %101 : vector<256x8xf32>
    %c224_i32_33 = arith.constant 224 : i32
    %103 = tpu.dynamic_rotate %78 by %c224_i32_33 dim 0 : vector<256x8xf32>, i32 -> vector<256x8xf32>
    %cst_34 = arith.constant 0xFF800000 : f32
    %104 = vector.shape_cast %9 : vector<256x1xi1> to vector<256x1xi1>
    %105 = vector.broadcast %104 : vector<256x1xi1> to vector<256x8xi1>
    %106 = vector.broadcast %cst_34 : f32 to vector<256x8xf32>
    %107 = arith.select %105, %103, %106 : vector<256x8xi1>, vector<256x8xf32>
    %108 = arith.maximumf %102, %107 : vector<256x8xf32>
    %c2_i32_35 = arith.constant 2 : i32
    %109 = tpu.dynamic_rotate %108 by %c2_i32_35 dim 0 : vector<256x8xf32>, i32 -> vector<256x8xf32>
    %cst_36 = arith.constant 0xFF800000 : f32
    %110 = vector.shape_cast %11 : vector<256x1xi1> to vector<256x1xi1>
    %111 = vector.broadcast %110 : vector<256x1xi1> to vector<256x8xi1>
    %112 = vector.broadcast %cst_36 : f32 to vector<256x8xf32>
    %113 = arith.select %111, %109, %112 : vector<256x8xi1>, vector<256x8xf32>
    %114 = arith.maximumf %108, %113 : vector<256x8xf32>
    %c1_i32_37 = arith.constant 1 : i32
    %115 = tpu.dynamic_rotate %108 by %c1_i32_37 dim 0 : vector<256x8xf32>, i32 -> vector<256x8xf32>
    %cst_38 = arith.constant 0xFF800000 : f32
    %116 = vector.shape_cast %13 : vector<256x1xi1> to vector<256x1xi1>
    %117 = vector.broadcast %116 : vector<256x1xi1> to vector<256x8xi1>
    %118 = vector.broadcast %cst_38 : f32 to vector<256x8xf32>
    %119 = arith.select %117, %115, %118 : vector<256x8xi1>, vector<256x8xf32>
    %120 = arith.maximumf %114, %119 : vector<256x8xf32>
    %c255_i32_39 = arith.constant 255 : i32
    %121 = tpu.dynamic_rotate %108 by %c255_i32_39 dim 0 : vector<256x8xf32>, i32 -> vector<256x8xf32>
    %cst_40 = arith.constant 0xFF800000 : f32
    %122 = vector.shape_cast %15 : vector<256x1xi1> to vector<256x1xi1>
    %123 = vector.broadcast %122 : vector<256x1xi1> to vector<256x8xi1>
    %124 = vector.broadcast %cst_40 : f32 to vector<256x8xf32>
    %125 = arith.select %123, %121, %124 : vector<256x8xi1>, vector<256x8xf32>
    %126 = arith.maximumf %120, %125 : vector<256x8xf32>
    %c254_i32_41 = arith.constant 254 : i32
    %127 = tpu.dynamic_rotate %108 by %c254_i32_41 dim 0 : vector<256x8xf32>, i32 -> vector<256x8xf32>
    %cst_42 = arith.constant 0xFF800000 : f32
    %128 = vector.shape_cast %17 : vector<256x1xi1> to vector<256x1xi1>
    %129 = vector.broadcast %128 : vector<256x1xi1> to vector<256x8xi1>
    %130 = vector.broadcast %cst_42 : f32 to vector<256x8xf32>
    %131 = arith.select %129, %127, %130 : vector<256x8xi1>, vector<256x8xf32>
    %132 = arith.maximumf %126, %131 : vector<256x8xf32>
    %c32_i32_43 = arith.constant 32 : i32
    %133 = tpu.dynamic_rotate %132 by %c32_i32_43 dim 0 : vector<256x8xf32>, i32 -> vector<256x8xf32>
    %cst_44 = arith.constant 0xFF800000 : f32
    %134 = vector.shape_cast %3 : vector<256x1xi1> to vector<256x1xi1>
    %135 = vector.broadcast %134 : vector<256x1xi1> to vector<256x8xi1>
    %136 = vector.broadcast %cst_44 : f32 to vector<256x8xf32>
    %137 = arith.select %135, %133, %136 : vector<256x8xi1>, vector<256x8xf32>
    %138 = arith.maximumf %132, %137 : vector<256x8xf32>
    %c16_i32_45 = arith.constant 16 : i32
    %139 = tpu.dynamic_rotate %132 by %c16_i32_45 dim 0 : vector<256x8xf32>, i32 -> vector<256x8xf32>
    %cst_46 = arith.constant 0xFF800000 : f32
    %140 = vector.shape_cast %5 : vector<256x1xi1> to vector<256x1xi1>
    %141 = vector.broadcast %140 : vector<256x1xi1> to vector<256x8xi1>
    %142 = vector.broadcast %cst_46 : f32 to vector<256x8xf32>
    %143 = arith.select %141, %139, %142 : vector<256x8xi1>, vector<256x8xf32>
    %144 = arith.maximumf %138, %143 : vector<256x8xf32>
    %c240_i32_47 = arith.constant 240 : i32
    %145 = tpu.dynamic_rotate %132 by %c240_i32_47 dim 0 : vector<256x8xf32>, i32 -> vector<256x8xf32>
    %cst_48 = arith.constant 0xFF800000 : f32
    %146 = vector.shape_cast %7 : vector<256x1xi1> to vector<256x1xi1>
    %147 = vector.broadcast %146 : vector<256x1xi1> to vector<256x8xi1>
    %148 = vector.broadcast %cst_48 : f32 to vector<256x8xf32>
    %149 = arith.select %147, %145, %148 : vector<256x8xi1>, vector<256x8xf32>
    %150 = arith.maximumf %144, %149 : vector<256x8xf32>
    %c224_i32_49 = arith.constant 224 : i32
    %151 = tpu.dynamic_rotate %132 by %c224_i32_49 dim 0 : vector<256x8xf32>, i32 -> vector<256x8xf32>
    %cst_50 = arith.constant 0xFF800000 : f32
    %152 = vector.shape_cast %9 : vector<256x1xi1> to vector<256x1xi1>
    %153 = vector.broadcast %152 : vector<256x1xi1> to vector<256x8xi1>
    %154 = vector.broadcast %cst_50 : f32 to vector<256x8xf32>
    %155 = arith.select %153, %151, %154 : vector<256x8xi1>, vector<256x8xf32>
    %156 = arith.maximumf %150, %155 : vector<256x8xf32>
    %c2_i32_51 = arith.constant 2 : i32
    %157 = tpu.dynamic_rotate %156 by %c2_i32_51 dim 0 : vector<256x8xf32>, i32 -> vector<256x8xf32>
    %cst_52 = arith.constant 0xFF800000 : f32
    %158 = vector.shape_cast %11 : vector<256x1xi1> to vector<256x1xi1>
    %159 = vector.broadcast %158 : vector<256x1xi1> to vector<256x8xi1>
    %160 = vector.broadcast %cst_52 : f32 to vector<256x8xf32>
    %161 = arith.select %159, %157, %160 : vector<256x8xi1>, vector<256x8xf32>
    %162 = arith.maximumf %156, %161 : vector<256x8xf32>
    %c1_i32_53 = arith.constant 1 : i32
    %163 = tpu.dynamic_rotate %156 by %c1_i32_53 dim 0 : vector<256x8xf32>, i32 -> vector<256x8xf32>
    %cst_54 = arith.constant 0xFF800000 : f32
    %164 = vector.shape_cast %13 : vector<256x1xi1> to vector<256x1xi1>
    %165 = vector.broadcast %164 : vector<256x1xi1> to vector<256x8xi1>
    %166 = vector.broadcast %cst_54 : f32 to vector<256x8xf32>
    %167 = arith.select %165, %163, %166 : vector<256x8xi1>, vector<256x8xf32>
    %168 = arith.maximumf %162, %167 : vector<256x8xf32>
    %c255_i32_55 = arith.constant 255 : i32
    %169 = tpu.dynamic_rotate %156 by %c255_i32_55 dim 0 : vector<256x8xf32>, i32 -> vector<256x8xf32>
    %cst_56 = arith.constant 0xFF800000 : f32
    %170 = vector.shape_cast %15 : vector<256x1xi1> to vector<256x1xi1>
    %171 = vector.broadcast %170 : vector<256x1xi1> to vector<256x8xi1>
    %172 = vector.broadcast %cst_56 : f32 to vector<256x8xf32>
    %173 = arith.select %171, %169, %172 : vector<256x8xi1>, vector<256x8xf32>
    %174 = arith.maximumf %168, %173 : vector<256x8xf32>
    %c254_i32_57 = arith.constant 254 : i32
    %175 = tpu.dynamic_rotate %156 by %c254_i32_57 dim 0 : vector<256x8xf32>, i32 -> vector<256x8xf32>
    %cst_58 = arith.constant 0xFF800000 : f32
    %176 = vector.shape_cast %17 : vector<256x1xi1> to vector<256x1xi1>
    %177 = vector.broadcast %176 : vector<256x1xi1> to vector<256x8xi1>
    %178 = vector.broadcast %cst_58 : f32 to vector<256x8xf32>
    %179 = arith.select %177, %175, %178 : vector<256x8xi1>, vector<256x8xf32>
    %180 = arith.maximumf %174, %179 : vector<256x8xf32>
    %181 = arith.truncf %132 : vector<256x8xf32> to vector<256x8xbf16>
    %182 = arith.truncf %180 : vector<256x8xf32> to vector<256x8xbf16>
    %183 = tpu.concatenate %181, %182 in 1 : vector<256x8xbf16>, vector<256x8xbf16> -> vector<256x16xbf16>
    %c1 = arith.constant 1 : index
    %c0_59 = arith.constant 0 : index
    %c0_60 = arith.constant 0 : index
    %184 = vector.load %arg5[%c1, %c0_59, %c0_60] : memref<2x16x16xbf16, #tpu.memory_space<vmem>>, vector<1x16x16xbf16>
    %185 = vector.shape_cast %184 : vector<1x16x16xbf16> to vector<16x16xbf16>
    %cst_61 = arith.constant dense<0.000000e+00> : vector<256x16xf32>
    %186 = tpu.matmul %183, %185, %cst_61 {dimension_numbers = #tpu.dot_dimension_numbers<[1], [0], [0], [1], [0, 0, 1, 1], [], []>} : vector<256x16xbf16>, vector<16x16xbf16>, vector<256x16xf32> -> vector<256x16xf32>
    %187 = arith.addf %84, %186 : vector<256x16xf32>
    %c0_62 = arith.constant 0 : index
    %c0_63 = arith.constant 0 : index
    %188 = vector.load %arg6[%c0_62, %c0_63] : memref<1x16xf32, #tpu.memory_space<vmem>>, vector<1x16xf32>
    %189 = vector.broadcast %188 : vector<1x16xf32> to vector<256x16xf32>
    %190 = arith.addf %187, %189 : vector<256x16xf32>
    %191 = arith.negf %190 : vector<256x16xf32>
    %192 = math.exp %191 : vector<256x16xf32>
    %cst_64 = arith.constant 1.000000e+00 : f32
    %193 = vector.broadcast %cst_64 : f32 to vector<256x16xf32>
    %194 = arith.addf %193, %192 : vector<256x16xf32>
    %195 = arith.divf %193, %194 : vector<256x16xf32>
    %196 = arith.mulf %190, %195 : vector<256x16xf32>
    %c0_65 = arith.constant 0 : index
    %c0_66 = arith.constant 0 : index
    %c0_67 = arith.constant 0 : index
    %197 = vector.load %arg7[%c0_65, %c0_66, %c0_67] : memref<1x256x16xf32, #tpu.memory_space<vmem>>, vector<1x256x16xf32>
    %198 = vector.shape_cast %197 : vector<1x256x16xf32> to vector<256x16xf32>
    %199 = vector.shape_cast %196 : vector<256x16xf32> to vector<1x256x16xf32>
    tpu.vector_store %arg7[%c0_65, %c0_66, %c0_67], %199 {strides = array<i32>} : memref<1x256x16xf32, #tpu.memory_space<vmem>>, vector<1x256x16xf32>,
    return
  }
  func.func @transform_0(%arg0: i32) -> (i32, i32, i32) {
    %c0_i32 = arith.constant 0 : i32
    %c0_i32_0 = arith.constant 0 : i32
    %c0_i32_1 = arith.constant 0 : i32
    return %arg0, %c0_i32, %c0_i32_0 : i32, i32, i32
  }
  func.func @transform_1(%arg0: i32) -> (i32, i32) {
    %c0_i32 = arith.constant 0 : i32
    %c0_i32_0 = arith.constant 0 : i32
    %c0_i32_1 = arith.constant 0 : i32
    return %c0_i32, %c0_i32_0 : i32, i32
  }
  func.func @transform_2(%arg0: i32) -> (i32, i32) {
    %c0_i32 = arith.constant 0 : i32
    %c0_i32_0 = arith.constant 0 : i32
    %c0_i32_1 = arith.constant 0 : i32
    return %c0_i32, %c0_i32_0 : i32, i32
  }
  func.func @transform_3(%arg0: i32) -> (i32, i32) {
    %c0_i32 = arith.constant 0 : i32
    %c0_i32_0 = arith.constant 0 : i32
    %c0_i32_1 = arith.constant 0 : i32
    return %c0_i32, %c0_i32_0 : i32, i32
  }
  func.func @transform_4(%arg0: i32) -> (i32, i32, i32) {
    %c0_i32 = arith.constant 0 : i32
    %c0_i32_0 = arith.constant 0 : i32
    %c0_i32_1 = arith.constant 0 : i32
    %c0_i32_2 = arith.constant 0 : i32
    return %c0_i32, %c0_i32_0, %c0_i32_1 : i32, i32, i32
  }
  func.func @transform_5(%arg0: i32) -> (i32, i32) {
    %c0_i32 = arith.constant 0 : i32
    %c0_i32_0 = arith.constant 0 : i32
    %c0_i32_1 = arith.constant 0 : i32
    return %c0_i32, %c0_i32_0 : i32, i32
  }
  func.func @transform_6(%arg0: i32) -> (i32, i32, i32) {
    %c0_i32 = arith.constant 0 : i32
    %c0_i32_0 = arith.constant 0 : i32
    %c0_i32_1 = arith.constant 0 : i32
    return %arg0, %c0_i32, %c0_i32_0 : i32, i32, i32
  }
}

</mosaic_0001>

<llo_original>
// kernel: tpu_custom_call.1
$region0: #{tpu_custom_call.1}
  #allocation0 [shape = 'u32[]', space=smem, size = 0x4, offset = 0x4, fixed_abs, tag = 'smem constant byte address 0x4 - core index']
  #allocation1 [shape = 'u32[144,128]{1,0:T(1,128)}', space=vmem, size = 0x12000, scoped, tag = 'internal scratch']
  %s0 = inlined_call_operand.vmem [shape: bf16[2,256,8], index: 0, kind: input, shape index: {}]
  %s1 = inlined_call_operand.vmem [shape: s32[256,1], index: 1, kind: input, shape index: {}]
  %s2 = inlined_call_operand.vmem [shape: bf16[8,8], index: 2, kind: input, shape index: {}]
  %s3 = inlined_call_operand.vmem [shape: f32[1,8], index: 3, kind: input, shape index: {}]
  %s4 = inlined_call_operand.vmem [shape: bf16[2,16,16], index: 4, kind: input, shape index: {}]
  %s5 = inlined_call_operand.vmem [shape: f32[1,16], index: 5, kind: input, shape index: {}]
  %s6 = inlined_call_operand.vmem [shape: f32[2,256,16], index: 6, kind: output, shape index: {}]
  %s7 = sld [smem:[#allocation0]]
  $region57: #{tpu_custom_call.1} parent=0
    _
  %s9 = ssub.s32 1, %s7
  %s10 = scalar_select 0, %s9, %s7
  loop: start=0, step=1, limit=4
  $region2: #{tpu_custom_call.1} parent=0 // loop_pre_header
    _
  $region3: #{tpu_custom_call.1} parent=0 // loop_header
    %s12 = sphi 0, %s16
    %p13 = scmp.ge.s32.totalorder %s12, 4
    %s22 = sphi 0, %s24
    %s25 = sphi 0, %s22
    %s26 = sphi 0, %s25
    %s42 = sphi 0, %s26
    %s46 = sphi 0, %s46
    %s48 = sphi 0, %s46
    %s49 = sphi 0, %s48
    %s63 = sphi 0, %s49
    %s67 = sphi 0, %s67
    %s69 = sphi 0, %s67
    %s70 = sphi 0, %s69
    %s84 = sphi 0, %s70
    %s88 = sphi 0, %s88
    %s90 = sphi 0, %s88
    %s91 = sphi 0, %s90
    %s105 = sphi 0, %s91
    %s109 = sphi 0, %s109
    %s111 = sphi 0, %s109
    %s112 = sphi 0, %s111
    %s126 = sphi 0, %s112
    %s130 = sphi 0, %s130
    %s132 = sphi 0, %s130
    %s133 = sphi 0, %s132
    %s147 = sphi 0, %s133
    %s153 = sphi 0, %s155
    %s156 = sphi 0, %s153
    %s157 = sphi 0, %s156
    %s173 = sphi 0, %s157
  $region4: #{tpu_custom_call.1} parent=0 // loop_header_branch
    %15 = sbr.rel (%p13) target = $region8
  $region5: #{tpu_custom_call.1} parent=0 // loop_body
    %s17 = ssub.s32 %s12, 1
    %s18 = ssub.s32 %s12, 2
    %s19 = sadd.s32 %s12, 1
    %s20 = ssub.s32 %s12, %s19
    %p21 = scmp.eq.s32.totalorder %s20, 0
    %s23 = sadd.s32 %s22, 1
    %s24 = scalar_select %p21, %s22, %s23
    %p27 = pneg %p21
    %p28 = scmp.eq.s32.totalorder %s12, 1
    %p29 = por %p27, %p28
    %p30 = scmp.ne.s32.totalorder %s22, %s25
    %p31 = scmp.eq.s32.totalorder %s12, 0
    %p32 = por %p30, %p31
    %p33 = scmp.ne.s32.totalorder %s22, %s25
    %p34 = scmp.eq.s32.totalorder %s17, 1
    %p35 = por %p33, %p34
    %p36 = scmp.ne.s32.totalorder %s25, %s26
    %p37 = scmp.eq.s32.totalorder %s17, 0
    %p38 = por %p36, %p37
    %p39 = scmp.ne.s32.totalorder %s25, %s26
    %p40 = scmp.eq.s32.totalorder %s18, 1
    %p41 = por %p39, %p40
    %p43 = scmp.ne.s32.totalorder %s26, %s42
    %p44 = scmp.eq.s32.totalorder %s18, 0
    %p45 = por %p43, %p44
    %s47 = sadd.s32 %s46, 1
    %p50 = scmp.eq.s32.totalorder %s12, 1
    %p51 = scmp.ne.s32.totalorder %s46, %s48
    %p52 = scmp.eq.s32.totalorder %s12, 0
    %p53 = por %p51, %p52
    %p54 = scmp.ne.s32.totalorder %s46, %s48
    %p55 = scmp.eq.s32.totalorder %s17, 1
    %p56 = por %p54, %p55
    %p57 = scmp.ne.s32.totalorder %s48, %s49
    %p58 = scmp.eq.s32.totalorder %s17, 0
    %p59 = por %p57, %p58
    %p60 = scmp.ne.s32.totalorder %s48, %s49
    %p61 = scmp.eq.s32.totalorder %s18, 1
    %p62 = por %p60, %p61
    %p64 = scmp.ne.s32.totalorder %s49, %s63
    %p65 = scmp.eq.s32.totalorder %s18, 0
    %p66 = por %p64, %p65
    %s68 = sadd.s32 %s67, 1
    %p71 = scmp.eq.s32.totalorder %s12, 1
    %p72 = scmp.ne.s32.totalorder %s67, %s69
    %p73 = scmp.eq.s32.totalorder %s12, 0
    %p74 = por %p72, %p73
    %p75 = scmp.ne.s32.totalorder %s67, %s69
    %p76 = scmp.eq.s32.totalorder %s17, 1
    %p77 = por %p75, %p76
    %p78 = scmp.ne.s32.totalorder %s69, %s70
    %p79 = scmp.eq.s32.totalorder %s17, 0
    %p80 = por %p78, %p79
    %p81 = scmp.ne.s32.totalorder %s69, %s70
    %p82 = scmp.eq.s32.totalorder %s18, 1
    %p83 = por %p81, %p82
    %p85 = scmp.ne.s32.totalorder %s70, %s84
    %p86 = scmp.eq.s32.totalorder %s18, 0
    %p87 = por %p85, %p86
    %s89 = sadd.s32 %s88, 1
    %p92 = scmp.eq.s32.totalorder %s12, 1
    %p93 = scmp.ne.s32.totalorder %s88, %s90
    %p94 = scmp.eq.s32.totalorder %s12, 0
    %p95 = por %p93, %p94
    %p96 = scmp.ne.s32.totalorder %s88, %s90
    %p97 = scmp.eq.s32.totalorder %s17, 1
    %p98 = por %p96, %p97
    %p99 = scmp.ne.s32.totalorder %s90, %s91
    %p100 = scmp.eq.s32.totalorder %s17, 0
    %p101 = por %p99, %p100
    %p102 = scmp.ne.s32.totalorder %s90, %s91
    %p103 = scmp.eq.s32.totalorder %s18, 1
    %p104 = por %p102, %p103
    %p106 = scmp.ne.s32.totalorder %s91, %s105
    %p107 = scmp.eq.s32.totalorder %s18, 0
    %p108 = por %p106, %p107
    %s110 = sadd.s32 %s109, 1
    %p113 = scmp.eq.s32.totalorder %s12, 1
    %p114 = scmp.ne.s32.totalorder %s109, %s111
    %p115 = scmp.eq.s32.totalorder %s12, 0
    %p116 = por %p114, %p115
    %p117 = scmp.ne.s32.totalorder %s109, %s111
    %p118 = scmp.eq.s32.totalorder %s17, 1
    %p119 = por %p117, %p118
    %p120 = scmp.ne.s32.totalorder %s111, %s112
    %p121 = scmp.eq.s32.totalorder %s17, 0
    %p122 = por %p120, %p121
    %p123 = scmp.ne.s32.totalorder %s111, %s112
    %p124 = scmp.eq.s32.totalorder %s18, 1
    %p125 = por %p123, %p124
    %p127 = scmp.ne.s32.totalorder %s112, %s126
    %p128 = scmp.eq.s32.totalorder %s18, 0
    %p129 = por %p127, %p128
    %s131 = sadd.s32 %s130, 1
    %p134 = scmp.eq.s32.totalorder %s12, 1
    %p135 = scmp.ne.s32.totalorder %s130, %s132
    %p136 = scmp.eq.s32.totalorder %s12, 0
    %p137 = por %p135, %p136
    %p138 = scmp.ne.s32.totalorder %s130, %s132
    %p139 = scmp.eq.s32.totalorder %s17, 1
    %p140 = por %p138, %p139
    %p141 = scmp.ne.s32.totalorder %s132, %s133
    %p142 = scmp.eq.s32.totalorder %s17, 0
    %p143 = por %p141, %p142
    %p144 = scmp.ne.s32.totalorder %s132, %s133
    %p145 = scmp.eq.s32.totalorder %s18, 1
    %p146 = por %p144, %p145
    %p148 = scmp.ne.s32.totalorder %s133, %s147
    %p149 = scmp.eq.s32.totalorder %s18, 0
    %p150 = por %p148, %p149
    %s151 = ssub.s32 %s12, %s19
    %p152 = scmp.eq.s32.totalorder %s151, 0
    %s154 = sadd.s32 %s153, 1
    %s155 = scalar_select %p152, %s153, %s154
    %p158 = pneg %p152
    %p159 = scmp.eq.s32.totalorder %s12, 1
    %p160 = por %p158, %p159
    %p161 = scmp.ne.s32.totalorder %s153, %s156
    %p162 = scmp.eq.s32.totalorder %s12, 0
    %p163 = por %p161, %p162
    %p164 = scmp.ne.s32.totalorder %s153, %s156
    %p165 = scmp.eq.s32.totalorder %s17, 1
    %p166 = por %p164, %p165
    %p167 = scmp.ne.s32.totalorder %s156, %s157
    %p168 = scmp.eq.s32.totalorder %s17, 0
    %p169 = por %p167, %p168
    %p170 = scmp.ne.s32.totalorder %s156, %s157
    %p171 = scmp.eq.s32.totalorder %s18, 1
    %p172 = por %p170, %p171
    %p174 = scmp.ne.s32.totalorder %s157, %s173
    %p175 = scmp.eq.s32.totalorder %s18, 0
    %p176 = por %p174, %p175
    %p177 = scmp.le.s32.totalorder 1, %s12
    %p178 = scmp.lt.s32.totalorder %s12, 3
    %p179 = pnand %p177, %p178
    %p180 = pneg %p179
    // Predicated region
    $region9: #{tpu_custom_call.1} parent=5 // pred_check
      _
    $region10: #{tpu_custom_call.1} parent=5 // pred_check_branch
      %182 = sbr.rel (%p179) target = $region12
    $region11: #{tpu_custom_call.1} parent=5 // pred_region
      %s183 = ssub.s32 %s12, 1
      // Predicated region
      $region13: #{tpu_custom_call.1} parent=11 // pred_check
        %p184 = pneg %p59
      $region14: #{tpu_custom_call.1} parent=11 // pred_check_branch
        %186 = sbr.rel (%p184) target = $region16
      $region15: #{tpu_custom_call.1} parent=11 // pred_region
        _
      $region16: #{tpu_custom_call.1} parent=11 // pred_fallthru
        _
      // Predicated region
      $region17: #{tpu_custom_call.1} parent=11 // pred_check
        %p187 = pneg %p80
      $region18: #{tpu_custom_call.1} parent=11 // pred_check_branch
        %189 = sbr.rel (%p187) target = $region20
      $region19: #{tpu_custom_call.1} parent=11 // pred_region
        _
      $region20: #{tpu_custom_call.1} parent=11 // pred_fallthru
        _
      // Predicated region
      $region21: #{tpu_custom_call.1} parent=11 // pred_check
        %p190 = pneg %p101
      $region22: #{tpu_custom_call.1} parent=11 // pred_check_branch
        %192 = sbr.rel (%p190) target = $region24
      $region23: #{tpu_custom_call.1} parent=11 // pred_region
        _
      $region24: #{tpu_custom_call.1} parent=11 // pred_fallthru
        _
      // Predicated region
      $region25: #{tpu_custom_call.1} parent=11 // pred_check
        %p193 = pneg %p122
      $region26: #{tpu_custom_call.1} parent=11 // pred_check_branch
        %195 = sbr.rel (%p193) target = $region28
      $region27: #{tpu_custom_call.1} parent=11 // pred_region
        _
      $region28: #{tpu_custom_call.1} parent=11 // pred_fallthru
        _
      // Predicated region
      $region29: #{tpu_custom_call.1} parent=11 // pred_check
        %p196 = pneg %p143
      $region30: #{tpu_custom_call.1} parent=11 // pred_check_branch
        %198 = sbr.rel (%p196) target = $region32
      $region31: #{tpu_custom_call.1} parent=11 // pred_region
        _
      $region32: #{tpu_custom_call.1} parent=11 // pred_fallthru
        _
    $region12: #{tpu_custom_call.1} parent=5 // pred_fallthru
      _
    %p199 = scmp.lt.s32.totalorder %s12, 2
    // Predicated region
    $region33: #{tpu_custom_call.1} parent=5 // pred_check
      %p200 = pneg %p199
    $region34: #{tpu_custom_call.1} parent=5 // pred_check_branch
      %202 = sbr.rel (%p200) target = $region36
    $region35: #{tpu_custom_call.1} parent=5 // pred_region
      // Predicated region
      $region37: #{tpu_custom_call.1} parent=35 // pred_check
        %p203 = pneg %p32
      $region38: #{tpu_custom_call.1} parent=35 // pred_check_branch
        %205 = sbr.rel (%p203) target = $region40
      $region39: #{tpu_custom_call.1} parent=35 // pred_region
        %p206 = scmp.lt.s32.totalorder %s12, 1
        %s207 = scalar_select %p206, %s12, 1
        %s208 = smul.addr %s207, 32
        %s209 = smul.addr %s208, 4
        %s210 = scalar_lea.vmem %s0, %s209
      $region40: #{tpu_custom_call.1} parent=35 // pred_fallthru
        _
    $region36: #{tpu_custom_call.1} parent=5 // pred_fallthru
      _
    %p211 = scmp.le.s32.totalorder 1, %s12
    %p212 = scmp.lt.s32.totalorder %s12, 3
    %p213 = pnand %p211, %p212
    %p214 = pneg %p213
    // Predicated region
    $region41: #{tpu_custom_call.1} parent=5 // pred_check
      _
    $region42: #{tpu_custom_call.1} parent=5 // pred_check_branch
      %216 = sbr.rel (%p213) target = $region44
    $region43: #{tpu_custom_call.1} parent=5 // pred_region
      %s217 = ssub.s32 %s12, 1
      %p218 = scmp.lt.s32.totalorder %s17, 1
      %s219 = scalar_select %p218, %s17, 1
      %s220 = smul.addr %s219, 32
      %s221 = smul.addr %s220, 4
      %s222 = scalar_lea.vmem %s0, %s221
      %p223 = pneg %p38
      %p224 = pneg %p35
      %p225 = pneg %p59
      %p226 = pneg %p56
      %p227 = pneg %p80
      %p228 = pneg %p77
      %p229 = pneg %p101
      %p230 = pneg %p98
      %p231 = pneg %p122
      %p232 = pneg %p119
      %p233 = pneg %p143
      %p234 = pneg %p140
      %p235 = pneg %p169
      %p236 = pneg %p166
      %p237 = scmp.lt.s32.totalorder %s17, 1
      %s238 = scalar_select %p237, %s17, 1
      %s239 = smul.addr %s238, 32
      %s240 = smul.addr %s239, 8
      %s241 = scalar_lea.vmem %s6, %s240
      %p242 = scmp.lt.s32.totalorder %s17, 1
      %s243 = scalar_select %p242, %s17, 1
      %s244 = smul.addr %s243, 32
      %s245 = smul.addr %s244, 4
      %s246 = scalar_lea.vmem %s0, %s245
      %p247 = scmp.lt.s32.totalorder %s17, 1
      %s248 = scalar_select %p247, %s17, 1
      %s249 = smul.addr %s248, 32
      %s250 = smul.addr %s249, 8
      %s251 = scalar_lea.vmem %s6, %s250
      %v253 = vlaneseq
      %v254 = vshrl.u32 %v253, 7
      %v255 = vadd.s32 %v254, 8
      %v256 = vadd.s32 %v254, 16
      %v257 = vadd.s32 %v254, 24
      %v258 = vadd.s32 %v254, 32
      %v259 = vadd.s32 %v254, 40
      %v260 = vadd.s32 %v254, 48
      %v261 = vadd.s32 %v254, 56
      %v262 = vadd.s32 %v254, 64
      %v263 = vadd.s32 %v254, 72
      %v264 = vadd.s32 %v254, 80
      %v265 = vadd.s32 %v254, 88
      %v266 = vadd.s32 %v254, 96
      %v267 = vadd.s32 %v254, 104
      %v268 = vadd.s32 %v254, 112
      %v269 = vadd.s32 %v254, 120
      %v270 = vadd.s32 %v254, 128
      %v271 = vadd.s32 %v254, 136
      %v272 = vadd.s32 %v254, 144
      %v273 = vadd.s32 %v254, 152
      %v274 = vadd.s32 %v254, 160
      %v275 = vadd.s32 %v254, 168
      %v276 = vadd.s32 %v254, 176
      %v277 = vadd.s32 %v254, 184
      %v278 = vadd.s32 %v254, 192
      %v279 = vadd.s32 %v254, 200
      %v280 = vadd.s32 %v254, 208
      %v281 = vadd.s32 %v254, 216
      %v282 = vadd.s32 %v254, 224
      %v283 = vadd.s32 %v254, 232
      %v284 = vadd.s32 %v254, 240
      %v285 = vadd.s32 %v254, 248
      %v286 = vld [vmem:[%s1] sm:$0xff]
      %v287 = vld [vmem:[%s1 + $0x8] sm:$0xff]
      %v288 = vld [vmem:[%s1 + $0x10] sm:$0xff]
      %v289 = vld [vmem:[%s1 + $0x18] sm:$0xff]
      %v290 = vld [vmem:[%s1 + $0x20] sm:$0xff]
      %v291 = vld [vmem:[%s1 + $0x28] sm:$0xff]
      %v292 = vld [vmem:[%s1 + $0x30] sm:$0xff]
      %v293 = vld [vmem:[%s1 + $0x38] sm:$0xff]
      %v294 = vld [vmem:[%s1 + $0x40] sm:$0xff]
      %v295 = vld [vmem:[%s1 + $0x48] sm:$0xff]
      %v296 = vld [vmem:[%s1 + $0x50] sm:$0xff]
      %v297 = vld [vmem:[%s1 + $0x58] sm:$0xff]
      %v298 = vld [vmem:[%s1 + $0x60] sm:$0xff]
      %v299 = vld [vmem:[%s1 + $0x68] sm:$0xff]
      %v300 = vld [vmem:[%s1 + $0x70] sm:$0xff]
      %v301 = vld [vmem:[%s1 + $0x78] sm:$0xff]
      %v302 = vld [vmem:[%s1 + $0x80] sm:$0xff]
      %v303 = vld [vmem:[%s1 + $0x88] sm:$0xff]
      %v304 = vld [vmem:[%s1 + $0x90] sm:$0xff]
      %v305 = vld [vmem:[%s1 + $0x98] sm:$0xff]
      %v306 = vld [vmem:[%s1 + $0xa0] sm:$0xff]
      %v307 = vld [vmem:[%s1 + $0xa8] sm:$0xff]
      %v308 = vld [vmem:[%s1 + $0xb0] sm:$0xff]
      %v309 = vld [vmem:[%s1 + $0xb8] sm:$0xff]
      %v310 = vld [vmem:[%s1 + $0xc0] sm:$0xff]
      %v311 = vld [vmem:[%s1 + $0xc8] sm:$0xff]
      %v312 = vld [vmem:[%s1 + $0xd0] sm:$0xff]
      %v313 = vld [vmem:[%s1 + $0xd8] sm:$0xff]
      %v314 = vld [vmem:[%s1 + $0xe0] sm:$0xff]
      %v315 = vld [vmem:[%s1 + $0xe8] sm:$0xff]
      %v316 = vld [vmem:[%s1 + $0xf0] sm:$0xff]
      %v317 = vld [vmem:[%s1 + $0xf8] sm:$0xff]
      %vm318 = vcmp.ge.s32.totalorder %v254, 32
      %vm319 = vcmp.ge.s32.totalorder %v255, 32
      %vm320 = vcmp.ge.s32.totalorder %v256, 32
      %vm321 = vcmp.ge.s32.totalorder %v257, 32
      %vm322 = vcmp.ge.s32.totalorder %v258, 32
      %vm323 = vcmp.ge.s32.totalorder %v259, 32
      %vm324 = vcmp.ge.s32.totalorder %v260, 32
      %vm325 = vcmp.ge.s32.totalorder %v261, 32
      %vm326 = vcmp.ge.s32.totalorder %v262, 32
      %vm327 = vcmp.ge.s32.totalorder %v263, 32
      %vm328 = vcmp.ge.s32.totalorder %v264, 32
      %vm329 = vcmp.ge.s32.totalorder %v265, 32
      %vm330 = vcmp.ge.s32.totalorder %v266, 32
      %vm331 = vcmp.ge.s32.totalorder %v267, 32
      %vm332 = vcmp.ge.s32.totalorder %v268, 32
      %vm333 = vcmp.ge.s32.totalorder %v269, 32
      %vm334 = vcmp.ge.s32.totalorder %v270, 32
      %vm335 = vcmp.ge.s32.totalorder %v271, 32
      %vm336 = vcmp.ge.s32.totalorder %v272, 32
      %vm337 = vcmp.ge.s32.totalorder %v273, 32
      %vm338 = vcmp.ge.s32.totalorder %v274, 32
      %vm339 = vcmp.ge.s32.totalorder %v275, 32
      %vm340 = vcmp.ge.s32.totalorder %v276, 32
      %vm341 = vcmp.ge.s32.totalorder %v277, 32
      %vm342 = vcmp.ge.s32.totalorder %v278, 32
      %vm343 = vcmp.ge.s32.totalorder %v279, 32
      %vm344 = vcmp.ge.s32.totalorder %v280, 32
      %vm345 = vcmp.ge.s32.totalorder %v281, 32
      %vm346 = vcmp.ge.s32.totalorder %v282, 32
      %vm347 = vcmp.ge.s32.totalorder %v283, 32
      %vm348 = vcmp.ge.s32.totalorder %v284, 32
      %vm349 = vcmp.ge.s32.totalorder %v285, 32
      %vm350 = vcmp.ge.s32.totalorder %v254, 16
      %vm351 = vcmp.ge.s32.totalorder %v255, 16
      %vm352 = vcmp.ge.s32.totalorder %v256, 16
      %vm353 = vcmp.ge.s32.totalorder %v257, 16
      %vm354 = vcmp.ge.s32.totalorder %v258, 16
      %vm355 = vcmp.ge.s32.totalorder %v259, 16
      %vm356 = vcmp.ge.s32.totalorder %v260, 16
      %vm357 = vcmp.ge.s32.totalorder %v261, 16
      %vm358 = vcmp.ge.s32.totalorder %v262, 16
      %vm359 = vcmp.ge.s32.totalorder %v263, 16
      %vm360 = vcmp.ge.s32.totalorder %v264, 16
      %vm361 = vcmp.ge.s32.totalorder %v265, 16
      %vm362 = vcmp.ge.s32.totalorder %v266, 16
      %vm363 = vcmp.ge.s32.totalorder %v267, 16
      %vm364 = vcmp.ge.s32.totalorder %v268, 16
      %vm365 = vcmp.ge.s32.totalorder %v269, 16
      %vm366 = vcmp.ge.s32.totalorder %v270, 16
      %vm367 = vcmp.ge.s32.totalorder %v271, 16
      %vm368 = vcmp.ge.s32.totalorder %v272, 16
      %vm369 = vcmp.ge.s32.totalorder %v273, 16
      %vm370 = vcmp.ge.s32.totalorder %v274, 16
      %vm371 = vcmp.ge.s32.totalorder %v275, 16
      %vm372 = vcmp.ge.s32.totalorder %v276, 16
      %vm373 = vcmp.ge.s32.totalorder %v277, 16
      %vm374 = vcmp.ge.s32.totalorder %v278, 16
      %vm375 = vcmp.ge.s32.totalorder %v279, 16
      %vm376 = vcmp.ge.s32.totalorder %v280, 16
      %vm377 = vcmp.ge.s32.totalorder %v281, 16
      %vm378 = vcmp.ge.s32.totalorder %v282, 16
      %vm379 = vcmp.ge.s32.totalorder %v283, 16
      %vm380 = vcmp.ge.s32.totalorder %v284, 16
      %vm381 = vcmp.ge.s32.totalorder %v285, 16
      %vm382 = vcmp.lt.s32.totalorder %v254, 240
      %vm383 = vcmp.lt.s32.totalorder %v255, 240
      %vm384 = vcmp.lt.s32.totalorder %v256, 240
      %vm385 = vcmp.lt.s32.totalorder %v257, 240
      %vm386 = vcmp.lt.s32.totalorder %v258, 240
      %vm387 = vcmp.lt.s32.totalorder %v259, 240
      %vm388 = vcmp.lt.s32.totalorder %v260, 240
      %vm389 = vcmp.lt.s32.totalorder %v261, 240
      %vm390 = vcmp.lt.s32.totalorder %v262, 240
      %vm391 = vcmp.lt.s32.totalorder %v263, 240
      %vm392 = vcmp.lt.s32.totalorder %v264, 240
      %vm393 = vcmp.lt.s32.totalorder %v265, 240
      %vm394 = vcmp.lt.s32.totalorder %v266, 240
      %vm395 = vcmp.lt.s32.totalorder %v267, 240
      %vm396 = vcmp.lt.s32.totalorder %v268, 240
      %vm397 = vcmp.lt.s32.totalorder %v269, 240
      %vm398 = vcmp.lt.s32.totalorder %v270, 240
      %vm399 = vcmp.lt.s32.totalorder %v271, 240
      %vm400 = vcmp.lt.s32.totalorder %v272, 240
      %vm401 = vcmp.lt.s32.totalorder %v273, 240
      %vm402 = vcmp.lt.s32.totalorder %v274, 240
      %vm403 = vcmp.lt.s32.totalorder %v275, 240
      %vm404 = vcmp.lt.s32.totalorder %v276, 240
      %vm405 = vcmp.lt.s32.totalorder %v277, 240
      %vm406 = vcmp.lt.s32.totalorder %v278, 240
      %vm407 = vcmp.lt.s32.totalorder %v279, 240
      %vm408 = vcmp.lt.s32.totalorder %v280, 240
      %vm409 = vcmp.lt.s32.totalorder %v281, 240
      %vm410 = vcmp.lt.s32.totalorder %v282, 240
      %vm411 = vcmp.lt.s32.totalorder %v283, 240
      %vm412 = vcmp.lt.s32.totalorder %v284, 240
      %vm413 = vcmp.lt.s32.totalorder %v285, 240
      %vm414 = vcmp.lt.s32.totalorder %v254, 224
      %vm415 = vcmp.lt.s32.totalorder %v255, 224
      %vm416 = vcmp.lt.s32.totalorder %v256, 224
      %vm417 = vcmp.lt.s32.totalorder %v257, 224
      %vm418 = vcmp.lt.s32.totalorder %v258, 224
      %vm419 = vcmp.lt.s32.totalorder %v259, 224
      %vm420 = vcmp.lt.s32.totalorder %v260, 224
      %vm421 = vcmp.lt.s32.totalorder %v261, 224
      %vm422 = vcmp.lt.s32.totalorder %v262, 224
      %vm423 = vcmp.lt.s32.totalorder %v263, 224
      %vm424 = vcmp.lt.s32.totalorder %v264, 224
      %vm425 = vcmp.lt.s32.totalorder %v265, 224
      %vm426 = vcmp.lt.s32.totalorder %v266, 224
      %vm427 = vcmp.lt.s32.totalorder %v267, 224
      %vm428 = vcmp.lt.s32.totalorder %v268, 224
      %vm429 = vcmp.lt.s32.totalorder %v269, 224
      %vm430 = vcmp.lt.s32.totalorder %v270, 224
      %vm431 = vcmp.lt.s32.totalorder %v271, 224
      %vm432 = vcmp.lt.s32.totalorder %v272, 224
      %vm433 = vcmp.lt.s32.totalorder %v273, 224
      %vm434 = vcmp.lt.s32.totalorder %v274, 224
      %vm435 = vcmp.lt.s32.totalorder %v275, 224
      %vm436 = vcmp.lt.s32.totalorder %v276, 224
      %vm437 = vcmp.lt.s32.totalorder %v277, 224
      %vm438 = vcmp.lt.s32.totalorder %v278, 224
      %vm439 = vcmp.lt.s32.totalorder %v279, 224
      %vm440 = vcmp.lt.s32.totalorder %v280, 224
      %vm441 = vcmp.lt.s32.totalorder %v281, 224
      %vm442 = vcmp.lt.s32.totalorder %v282, 224
      %vm443 = vcmp.lt.s32.totalorder %v283, 224
      %vm444 = vcmp.lt.s32.totalorder %v284, 224
      %vm445 = vcmp.lt.s32.totalorder %v285, 224
      %vm446 = vcmp.ge.s32.totalorder %v286, 2
      %vm447 = vcmp.ge.s32.totalorder %v287, 2
      %vm448 = vcmp.ge.s32.totalorder %v288, 2
      %vm449 = vcmp.ge.s32.totalorder %v289, 2
      %vm450 = vcmp.ge.s32.totalorder %v290, 2
      %vm451 = vcmp.ge.s32.totalorder %v291, 2
      %vm452 = vcmp.ge.s32.totalorder %v292, 2
      %vm453 = vcmp.ge.s32.totalorder %v293, 2
      %vm454 = vcmp.ge.s32.totalorder %v294, 2
      %vm455 = vcmp.ge.s32.totalorder %v295, 2
      %vm456 = vcmp.ge.s32.totalorder %v296, 2
      %vm457 = vcmp.ge.s32.totalorder %v297, 2
      %vm458 = vcmp.ge.s32.totalorder %v298, 2
      %vm459 = vcmp.ge.s32.totalorder %v299, 2
      %vm460 = vcmp.ge.s32.totalorder %v300, 2
      %vm461 = vcmp.ge.s32.totalorder %v301, 2
      %vm462 = vcmp.ge.s32.totalorder %v302, 2
      %vm463 = vcmp.ge.s32.totalorder %v303, 2
      %vm464 = vcmp.ge.s32.totalorder %v304, 2
      %vm465 = vcmp.ge.s32.totalorder %v305, 2
      %vm466 = vcmp.ge.s32.totalorder %v306, 2
      %vm467 = vcmp.ge.s32.totalorder %v307, 2
      %vm468 = vcmp.ge.s32.totalorder %v308, 2
      %vm469 = vcmp.ge.s32.totalorder %v309, 2
      %vm470 = vcmp.ge.s32.totalorder %v310, 2
      %vm471 = vcmp.ge.s32.totalorder %v311, 2
      %vm472 = vcmp.ge.s32.totalorder %v312, 2
      %vm473 = vcmp.ge.s32.totalorder %v313, 2
      %vm474 = vcmp.ge.s32.totalorder %v314, 2
      %vm475 = vcmp.ge.s32.totalorder %v315, 2
      %vm476 = vcmp.ge.s32.totalorder %v316, 2
      %vm477 = vcmp.ge.s32.totalorder %v317, 2
      %vm478 = vcmp.ge.s32.totalorder %v286, 1
      %vm479 = vcmp.ge.s32.totalorder %v287, 1
      %vm480 = vcmp.ge.s32.totalorder %v288, 1
      %vm481 = vcmp.ge.s32.totalorder %v289, 1
      %vm482 = vcmp.ge.s32.totalorder %v290, 1
      %vm483 = vcmp.ge.s32.totalorder %v291, 1
      %vm484 = vcmp.ge.s32.totalorder %v292, 1
      %vm485 = vcmp.ge.s32.totalorder %v293, 1
      %vm486 = vcmp.ge.s32.totalorder %v294, 1
      %vm487 = vcmp.ge.s32.totalorder %v295, 1
      %vm488 = vcmp.ge.s32.totalorder %v296, 1
      %vm489 = vcmp.ge.s32.totalorder %v297, 1
      %vm490 = vcmp.ge.s32.totalorder %v298, 1
      %vm491 = vcmp.ge.s32.totalorder %v299, 1
      %vm492 = vcmp.ge.s32.totalorder %v300, 1
      %vm493 = vcmp.ge.s32.totalorder %v301, 1
      %vm494 = vcmp.ge.s32.totalorder %v302, 1
      %vm495 = vcmp.ge.s32.totalorder %v303, 1
      %vm496 = vcmp.ge.s32.totalorder %v304, 1
      %vm497 = vcmp.ge.s32.totalorder %v305, 1
      %vm498 = vcmp.ge.s32.totalorder %v306, 1
      %vm499 = vcmp.ge.s32.totalorder %v307, 1
      %vm500 = vcmp.ge.s32.totalorder %v308, 1
      %vm501 = vcmp.ge.s32.totalorder %v309, 1
      %vm502 = vcmp.ge.s32.totalorder %v310, 1
      %vm503 = vcmp.ge.s32.totalorder %v311, 1
      %vm504 = vcmp.ge.s32.totalorder %v312, 1
      %vm505 = vcmp.ge.s32.totalorder %v313, 1
      %vm506 = vcmp.ge.s32.totalorder %v314, 1
      %vm507 = vcmp.ge.s32.totalorder %v315, 1
      %vm508 = vcmp.ge.s32.totalorder %v316, 1
      %vm509 = vcmp.ge.s32.totalorder %v317, 1
      %vm510 = vcmp.lt.s32.totalorder %v286, 15
      %vm511 = vcmp.lt.s32.totalorder %v287, 15
      %vm512 = vcmp.lt.s32.totalorder %v288, 15
      %vm513 = vcmp.lt.s32.totalorder %v289, 15
      %vm514 = vcmp.lt.s32.totalorder %v290, 15
      %vm515 = vcmp.lt.s32.totalorder %v291, 15
      %vm516 = vcmp.lt.s32.totalorder %v292, 15
      %vm517 = vcmp.lt.s32.totalorder %v293, 15
      %vm518 = vcmp.lt.s32.totalorder %v294, 15
      %vm519 = vcmp.lt.s32.totalorder %v295, 15
      %vm520 = vcmp.lt.s32.totalorder %v296, 15
      %vm521 = vcmp.lt.s32.totalorder %v297, 15
      %vm522 = vcmp.lt.s32.totalorder %v298, 15
      %vm523 = vcmp.lt.s32.totalorder %v299, 15
      %vm524 = vcmp.lt.s32.totalorder %v300, 15
      %vm525 = vcmp.lt.s32.totalorder %v301, 15
      %vm526 = vcmp.lt.s32.totalorder %v302, 15
      %vm527 = vcmp.lt.s32.totalorder %v303, 15
      %vm528 = vcmp.lt.s32.totalorder %v304, 15
      %vm529 = vcmp.lt.s32.totalorder %v305, 15
      %vm530 = vcmp.lt.s32.totalorder %v306, 15
      %vm531 = vcmp.lt.s32.totalorder %v307, 15
      %vm532 = vcmp.lt.s32.totalorder %v308, 15
      %vm533 = vcmp.lt.s32.totalorder %v309, 15
      %vm534 = vcmp.lt.s32.totalorder %v310, 15
      %vm535 = vcmp.lt.s32.totalorder %v311, 15
      %vm536 = vcmp.lt.s32.totalorder %v312, 15
      %vm537 = vcmp.lt.s32.totalorder %v313, 15
      %vm538 = vcmp.lt.s32.totalorder %v314, 15
      %vm539 = vcmp.lt.s32.totalorder %v315, 15
      %vm540 = vcmp.lt.s32.totalorder %v316, 15
      %vm541 = vcmp.lt.s32.totalorder %v317, 15
      %vm542 = vcmp.lt.s32.totalorder %v286, 14
      %vm543 = vcmp.lt.s32.totalorder %v287, 14
      %vm544 = vcmp.lt.s32.totalorder %v288, 14
      %vm545 = vcmp.lt.s32.totalorder %v289, 14
      %vm546 = vcmp.lt.s32.totalorder %v290, 14
      %vm547 = vcmp.lt.s32.totalorder %v291, 14
      %vm548 = vcmp.lt.s32.totalorder %v292, 14
      %vm549 = vcmp.lt.s32.totalorder %v293, 14
      %vm550 = vcmp.lt.s32.totalorder %v294, 14
      %vm551 = vcmp.lt.s32.totalorder %v295, 14
      %vm552 = vcmp.lt.s32.totalorder %v296, 14
      %vm553 = vcmp.lt.s32.totalorder %v297, 14
      %vm554 = vcmp.lt.s32.totalorder %v298, 14
      %vm555 = vcmp.lt.s32.totalorder %v299, 14
      %vm556 = vcmp.lt.s32.totalorder %v300, 14
      %vm557 = vcmp.lt.s32.totalorder %v301, 14
      %vm558 = vcmp.lt.s32.totalorder %v302, 14
      %vm559 = vcmp.lt.s32.totalorder %v303, 14
      %vm560 = vcmp.lt.s32.totalorder %v304, 14
      %vm561 = vcmp.lt.s32.totalorder %v305, 14
      %vm562 = vcmp.lt.s32.totalorder %v306, 14
      %vm563 = vcmp.lt.s32.totalorder %v307, 14
      %vm564 = vcmp.lt.s32.totalorder %v308, 14
      %vm565 = vcmp.lt.s32.totalorder %v309, 14
      %vm566 = vcmp.lt.s32.totalorder %v310, 14
      %vm567 = vcmp.lt.s32.totalorder %v311, 14
      %vm568 = vcmp.lt.s32.totalorder %v312, 14
      %vm569 = vcmp.lt.s32.totalorder %v313, 14
      %vm570 = vcmp.lt.s32.totalorder %v314, 14
      %vm571 = vcmp.lt.s32.totalorder %v315, 14
      %vm572 = vcmp.lt.s32.totalorder %v316, 14
      %vm573 = vcmp.lt.s32.totalorder %v317, 14
      %v574 = vld [vmem:[%s246] sm:$0xf]
      %v575 = vld [vmem:[%s246 + $0x4] sm:$0xf]
      %v576 = vld [vmem:[%s246 + $0x8] sm:$0xf]
      %v577 = vld [vmem:[%s246 + $0xc] sm:$0xf]
      %v578 = vld [vmem:[%s246 + $0x10] sm:$0xf]
      %v579 = vld [vmem:[%s246 + $0x14] sm:$0xf]
      %v580 = vld [vmem:[%s246 + $0x18] sm:$0xf]
      %v581 = vld [vmem:[%s246 + $0x1c] sm:$0xf]
      %v582 = vld [vmem:[%s246 + $0x20] sm:$0xf]
      %v583 = vld [vmem:[%s246 + $0x24] sm:$0xf]
      %v584 = vld [vmem:[%s246 + $0x28] sm:$0xf]
      %v585 = vld [vmem:[%s246 + $0x2c] sm:$0xf]
      %v586 = vld [vmem:[%s246 + $0x30] sm:$0xf]
      %v587 = vld [vmem:[%s246 + $0x34] sm:$0xf]
      %v588 = vld [vmem:[%s246 + $0x38] sm:$0xf]
      %v589 = vld [vmem:[%s246 + $0x3c] sm:$0xf]
      %v590 = vld [vmem:[%s246 + $0x40] sm:$0xf]
      %v591 = vld [vmem:[%s246 + $0x44] sm:$0xf]
      %v592 = vld [vmem:[%s246 + $0x48] sm:$0xf]
      %v593 = vld [vmem:[%s246 + $0x4c] sm:$0xf]
      %v594 = vld [vmem:[%s246 + $0x50] sm:$0xf]
      %v595 = vld [vmem:[%s246 + $0x54] sm:$0xf]
      %v596 = vld [vmem:[%s246 + $0x58] sm:$0xf]
      %v597 = vld [vmem:[%s246 + $0x5c] sm:$0xf]
      %v598 = vld [vmem:[%s246 + $0x60] sm:$0xf]
      %v599 = vld [vmem:[%s246 + $0x64] sm:$0xf]
      %v600 = vld [vmem:[%s246 + $0x68] sm:$0xf]
      %v601 = vld [vmem:[%s246 + $0x6c] sm:$0xf]
      %v602 = vld [vmem:[%s246 + $0x70] sm:$0xf]
      %v603 = vld [vmem:[%s246 + $0x74] sm:$0xf]
      %v604 = vld [vmem:[%s246 + $0x78] sm:$0xf]
      %v605 = vld [vmem:[%s246 + $0x7c] sm:$0xf]
      %v606 = vld [vmem:[%s2] sm:$0xf]
      %v607 = vld [vmem:[%s3] sm:$0x1]
      %v609 = vlaneseq
      %v610 = vshrl.u32 %v609, 7
      %v611 = vsub.s32 0, %v610
      %v612 = vrot.slane %v607, %v611
      %v646 = vunpack.c.l.b16 %v574
      %v647 = vunpack.c.l.b16 %v575
      %v648 = vunpack.c.l.b16 %v576
      %v649 = vunpack.c.l.b16 %v577
      %v650 = vunpack.c.l.b16 %v578
      %v651 = vunpack.c.l.b16 %v579
      %v652 = vunpack.c.l.b16 %v580
      %v653 = vunpack.c.l.b16 %v581
      %v654 = vunpack.c.l.b16 %v582
      %v655 = vunpack.c.l.b16 %v583
      %v656 = vunpack.c.l.b16 %v584
      %v657 = vunpack.c.l.b16 %v585
      %v658 = vunpack.c.l.b16 %v586
      %v659 = vunpack.c.l.b16 %v587
      %v660 = vunpack.c.l.b16 %v588
      %v661 = vunpack.c.l.b16 %v589
      %v662 = vunpack.c.l.b16 %v590
      %v663 = vunpack.c.l.b16 %v591
      %v664 = vunpack.c.l.b16 %v592
      %v665 = vunpack.c.l.b16 %v593
      %v666 = vunpack.c.l.b16 %v594
      %v667 = vunpack.c.l.b16 %v595
      %v668 = vunpack.c.l.b16 %v596
      %v669 = vunpack.c.l.b16 %v597
      %v670 = vunpack.c.l.b16 %v598
      %v671 = vunpack.c.l.b16 %v599
      %v672 = vunpack.c.l.b16 %v600
      %v673 = vunpack.c.l.b16 %v601
      %v674 = vunpack.c.l.b16 %v602
      %v675 = vunpack.c.l.b16 %v603
      %v676 = vunpack.c.l.b16 %v604
      %v677 = vunpack.c.l.b16 %v605
      %v678 = vpack.c.b16 %v647, %v646
      %v679 = vpack.c.b16 %v649, %v648
      %v680 = vpack.c.b16 %v651, %v650
      %v681 = vpack.c.b16 %v653, %v652
      %v682 = vpack.c.b16 %v655, %v654
      %v683 = vpack.c.b16 %v657, %v656
      %v684 = vpack.c.b16 %v659, %v658
      %v685 = vpack.c.b16 %v661, %v660
      %v686 = vpack.c.b16 %v663, %v662
      %v687 = vpack.c.b16 %v665, %v664
      %v688 = vpack.c.b16 %v667, %v666
      %v689 = vpack.c.b16 %v669, %v668
      %v690 = vpack.c.b16 %v671, %v670
      %v691 = vpack.c.b16 %v673, %v672
      %v692 = vpack.c.b16 %v675, %v674
      %v693 = vpack.c.b16 %v677, %v676
      %vm694 = vcmask 64512
      %v696 = vsel %vm694, %v678, 0
      %v699 = vsel %vm694, %v679, 0
      %v702 = vsel %vm694, %v680, 0
      %v705 = vsel %vm694, %v681, 0
      %v708 = vsel %vm694, %v682, 0
      %v711 = vsel %vm694, %v683, 0
      %v714 = vsel %vm694, %v684, 0
      %v717 = vsel %vm694, %v685, 0
      %v720 = vsel %vm694, %v686, 0
      %v723 = vsel %vm694, %v687, 0
      %v726 = vsel %vm694, %v688, 0
      %v729 = vsel %vm694, %v689, 0
      %v732 = vsel %vm694, %v690, 0
      %v735 = vsel %vm694, %v691, 0
      %v738 = vsel %vm694, %v692, 0
      %v741 = vsel %vm694, %v693, 0
      %vm743 = vcmask 1043456
      %v745 = vsel %vm743, %v606, 0
      %747 = vmatprep.subr.bf16.mxu0 0
      %748 = vmatpush1.bf16.msra.mxu0 %v745
      %749 = vmatprep.subr.bf16.mxu0 0
      %750 = vmatpush1.bf16.msra.mxu0 0
      %751 = vmatprep.subr.bf16.mxu0 0
      %752 = vmatpush1.bf16.msra.mxu0 0
      %753 = vmatprep.subr.bf16.mxu0 0
      %754 = vmatpush1.bf16.msra.mxu0 0
      %755 = vmatprep.subr.bf16.mxu0 0
      %756 = vmatpush1.bf16.msra.mxu0 0
      %757 = vmatprep.subr.bf16.mxu0 0
      %758 = vmatpush1.bf16.msra.mxu0 0
      %759 = vmatprep.subr.bf16.mxu0 0
      %760 = vmatpush1.bf16.msra.mxu0 0
      %761 = vmatprep.subr.bf16.mxu0 0
      %762 = vmatpush1.bf16.msra.mxu0 0
      %763 = vmatprep.subr.bf16.mxu0 0
      %764 = vmatpush1.bf16.msra.mxu0 0
      %765 = vmatprep.subr.bf16.mxu0 0
      %766 = vmatpush1.bf16.msra.mxu0 0
      %767 = vmatprep.subr.bf16.mxu0 0
      %768 = vmatpush1.bf16.msra.mxu0 0
      %769 = vmatprep.subr.bf16.mxu0 0
      %770 = vmatpush1.bf16.msra.mxu0 0
      %771 = vmatprep.subr.bf16.mxu0 0
      %772 = vmatpush1.bf16.msra.mxu0 0
      %773 = vmatprep.subr.bf16.mxu0 0
      %774 = vmatpush1.bf16.msra.mxu0 0
      %775 = vmatprep.subr.bf16.mxu0 0
      %776 = vmatpush1.bf16.msra.mxu0 0
      %777 = vmatprep.subr.bf16.mxu0 0
      %778 = vmatpush1.bf16.msra.mxu0 0
      %779 = vmatprep.mubr.bf16.mxu0 0
      %780 = vmatmul.mubr.bf16.gmra.mrb[0].mxu0 %v696
      %v781 = vpop.f32.mrb[0].mxu0
      %v782 = vadd.f32 %v612, %v781
      %v783 = vpop.f32.mrb[0].mxu0
      %v784 = vpop.f32.mrb[0].mxu0
      %v785 = vadd.f32 %v612, %v784
      %v786 = vpop.f32.mrb[0].mxu0
      %787 = vmatprep.mubr.bf16.mxu0 0
      %788 = vmatmul.mubr.bf16.gmra.mrb[0].mxu0 %v699
      %v789 = vpop.f32.mrb[0].mxu0
      %v790 = vadd.f32 %v612, %v789
      %v791 = vpop.f32.mrb[0].mxu0
      %v792 = vpop.f32.mrb[0].mxu0
      %v793 = vadd.f32 %v612, %v792
      %v794 = vpop.f32.mrb[0].mxu0
      %795 = vmatprep.mubr.bf16.mxu0 0
      %796 = vmatmul.mubr.bf16.gmra.mrb[0].mxu0 %v702
      %v797 = vpop.f32.mrb[0].mxu0
      %v798 = vadd.f32 %v612, %v797
      %v799 = vpop.f32.mrb[0].mxu0
      %v800 = vpop.f32.mrb[0].mxu0
      %v801 = vadd.f32 %v612, %v800
      %v802 = vpop.f32.mrb[0].mxu0
      %803 = vmatprep.mubr.bf16.mxu0 0
      %804 = vmatmul.mubr.bf16.gmra.mrb[0].mxu0 %v705
      %v805 = vpop.f32.mrb[0].mxu0
      %v806 = vadd.f32 %v612, %v805
      %v807 = vpop.f32.mrb[0].mxu0
      %v808 = vpop.f32.mrb[0].mxu0
      %v809 = vadd.f32 %v612, %v808
      %v810 = vpop.f32.mrb[0].mxu0
      %811 = vmatprep.mubr.bf16.mxu0 0
      %812 = vmatmul.mubr.bf16.gmra.mrb[0].mxu0 %v708
      %v813 = vpop.f32.mrb[0].mxu0
      %v814 = vadd.f32 %v612, %v813
      %v815 = vpop.f32.mrb[0].mxu0
      %v816 = vpop.f32.mrb[0].mxu0
      %v817 = vadd.f32 %v612, %v816
      %v818 = vpop.f32.mrb[0].mxu0
      %819 = vmatprep.mubr.bf16.mxu0 0
      %820 = vmatmul.mubr.bf16.gmra.mrb[0].mxu0 %v711
      %v821 = vpop.f32.mrb[0].mxu0
      %v822 = vadd.f32 %v612, %v821
      %v823 = vpop.f32.mrb[0].mxu0
      %v824 = vpop.f32.mrb[0].mxu0
      %v825 = vadd.f32 %v612, %v824
      %v826 = vpop.f32.mrb[0].mxu0
      %827 = vmatprep.mubr.bf16.mxu0 0
      %828 = vmatmul.mubr.bf16.gmra.mrb[0].mxu0 %v714
      %v829 = vpop.f32.mrb[0].mxu0
      %v830 = vadd.f32 %v612, %v829
      %v831 = vpop.f32.mrb[0].mxu0
      %v832 = vpop.f32.mrb[0].mxu0
      %v833 = vadd.f32 %v612, %v832
      %v834 = vpop.f32.mrb[0].mxu0
      %835 = vmatprep.mubr.bf16.mxu0 0
      %836 = vmatmul.mubr.bf16.gmra.mrb[0].mxu0 %v717
      %v837 = vpop.f32.mrb[0].mxu0
      %v838 = vadd.f32 %v612, %v837
      %v839 = vpop.f32.mrb[0].mxu0
      %v840 = vpop.f32.mrb[0].mxu0
      %v841 = vadd.f32 %v612, %v840
      %v842 = vpop.f32.mrb[0].mxu0
      %843 = vmatprep.mubr.bf16.mxu0 0
      %844 = vmatmul.mubr.bf16.gmra.mrb[0].mxu0 %v720
      %v845 = vpop.f32.mrb[0].mxu0
      %v846 = vadd.f32 %v612, %v845
      %v847 = vpop.f32.mrb[0].mxu0
      %v848 = vpop.f32.mrb[0].mxu0
      %v849 = vadd.f32 %v612, %v848
      %v850 = vpop.f32.mrb[0].mxu0
      %851 = vmatprep.mubr.bf16.mxu0 0
      %852 = vmatmul.mubr.bf16.gmra.mrb[0].mxu0 %v723
      %v853 = vpop.f32.mrb[0].mxu0
      %v854 = vadd.f32 %v612, %v853
      %v855 = vpop.f32.mrb[0].mxu0
      %v856 = vpop.f32.mrb[0].mxu0
      %v857 = vadd.f32 %v612, %v856
      %v858 = vpop.f32.mrb[0].mxu0
      %859 = vmatprep.mubr.bf16.mxu0 0
      %860 = vmatmul.mubr.bf16.gmra.mrb[0].mxu0 %v726
      %v861 = vpop.f32.mrb[0].mxu0
      %v862 = vadd.f32 %v612, %v861
      %v863 = vpop.f32.mrb[0].mxu0
      %v864 = vpop.f32.mrb[0].mxu0
      %v865 = vadd.f32 %v612, %v864
      %v866 = vpop.f32.mrb[0].mxu0
      %867 = vmatprep.mubr.bf16.mxu0 0
      %868 = vmatmul.mubr.bf16.gmra.mrb[0].mxu0 %v729
      %v869 = vpop.f32.mrb[0].mxu0
      %v870 = vadd.f32 %v612, %v869
      %v871 = vpop.f32.mrb[0].mxu0
      %v872 = vpop.f32.mrb[0].mxu0
      %v873 = vadd.f32 %v612, %v872
      %v874 = vpop.f32.mrb[0].mxu0
      %875 = vmatprep.mubr.bf16.mxu0 0
      %876 = vmatmul.mubr.bf16.gmra.mrb[0].mxu0 %v732
      %v877 = vpop.f32.mrb[0].mxu0
      %v878 = vadd.f32 %v612, %v877
      %v879 = vpop.f32.mrb[0].mxu0
      %v880 = vpop.f32.mrb[0].mxu0
      %v881 = vadd.f32 %v612, %v880
      %v882 = vpop.f32.mrb[0].mxu0
      %883 = vmatprep.mubr.bf16.mxu0 0
      %884 = vmatmul.mubr.bf16.gmra.mrb[0].mxu0 %v735
      %v885 = vpop.f32.mrb[0].mxu0
      %v886 = vadd.f32 %v612, %v885
      %v887 = vpop.f32.mrb[0].mxu0
      %v888 = vpop.f32.mrb[0].mxu0
      %v889 = vadd.f32 %v612, %v888
      %v890 = vpop.f32.mrb[0].mxu0
      %891 = vmatprep.mubr.bf16.mxu0 0
      %892 = vmatmul.mubr.bf16.gmra.mrb[0].mxu0 %v738
      %v893 = vpop.f32.mrb[0].mxu0
      %v894 = vadd.f32 %v612, %v893
      %v895 = vpop.f32.mrb[0].mxu0
      %v896 = vpop.f32.mrb[0].mxu0
      %v897 = vadd.f32 %v612, %v896
      %v898 = vpop.f32.mrb[0].mxu0
      %899 = vmatprep.mubr.bf16.mxu0 0
      %900 = vmatmul.mubr.bf16.gmra.mrb[0].mxu0 %v741
      %v901 = vpop.f32.mrb[0].mxu0
      %v902 = vadd.f32 %v612, %v901
      %v903 = vpop.f32.mrb[0].mxu0
      %v904 = vpop.f32.mrb[0].mxu0
      %v905 = vadd.f32 %v612, %v904
      %v906 = vpop.f32.mrb[0].mxu0
      %907 = vdwg.mxu0
      %v908 = vxor.u32 %v782, 2147483648
      %v909 = vxor.u32 %v785, 2147483648
      %v910 = vxor.u32 %v790, 2147483648
      %v911 = vxor.u32 %v793, 2147483648
      %v912 = vxor.u32 %v798, 2147483648
      %v913 = vxor.u32 %v801, 2147483648
      %v914 = vxor.u32 %v806, 2147483648
      %v915 = vxor.u32 %v809, 2147483648
      %v916 = vxor.u32 %v814, 2147483648
      %v917 = vxor.u32 %v817, 2147483648
      %v918 = vxor.u32 %v822, 2147483648
      %v919 = vxor.u32 %v825, 2147483648
      %v920 = vxor.u32 %v830, 2147483648
      %v921 = vxor.u32 %v833, 2147483648
      %v922 = vxor.u32 %v838, 2147483648
      %v923 = vxor.u32 %v841, 2147483648
      %v924 = vxor.u32 %v846, 2147483648
      %v925 = vxor.u32 %v849, 2147483648
      %v926 = vxor.u32 %v854, 2147483648
      %v927 = vxor.u32 %v857, 2147483648
      %v928 = vxor.u32 %v862, 2147483648
      %v929 = vxor.u32 %v865, 2147483648
      %v930 = vxor.u32 %v870, 2147483648
      %v931 = vxor.u32 %v873, 2147483648
      %v932 = vxor.u32 %v878, 2147483648
      %v933 = vxor.u32 %v881, 2147483648
      %v934 = vxor.u32 %v886, 2147483648
      %v935 = vxor.u32 %v889, 2147483648
      %v936 = vxor.u32 %v894, 2147483648
      %v937 = vxor.u32 %v897, 2147483648
      %v938 = vxor.u32 %v902, 2147483648
      %v939 = vxor.u32 %v905, 2147483648
      %v940 = vmul.f32 %v908, 1.442695
      %v941 = vpow.pop %v940
      %v942 = vmul.f32 %v909, 1.442695
      %v943 = vpow.pop %v942
      %v944 = vmul.f32 %v910, 1.442695
      %v945 = vpow.pop %v944
      %v946 = vmul.f32 %v911, 1.442695
      %v947 = vpow.pop %v946
      %v948 = vmul.f32 %v912, 1.442695
      %v949 = vpow.pop %v948
      %v950 = vmul.f32 %v913, 1.442695
      %v951 = vpow.pop %v950
      %v952 = vmul.f32 %v914, 1.442695
      %v953 = vpow.pop %v952
      %v954 = vmul.f32 %v915, 1.442695
      %v955 = vpow.pop %v954
      %v956 = vmul.f32 %v916, 1.442695
      %v957 = vpow.pop %v956
      %v958 = vmul.f32 %v917, 1.442695
      %v959 = vpow.pop %v958
      %v960 = vmul.f32 %v918, 1.442695
      %v961 = vpow.pop %v960
      %v962 = vmul.f32 %v919, 1.442695
      %v963 = vpow.pop %v962
      %v964 = vmul.f32 %v920, 1.442695
      %v965 = vpow.pop %v964
      %v966 = vmul.f32 %v921, 1.442695
      %v967 = vpow.pop %v966
      %v968 = vmul.f32 %v922, 1.442695
      %v969 = vpow.pop %v968
      %v970 = vmul.f32 %v923, 1.442695
      %v971 = vpow.pop %v970
      %v972 = vmul.f32 %v924, 1.442695
      %v973 = vpow.pop %v972
      %v974 = vmul.f32 %v925, 1.442695
      %v975 = vpow.pop %v974
      %v976 = vmul.f32 %v926, 1.442695
      %v977 = vpow.pop %v976
      %v978 = vmul.f32 %v927, 1.442695
      %v979 = vpow.pop %v978
      %v980 = vmul.f32 %v928, 1.442695
      %v981 = vpow.pop %v980
      %v982 = vmul.f32 %v929, 1.442695
      %v983 = vpow.pop %v982
      %v984 = vmul.f32 %v930, 1.442695
      %v985 = vpow.pop %v984
      %v986 = vmul.f32 %v931, 1.442695
      %v987 = vpow.pop %v986
      %v988 = vmul.f32 %v932, 1.442695
      %v989 = vpow.pop %v988
      %v990 = vmul.f32 %v933, 1.442695
      %v991 = vpow.pop %v990
      %v992 = vmul.f32 %v934, 1.442695
      %v993 = vpow.pop %v992
      %v994 = vmul.f32 %v935, 1.442695
      %v995 = vpow.pop %v994
      %v996 = vmul.f32 %v936, 1.442695
      %v997 = vpow.pop %v996
      %v998 = vmul.f32 %v937, 1.442695
      %v999 = vpow.pop %v998
      %v1000 = vmul.f32 %v938, 1.442695
      %v1001 = vpow.pop %v1000
      %v1002 = vmul.f32 %v939, 1.442695
      %v1003 = vpow.pop %v1002
      %v1004 = vadd.f32 %v941, 1.0
      %v1005 = vadd.f32 %v943, 1.0
      %v1006 = vadd.f32 %v945, 1.0
      %v1007 = vadd.f32 %v947, 1.0
      %v1008 = vadd.f32 %v949, 1.0
      %v1009 = vadd.f32 %v951, 1.0
      %v1010 = vadd.f32 %v953, 1.0
      %v1011 = vadd.f32 %v955, 1.0
      %v1012 = vadd.f32 %v957, 1.0
      %v1013 = vadd.f32 %v959, 1.0
      %v1014 = vadd.f32 %v961, 1.0
      %v1015 = vadd.f32 %v963, 1.0
      %v1016 = vadd.f32 %v965, 1.0
      %v1017 = vadd.f32 %v967, 1.0
      %v1018 = vadd.f32 %v969, 1.0
      %v1019 = vadd.f32 %v971, 1.0
      %v1020 = vadd.f32 %v973, 1.0
      %v1021 = vadd.f32 %v975, 1.0
      %v1022 = vadd.f32 %v977, 1.0
      %v1023 = vadd.f32 %v979, 1.0
      %v1024 = vadd.f32 %v981, 1.0
      %v1025 = vadd.f32 %v983, 1.0
      %v1026 = vadd.f32 %v985, 1.0
      %v1027 = vadd.f32 %v987, 1.0
      %v1028 = vadd.f32 %v989, 1.0
      %v1029 = vadd.f32 %v991, 1.0
      %v1030 = vadd.f32 %v993, 1.0
      %v1031 = vadd.f32 %v995, 1.0
      %v1032 = vadd.f32 %v997, 1.0
      %v1033 = vadd.f32 %v999, 1.0
      %v1034 = vadd.f32 %v1001, 1.0
      %v1035 = vadd.f32 %v1003, 1.0
      %v1036 = vrcp.pop %v1004
      %v1037 = vmul.f32 1.0, %v1036
      %v1038 = vrcp.pop %v1005
      %v1039 = vmul.f32 1.0, %v1038
      %v1040 = vrcp.pop %v1006
      %v1041 = vmul.f32 1.0, %v1040
      %v1042 = vrcp.pop %v1007
      %v1043 = vmul.f32 1.0, %v1042
      %v1044 = vrcp.pop %v1008
      %v1045 = vmul.f32 1.0, %v1044
      %v1046 = vrcp.pop %v1009
      %v1047 = vmul.f32 1.0, %v1046
      %v1048 = vrcp.pop %v1010
      %v1049 = vmul.f32 1.0, %v1048
      %v1050 = vrcp.pop %v1011
      %v1051 = vmul.f32 1.0, %v1050
      %v1052 = vrcp.pop %v1012
      %v1053 = vmul.f32 1.0, %v1052
      %v1054 = vrcp.pop %v1013
      %v1055 = vmul.f32 1.0, %v1054
      %v1056 = vrcp.pop %v1014
      %v1057 = vmul.f32 1.0, %v1056
      %v1058 = vrcp.pop %v1015
      %v1059 = vmul.f32 1.0, %v1058
      %v1060 = vrcp.pop %v1016
      %v1061 = vmul.f32 1.0, %v1060
      %v1062 = vrcp.pop %v1017
      %v1063 = vmul.f32 1.0, %v1062
      %v1064 = vrcp.pop %v1018
      %v1065 = vmul.f32 1.0, %v1064
      %v1066 = vrcp.pop %v1019
      %v1067 = vmul.f32 1.0, %v1066
      %v1068 = vrcp.pop %v1020
      %v1069 = vmul.f32 1.0, %v1068
      %v1070 = vrcp.pop %v1021
      %v1071 = vmul.f32 1.0, %v1070
      %v1072 = vrcp.pop %v1022
      %v1073 = vmul.f32 1.0, %v1072
      %v1074 = vrcp.pop %v1023
      %v1075 = vmul.f32 1.0, %v1074
      %v1076 = vrcp.pop %v1024
      %v1077 = vmul.f32 1.0, %v1076
      %v1078 = vrcp.pop %v1025
      %v1079 = vmul.f32 1.0, %v1078
      %v1080 = vrcp.pop %v1026
      %v1081 = vmul.f32 1.0, %v1080
      %v1082 = vrcp.pop %v1027
      %v1083 = vmul.f32 1.0, %v1082
      %v1084 = vrcp.pop %v1028
      %v1085 = vmul.f32 1.0, %v1084
      %v1086 = vrcp.pop %v1029
      %v1087 = vmul.f32 1.0, %v1086
      %v1088 = vrcp.pop %v1030
      %v1089 = vmul.f32 1.0, %v1088
      %v1090 = vrcp.pop %v1031
      %v1091 = vmul.f32 1.0, %v1090
      %v1092 = vrcp.pop %v1032
      %v1093 = vmul.f32 1.0, %v1092
      %v1094 = vrcp.pop %v1033
      %v1095 = vmul.f32 1.0, %v1094
      %v1096 = vrcp.pop %v1034
      %v1097 = vmul.f32 1.0, %v1096
      %v1098 = vrcp.pop %v1035
      %v1099 = vmul.f32 1.0, %v1098
      %v1100 = vmul.f32 %v782, %v1037
      %v1101 = vmul.f32 %v785, %v1039
      %v1102 = vmul.f32 %v790, %v1041
      %v1103 = vmul.f32 %v793, %v1043
      %v1104 = vmul.f32 %v798, %v1045
      %v1105 = vmul.f32 %v801, %v1047
      %v1106 = vmul.f32 %v806, %v1049
      %v1107 = vmul.f32 %v809, %v1051
      %v1108 = vmul.f32 %v814, %v1053
      %v1109 = vmul.f32 %v817, %v1055
      %v1110 = vmul.f32 %v822, %v1057
      %v1111 = vmul.f32 %v825, %v1059
      %v1112 = vmul.f32 %v830, %v1061
      %v1113 = vmul.f32 %v833, %v1063
      %v1114 = vmul.f32 %v838, %v1065
      %v1115 = vmul.f32 %v841, %v1067
      %v1116 = vmul.f32 %v846, %v1069
      %v1117 = vmul.f32 %v849, %v1071
      %v1118 = vmul.f32 %v854, %v1073
      %v1119 = vmul.f32 %v857, %v1075
      %v1120 = vmul.f32 %v862, %v1077
      %v1121 = vmul.f32 %v865, %v1079
      %v1122 = vmul.f32 %v870, %v1081
      %v1123 = vmul.f32 %v873, %v1083
      %v1124 = vmul.f32 %v878, %v1085
      %v1125 = vmul.f32 %v881, %v1087
      %v1126 = vmul.f32 %v886, %v1089
      %v1127 = vmul.f32 %v889, %v1091
      %v1128 = vmul.f32 %v894, %v1093
      %v1129 = vmul.f32 %v897, %v1095
      %v1130 = vmul.f32 %v902, %v1097
      %v1131 = vmul.f32 %v905, %v1099
      %v1132 = vsel %vm318, 1, 0
      %v1133 = vsel %vm319, 1, 0
      %v1134 = vsel %vm320, 1, 0
      %v1135 = vsel %vm321, 1, 0
      %v1136 = vsel %vm322, 1, 0
      %v1137 = vsel %vm323, 1, 0
      %v1138 = vsel %vm324, 1, 0
      %v1139 = vsel %vm325, 1, 0
      %v1140 = vsel %vm326, 1, 0
      %v1141 = vsel %vm327, 1, 0
      %v1142 = vsel %vm328, 1, 0
      %v1143 = vsel %vm329, 1, 0
      %v1144 = vsel %vm330, 1, 0
      %v1145 = vsel %vm331, 1, 0
      %v1146 = vsel %vm332, 1, 0
      %v1147 = vsel %vm333, 1, 0
      %v1148 = vsel %vm334, 1, 0
      %v1149 = vsel %vm335, 1, 0
      %v1150 = vsel %vm336, 1, 0
      %v1151 = vsel %vm337, 1, 0
      %v1152 = vsel %vm338, 1, 0
      %v1153 = vsel %vm339, 1, 0
      %v1154 = vsel %vm340, 1, 0
      %v1155 = vsel %vm341, 1, 0
      %v1156 = vsel %vm342, 1, 0
      %v1157 = vsel %vm343, 1, 0
      %v1158 = vsel %vm344, 1, 0
      %v1159 = vsel %vm345, 1, 0
      %v1160 = vsel %vm346, 1, 0
      %v1161 = vsel %vm347, 1, 0
      %v1162 = vsel %vm348, 1, 0
      %v1163 = vsel %vm349, 1, 0
      %vm1164 = vcmp.eq.s32.totalorder %v1132, 1
      %vm1165 = vcmp.eq.s32.totalorder %v1133, 1
      %vm1166 = vcmp.eq.s32.totalorder %v1134, 1
      %vm1167 = vcmp.eq.s32.totalorder %v1135, 1
      %vm1168 = vcmp.eq.s32.totalorder %v1136, 1
      %vm1169 = vcmp.eq.s32.totalorder %v1137, 1
      %vm1170 = vcmp.eq.s32.totalorder %v1138, 1
      %vm1171 = vcmp.eq.s32.totalorder %v1139, 1
      %vm1172 = vcmp.eq.s32.totalorder %v1140, 1
      %vm1173 = vcmp.eq.s32.totalorder %v1141, 1
      %vm1174 = vcmp.eq.s32.totalorder %v1142, 1
      %vm1175 = vcmp.eq.s32.totalorder %v1143, 1
      %vm1176 = vcmp.eq.s32.totalorder %v1144, 1
      %vm1177 = vcmp.eq.s32.totalorder %v1145, 1
      %vm1178 = vcmp.eq.s32.totalorder %v1146, 1
      %vm1179 = vcmp.eq.s32.totalorder %v1147, 1
      %vm1180 = vcmp.eq.s32.totalorder %v1148, 1
      %vm1181 = vcmp.eq.s32.totalorder %v1149, 1
      %vm1182 = vcmp.eq.s32.totalorder %v1150, 1
      %vm1183 = vcmp.eq.s32.totalorder %v1151, 1
      %vm1184 = vcmp.eq.s32.totalorder %v1152, 1
      %vm1185 = vcmp.eq.s32.totalorder %v1153, 1
      %vm1186 = vcmp.eq.s32.totalorder %v1154, 1
      %vm1187 = vcmp.eq.s32.totalorder %v1155, 1
      %vm1188 = vcmp.eq.s32.totalorder %v1156, 1
      %vm1189 = vcmp.eq.s32.totalorder %v1157, 1
      %vm1190 = vcmp.eq.s32.totalorder %v1158, 1
      %vm1191 = vcmp.eq.s32.totalorder %v1159, 1
      %vm1192 = vcmp.eq.s32.totalorder %v1160, 1
      %vm1193 = vcmp.eq.s32.totalorder %v1161, 1
      %vm1194 = vcmp.eq.s32.totalorder %v1162, 1
      %vm1195 = vcmp.eq.s32.totalorder %v1163, 1
      %v1196 = vsel %vm1164, %v1128, -inf
      %v1197 = vsel %vm1165, %v1129, -inf
      %v1198 = vsel %vm1166, %v1130, -inf
      %v1199 = vsel %vm1167, %v1131, -inf
      %v1200 = vsel %vm1168, %v1100, -inf
      %v1201 = vsel %vm1169, %v1101, -inf
      %v1202 = vsel %vm1170, %v1102, -inf
      %v1203 = vsel %vm1171, %v1103, -inf
      %v1204 = vsel %vm1172, %v1104, -inf
      %v1205 = vsel %vm1173, %v1105, -inf
      %v1206 = vsel %vm1174, %v1106, -inf
      %v1207 = vsel %vm1175, %v1107, -inf
      %v1208 = vsel %vm1176, %v1108, -inf
      %v1209 = vsel %vm1177, %v1109, -inf
      %v1210 = vsel %vm1178, %v1110, -inf
      %v1211 = vsel %vm1179, %v1111, -inf
      %v1212 = vsel %vm1180, %v1112, -inf
      %v1213 = vsel %vm1181, %v1113, -inf
      %v1214 = vsel %vm1182, %v1114, -inf
      %v1215 = vsel %vm1183, %v1115, -inf
      %v1216 = vsel %vm1184, %v1116, -inf
      %v1217 = vsel %vm1185, %v1117, -inf
      %v1218 = vsel %vm1186, %v1118, -inf
      %v1219 = vsel %vm1187, %v1119, -inf
      %v1220 = vsel %vm1188, %v1120, -inf
      %v1221 = vsel %vm1189, %v1121, -inf
      %v1222 = vsel %vm1190, %v1122, -inf
      %v1223 = vsel %vm1191, %v1123, -inf
      %v1224 = vsel %vm1192, %v1124, -inf
      %v1225 = vsel %vm1193, %v1125, -inf
      %v1226 = vsel %vm1194, %v1126, -inf
      %v1227 = vsel %vm1195, %v1127, -inf
      %v1228 = vmax.f32 %v1100, %v1196
      %v1229 = vmax.f32 %v1101, %v1197
      %v1230 = vmax.f32 %v1102, %v1198
      %v1231 = vmax.f32 %v1103, %v1199
      %v1232 = vmax.f32 %v1104, %v1200
      %v1233 = vmax.f32 %v1105, %v1201
      %v1234 = vmax.f32 %v1106, %v1202
      %v1235 = vmax.f32 %v1107, %v1203
      %v1236 = vmax.f32 %v1108, %v1204
      %v1237 = vmax.f32 %v1109, %v1205
      %v1238 = vmax.f32 %v1110, %v1206
      %v1239 = vmax.f32 %v1111, %v1207
      %v1240 = vmax.f32 %v1112, %v1208
      %v1241 = vmax.f32 %v1113, %v1209
      %v1242 = vmax.f32 %v1114, %v1210
      %v1243 = vmax.f32 %v1115, %v1211
      %v1244 = vmax.f32 %v1116, %v1212
      %v1245 = vmax.f32 %v1117, %v1213
      %v1246 = vmax.f32 %v1118, %v1214
      %v1247 = vmax.f32 %v1119, %v1215
      %v1248 = vmax.f32 %v1120, %v1216
      %v1249 = vmax.f32 %v1121, %v1217
      %v1250 = vmax.f32 %v1122, %v1218
      %v1251 = vmax.f32 %v1123, %v1219
      %v1252 = vmax.f32 %v1124, %v1220
      %v1253 = vmax.f32 %v1125, %v1221
      %v1254 = vmax.f32 %v1126, %v1222
      %v1255 = vmax.f32 %v1127, %v1223
      %v1256 = vmax.f32 %v1128, %v1224
      %v1257 = vmax.f32 %v1129, %v1225
      %v1258 = vmax.f32 %v1130, %v1226
      %v1259 = vmax.f32 %v1131, %v1227
      %v1260 = vsel %vm350, 1, 0
      %v1261 = vsel %vm351, 1, 0
      %v1262 = vsel %vm352, 1, 0
      %v1263 = vsel %vm353, 1, 0
      %v1264 = vsel %vm354, 1, 0
      %v1265 = vsel %vm355, 1, 0
      %v1266 = vsel %vm356, 1, 0
      %v1267 = vsel %vm357, 1, 0
      %v1268 = vsel %vm358, 1, 0
      %v1269 = vsel %vm359, 1, 0
      %v1270 = vsel %vm360, 1, 0
      %v1271 = vsel %vm361, 1, 0
      %v1272 = vsel %vm362, 1, 0
      %v1273 = vsel %vm363, 1, 0
      %v1274 = vsel %vm364, 1, 0
      %v1275 = vsel %vm365, 1, 0
      %v1276 = vsel %vm366, 1, 0
      %v1277 = vsel %vm367, 1, 0
      %v1278 = vsel %vm368, 1, 0
      %v1279 = vsel %vm369, 1, 0
      %v1280 = vsel %vm370, 1, 0
      %v1281 = vsel %vm371, 1, 0
      %v1282 = vsel %vm372, 1, 0
      %v1283 = vsel %vm373, 1, 0
      %v1284 = vsel %vm374, 1, 0
      %v1285 = vsel %vm375, 1, 0
      %v1286 = vsel %vm376, 1, 0
      %v1287 = vsel %vm377, 1, 0
      %v1288 = vsel %vm378, 1, 0
      %v1289 = vsel %vm379, 1, 0
      %v1290 = vsel %vm380, 1, 0
      %v1291 = vsel %vm381, 1, 0
      %vm1292 = vcmp.eq.s32.totalorder %v1260, 1
      %vm1293 = vcmp.eq.s32.totalorder %v1261, 1
      %vm1294 = vcmp.eq.s32.totalorder %v1262, 1
      %vm1295 = vcmp.eq.s32.totalorder %v1263, 1
      %vm1296 = vcmp.eq.s32.totalorder %v1264, 1
      %vm1297 = vcmp.eq.s32.totalorder %v1265, 1
      %vm1298 = vcmp.eq.s32.totalorder %v1266, 1
      %vm1299 = vcmp.eq.s32.totalorder %v1267, 1
      %vm1300 = vcmp.eq.s32.totalorder %v1268, 1
      %vm1301 = vcmp.eq.s32.totalorder %v1269, 1
      %vm1302 = vcmp.eq.s32.totalorder %v1270, 1
      %vm1303 = vcmp.eq.s32.totalorder %v1271, 1
      %vm1304 = vcmp.eq.s32.totalorder %v1272, 1
      %vm1305 = vcmp.eq.s32.totalorder %v1273, 1
      %vm1306 = vcmp.eq.s32.totalorder %v1274, 1
      %vm1307 = vcmp.eq.s32.totalorder %v1275, 1
      %vm1308 = vcmp.eq.s32.totalorder %v1276, 1
      %vm1309 = vcmp.eq.s32.totalorder %v1277, 1
      %vm1310 = vcmp.eq.s32.totalorder %v1278, 1
      %vm1311 = vcmp.eq.s32.totalorder %v1279, 1
      %vm1312 = vcmp.eq.s32.totalorder %v1280, 1
      %vm1313 = vcmp.eq.s32.totalorder %v1281, 1
      %vm1314 = vcmp.eq.s32.totalorder %v1282, 1
      %vm1315 = vcmp.eq.s32.totalorder %v1283, 1
      %vm1316 = vcmp.eq.s32.totalorder %v1284, 1
      %vm1317 = vcmp.eq.s32.totalorder %v1285, 1
      %vm1318 = vcmp.eq.s32.totalorder %v1286, 1
      %vm1319 = vcmp.eq.s32.totalorder %v1287, 1
      %vm1320 = vcmp.eq.s32.totalorder %v1288, 1
      %vm1321 = vcmp.eq.s32.totalorder %v1289, 1
      %vm1322 = vcmp.eq.s32.totalorder %v1290, 1
      %vm1323 = vcmp.eq.s32.totalorder %v1291, 1
      %v1324 = vsel %vm1292, %v1130, -inf
      %v1325 = vsel %vm1293, %v1131, -inf
      %v1326 = vsel %vm1294, %v1100, -inf
      %v1327 = vsel %vm1295, %v1101, -inf
      %v1328 = vsel %vm1296, %v1102, -inf
      %v1329 = vsel %vm1297, %v1103, -inf
      %v1330 = vsel %vm1298, %v1104, -inf
      %v1331 = vsel %vm1299, %v1105, -inf
      %v1332 = vsel %vm1300, %v1106, -inf
      %v1333 = vsel %vm1301, %v1107, -inf
      %v1334 = vsel %vm1302, %v1108, -inf
      %v1335 = vsel %vm1303, %v1109, -inf
      %v1336 = vsel %vm1304, %v1110, -inf
      %v1337 = vsel %vm1305, %v1111, -inf
      %v1338 = vsel %vm1306, %v1112, -inf
      %v1339 = vsel %vm1307, %v1113, -inf
      %v1340 = vsel %vm1308, %v1114, -inf
      %v1341 = vsel %vm1309, %v1115, -inf
      %v1342 = vsel %vm1310, %v1116, -inf
      %v1343 = vsel %vm1311, %v1117, -inf
      %v1344 = vsel %vm1312, %v1118, -inf
      %v1345 = vsel %vm1313, %v1119, -inf
      %v1346 = vsel %vm1314, %v1120, -inf
      %v1347 = vsel %vm1315, %v1121, -inf
      %v1348 = vsel %vm1316, %v1122, -inf
      %v1349 = vsel %vm1317, %v1123, -inf
      %v1350 = vsel %vm1318, %v1124, -inf
      %v1351 = vsel %vm1319, %v1125, -inf
      %v1352 = vsel %vm1320, %v1126, -inf
      %v1353 = vsel %vm1321, %v1127, -inf
      %v1354 = vsel %vm1322, %v1128, -inf
      %v1355 = vsel %vm1323, %v1129, -inf
      %v1356 = vmax.f32 %v1228, %v1324
      %v1357 = vmax.f32 %v1229, %v1325
      %v1358 = vmax.f32 %v1230, %v1326
      %v1359 = vmax.f32 %v1231, %v1327
      %v1360 = vmax.f32 %v1232, %v1328
      %v1361 = vmax.f32 %v1233, %v1329
      %v1362 = vmax.f32 %v1234, %v1330
      %v1363 = vmax.f32 %v1235, %v1331
      %v1364 = vmax.f32 %v1236, %v1332
      %v1365 = vmax.f32 %v1237, %v1333
      %v1366 = vmax.f32 %v1238, %v1334
      %v1367 = vmax.f32 %v1239, %v1335
      %v1368 = vmax.f32 %v1240, %v1336
      %v1369 = vmax.f32 %v1241, %v1337
      %v1370 = vmax.f32 %v1242, %v1338
      %v1371 = vmax.f32 %v1243, %v1339
      %v1372 = vmax.f32 %v1244, %v1340
      %v1373 = vmax.f32 %v1245, %v1341
      %v1374 = vmax.f32 %v1246, %v1342
      %v1375 = vmax.f32 %v1247, %v1343
      %v1376 = vmax.f32 %v1248, %v1344
      %v1377 = vmax.f32 %v1249, %v1345
      %v1378 = vmax.f32 %v1250, %v1346
      %v1379 = vmax.f32 %v1251, %v1347
      %v1380 = vmax.f32 %v1252, %v1348
      %v1381 = vmax.f32 %v1253, %v1349
      %v1382 = vmax.f32 %v1254, %v1350
      %v1383 = vmax.f32 %v1255, %v1351
      %v1384 = vmax.f32 %v1256, %v1352
      %v1385 = vmax.f32 %v1257, %v1353
      %v1386 = vmax.f32 %v1258, %v1354
      %v1387 = vmax.f32 %v1259, %v1355
      %v1388 = vsel %vm382, 1, 0
      %v1389 = vsel %vm383, 1, 0
      %v1390 = vsel %vm384, 1, 0
      %v1391 = vsel %vm385, 1, 0
      %v1392 = vsel %vm386, 1, 0
      %v1393 = vsel %vm387, 1, 0
      %v1394 = vsel %vm388, 1, 0
      %v1395 = vsel %vm389, 1, 0
      %v1396 = vsel %vm390, 1, 0
      %v1397 = vsel %vm391, 1, 0
      %v1398 = vsel %vm392, 1, 0
      %v1399 = vsel %vm393, 1, 0
      %v1400 = vsel %vm394, 1, 0
      %v1401 = vsel %vm395, 1, 0
      %v1402 = vsel %vm396, 1, 0
      %v1403 = vsel %vm397, 1, 0
      %v1404 = vsel %vm398, 1, 0
      %v1405 = vsel %vm399, 1, 0
      %v1406 = vsel %vm400, 1, 0
      %v1407 = vsel %vm401, 1, 0
      %v1408 = vsel %vm402, 1, 0
      %v1409 = vsel %vm403, 1, 0
      %v1410 = vsel %vm404, 1, 0
      %v1411 = vsel %vm405, 1, 0
      %v1412 = vsel %vm406, 1, 0
      %v1413 = vsel %vm407, 1, 0
      %v1414 = vsel %vm408, 1, 0
      %v1415 = vsel %vm409, 1, 0
      %v1416 = vsel %vm410, 1, 0
      %v1417 = vsel %vm411, 1, 0
      %v1418 = vsel %vm412, 1, 0
      %v1419 = vsel %vm413, 1, 0
      %vm1420 = vcmp.eq.s32.totalorder %v1388, 1
      %vm1421 = vcmp.eq.s32.totalorder %v1389, 1
      %vm1422 = vcmp.eq.s32.totalorder %v1390, 1
      %vm1423 = vcmp.eq.s32.totalorder %v1391, 1
      %vm1424 = vcmp.eq.s32.totalorder %v1392, 1
      %vm1425 = vcmp.eq.s32.totalorder %v1393, 1
      %vm1426 = vcmp.eq.s32.totalorder %v1394, 1
      %vm1427 = vcmp.eq.s32.totalorder %v1395, 1
      %vm1428 = vcmp.eq.s32.totalorder %v1396, 1
      %vm1429 = vcmp.eq.s32.totalorder %v1397, 1
      %vm1430 = vcmp.eq.s32.totalorder %v1398, 1
      %vm1431 = vcmp.eq.s32.totalorder %v1399, 1
      %vm1432 = vcmp.eq.s32.totalorder %v1400, 1
      %vm1433 = vcmp.eq.s32.totalorder %v1401, 1
      %vm1434 = vcmp.eq.s32.totalorder %v1402, 1
      %vm1435 = vcmp.eq.s32.totalorder %v1403, 1
      %vm1436 = vcmp.eq.s32.totalorder %v1404, 1
      %vm1437 = vcmp.eq.s32.totalorder %v1405, 1
      %vm1438 = vcmp.eq.s32.totalorder %v1406, 1
      %vm1439 = vcmp.eq.s32.totalorder %v1407, 1
      %vm1440 = vcmp.eq.s32.totalorder %v1408, 1
      %vm1441 = vcmp.eq.s32.totalorder %v1409, 1
      %vm1442 = vcmp.eq.s32.totalorder %v1410, 1
      %vm1443 = vcmp.eq.s32.totalorder %v1411, 1
      %vm1444 = vcmp.eq.s32.totalorder %v1412, 1
      %vm1445 = vcmp.eq.s32.totalorder %v1413, 1
      %vm1446 = vcmp.eq.s32.totalorder %v1414, 1
      %vm1447 = vcmp.eq.s32.totalorder %v1415, 1
      %vm1448 = vcmp.eq.s32.totalorder %v1416, 1
      %vm1449 = vcmp.eq.s32.totalorder %v1417, 1
      %vm1450 = vcmp.eq.s32.totalorder %v1418, 1
      %vm1451 = vcmp.eq.s32.totalorder %v1419, 1
      %v1452 = vsel %vm1420, %v1102, -inf
      %v1453 = vsel %vm1421, %v1103, -inf
      %v1454 = vsel %vm1422, %v1104, -inf
      %v1455 = vsel %vm1423, %v1105, -inf
      %v1456 = vsel %vm1424, %v1106, -inf
      %v1457 = vsel %vm1425, %v1107, -inf
      %v1458 = vsel %vm1426, %v1108, -inf
      %v1459 = vsel %vm1427, %v1109, -inf
      %v1460 = vsel %vm1428, %v1110, -inf
      %v1461 = vsel %vm1429, %v1111, -inf
      %v1462 = vsel %vm1430, %v1112, -inf
      %v1463 = vsel %vm1431, %v1113, -inf
      %v1464 = vsel %vm1432, %v1114, -inf
      %v1465 = vsel %vm1433, %v1115, -inf
      %v1466 = vsel %vm1434, %v1116, -inf
      %v1467 = vsel %vm1435, %v1117, -inf
      %v1468 = vsel %vm1436, %v1118, -inf
      %v1469 = vsel %vm1437, %v1119, -inf
      %v1470 = vsel %vm1438, %v1120, -inf
      %v1471 = vsel %vm1439, %v1121, -inf
      %v1472 = vsel %vm1440, %v1122, -inf
      %v1473 = vsel %vm1441, %v1123, -inf
      %v1474 = vsel %vm1442, %v1124, -inf
      %v1475 = vsel %vm1443, %v1125, -inf
      %v1476 = vsel %vm1444, %v1126, -inf
      %v1477 = vsel %vm1445, %v1127, -inf
      %v1478 = vsel %vm1446, %v1128, -inf
      %v1479 = vsel %vm1447, %v1129, -inf
      %v1480 = vsel %vm1448, %v1130, -inf
      %v1481 = vsel %vm1449, %v1131, -inf
      %v1482 = vsel %vm1450, %v1100, -inf
      %v1483 = vsel %vm1451, %v1101, -inf
      %v1484 = vmax.f32 %v1356, %v1452
      %v1485 = vmax.f32 %v1357, %v1453
      %v1486 = vmax.f32 %v1358, %v1454
      %v1487 = vmax.f32 %v1359, %v1455
      %v1488 = vmax.f32 %v1360, %v1456
      %v1489 = vmax.f32 %v1361, %v1457
      %v1490 = vmax.f32 %v1362, %v1458
      %v1491 = vmax.f32 %v1363, %v1459
      %v1492 = vmax.f32 %v1364, %v1460
      %v1493 = vmax.f32 %v1365, %v1461
      %v1494 = vmax.f32 %v1366, %v1462
      %v1495 = vmax.f32 %v1367, %v1463
      %v1496 = vmax.f32 %v1368, %v1464
      %v1497 = vmax.f32 %v1369, %v1465
      %v1498 = vmax.f32 %v1370, %v1466
      %v1499 = vmax.f32 %v1371, %v1467
      %v1500 = vmax.f32 %v1372, %v1468
      %v1501 = vmax.f32 %v1373, %v1469
      %v1502 = vmax.f32 %v1374, %v1470
      %v1503 = vmax.f32 %v1375, %v1471
      %v1504 = vmax.f32 %v1376, %v1472
      %v1505 = vmax.f32 %v1377, %v1473
      %v1506 = vmax.f32 %v1378, %v1474
      %v1507 = vmax.f32 %v1379, %v1475
      %v1508 = vmax.f32 %v1380, %v1476
      %v1509 = vmax.f32 %v1381, %v1477
      %v1510 = vmax.f32 %v1382, %v1478
      %v1511 = vmax.f32 %v1383, %v1479
      %v1512 = vmax.f32 %v1384, %v1480
      %v1513 = vmax.f32 %v1385, %v1481
      %v1514 = vmax.f32 %v1386, %v1482
      %v1515 = vmax.f32 %v1387, %v1483
      %v1516 = vsel %vm414, 1, 0
      %v1517 = vsel %vm415, 1, 0
      %v1518 = vsel %vm416, 1, 0
      %v1519 = vsel %vm417, 1, 0
      %v1520 = vsel %vm418, 1, 0
      %v1521 = vsel %vm419, 1, 0
      %v1522 = vsel %vm420, 1, 0
      %v1523 = vsel %vm421, 1, 0
      %v1524 = vsel %vm422, 1, 0
      %v1525 = vsel %vm423, 1, 0
      %v1526 = vsel %vm424, 1, 0
      %v1527 = vsel %vm425, 1, 0
      %v1528 = vsel %vm426, 1, 0
      %v1529 = vsel %vm427, 1, 0
      %v1530 = vsel %vm428, 1, 0
      %v1531 = vsel %vm429, 1, 0
      %v1532 = vsel %vm430, 1, 0
      %v1533 = vsel %vm431, 1, 0
      %v1534 = vsel %vm432, 1, 0
      %v1535 = vsel %vm433, 1, 0
      %v1536 = vsel %vm434, 1, 0
      %v1537 = vsel %vm435, 1, 0
      %v1538 = vsel %vm436, 1, 0
      %v1539 = vsel %vm437, 1, 0
      %v1540 = vsel %vm438, 1, 0
      %v1541 = vsel %vm439, 1, 0
      %v1542 = vsel %vm440, 1, 0
      %v1543 = vsel %vm441, 1, 0
      %v1544 = vsel %vm442, 1, 0
      %v1545 = vsel %vm443, 1, 0
      %v1546 = vsel %vm444, 1, 0
      %v1547 = vsel %vm445, 1, 0
      %vm1548 = vcmp.eq.s32.totalorder %v1516, 1
      %vm1549 = vcmp.eq.s32.totalorder %v1517, 1
      %vm1550 = vcmp.eq.s32.totalorder %v1518, 1
      %vm1551 = vcmp.eq.s32.totalorder %v1519, 1
      %vm1552 = vcmp.eq.s32.totalorder %v1520, 1
      %vm1553 = vcmp.eq.s32.totalorder %v1521, 1
      %vm1554 = vcmp.eq.s32.totalorder %v1522, 1
      %vm1555 = vcmp.eq.s32.totalorder %v1523, 1
      %vm1556 = vcmp.eq.s32.totalorder %v1524, 1
      %vm1557 = vcmp.eq.s32.totalorder %v1525, 1
      %vm1558 = vcmp.eq.s32.totalorder %v1526, 1
      %vm1559 = vcmp.eq.s32.totalorder %v1527, 1
      %vm1560 = vcmp.eq.s32.totalorder %v1528, 1
      %vm1561 = vcmp.eq.s32.totalorder %v1529, 1
      %vm1562 = vcmp.eq.s32.totalorder %v1530, 1
      %vm1563 = vcmp.eq.s32.totalorder %v1531, 1
      %vm1564 = vcmp.eq.s32.totalorder %v1532, 1
      %vm1565 = vcmp.eq.s32.totalorder %v1533, 1
      %vm1566 = vcmp.eq.s32.totalorder %v1534, 1
      %vm1567 = vcmp.eq.s32.totalorder %v1535, 1
      %vm1568 = vcmp.eq.s32.totalorder %v1536, 1
      %vm1569 = vcmp.eq.s32.totalorder %v1537, 1
      %vm1570 = vcmp.eq.s32.totalorder %v1538, 1
      %vm1571 = vcmp.eq.s32.totalorder %v1539, 1
      %vm1572 = vcmp.eq.s32.totalorder %v1540, 1
      %vm1573 = vcmp.eq.s32.totalorder %v1541, 1
      %vm1574 = vcmp.eq.s32.totalorder %v1542, 1
      %vm1575 = vcmp.eq.s32.totalorder %v1543, 1
      %vm1576 = vcmp.eq.s32.totalorder %v1544, 1
      %vm1577 = vcmp.eq.s32.totalorder %v1545, 1
      %vm1578 = vcmp.eq.s32.totalorder %v1546, 1
      %vm1579 = vcmp.eq.s32.totalorder %v1547, 1
      %v1580 = vsel %vm1548, %v1104, -inf
      %v1581 = vsel %vm1549, %v1105, -inf
      %v1582 = vsel %vm1550, %v1106, -inf
      %v1583 = vsel %vm1551, %v1107, -inf
      %v1584 = vsel %vm1552, %v1108, -inf
      %v1585 = vsel %vm1553, %v1109, -inf
      %v1586 = vsel %vm1554, %v1110, -inf
      %v1587 = vsel %vm1555, %v1111, -inf
      %v1588 = vsel %vm1556, %v1112, -inf
      %v1589 = vsel %vm1557, %v1113, -inf
      %v1590 = vsel %vm1558, %v1114, -inf
      %v1591 = vsel %vm1559, %v1115, -inf
      %v1592 = vsel %vm1560, %v1116, -inf
      %v1593 = vsel %vm1561, %v1117, -inf
      %v1594 = vsel %vm1562, %v1118, -inf
      %v1595 = vsel %vm1563, %v1119, -inf
      %v1596 = vsel %vm1564, %v1120, -inf
      %v1597 = vsel %vm1565, %v1121, -inf
      %v1598 = vsel %vm1566, %v1122, -inf
      %v1599 = vsel %vm1567, %v1123, -inf
      %v1600 = vsel %vm1568, %v1124, -inf
      %v1601 = vsel %vm1569, %v1125, -inf
      %v1602 = vsel %vm1570, %v1126, -inf
      %v1603 = vsel %vm1571, %v1127, -inf
      %v1604 = vsel %vm1572, %v1128, -inf
      %v1605 = vsel %vm1573, %v1129, -inf
      %v1606 = vsel %vm1574, %v1130, -inf
      %v1607 = vsel %vm1575, %v1131, -inf
      %v1608 = vsel %vm1576, %v1100, -inf
      %v1609 = vsel %vm1577, %v1101, -inf
      %v1610 = vsel %vm1578, %v1102, -inf
      %v1611 = vsel %vm1579, %v1103, -inf
      %v1612 = vmax.f32 %v1484, %v1580
      %v1613 = vmax.f32 %v1485, %v1581
      %v1614 = vmax.f32 %v1486, %v1582
      %v1615 = vmax.f32 %v1487, %v1583
      %v1616 = vmax.f32 %v1488, %v1584
      %v1617 = vmax.f32 %v1489, %v1585
      %v1618 = vmax.f32 %v1490, %v1586
      %v1619 = vmax.f32 %v1491, %v1587
      %v1620 = vmax.f32 %v1492, %v1588
      %v1621 = vmax.f32 %v1493, %v1589
      %v1622 = vmax.f32 %v1494, %v1590
      %v1623 = vmax.f32 %v1495, %v1591
      %v1624 = vmax.f32 %v1496, %v1592
      %v1625 = vmax.f32 %v1497, %v1593
      %v1626 = vmax.f32 %v1498, %v1594
      %v1627 = vmax.f32 %v1499, %v1595
      %v1628 = vmax.f32 %v1500, %v1596
      %v1629 = vmax.f32 %v1501, %v1597
      %v1630 = vmax.f32 %v1502, %v1598
      %v1631 = vmax.f32 %v1503, %v1599
      %v1632 = vmax.f32 %v1504, %v1600
      %v1633 = vmax.f32 %v1505, %v1601
      %v1634 = vmax.f32 %v1506, %v1602
      %v1635 = vmax.f32 %v1507, %v1603
      %v1636 = vmax.f32 %v1508, %v1604
      %v1637 = vmax.f32 %v1509, %v1605
      %v1638 = vmax.f32 %v1510, %v1606
      %v1639 = vmax.f32 %v1511, %v1607
      %v1640 = vmax.f32 %v1512, %v1608
      %v1641 = vmax.f32 %v1513, %v1609
      %v1642 = vmax.f32 %v1514, %v1610
      %v1643 = vmax.f32 %v1515, %v1611
      %v1644 = vrot.slane %v1612, 6
      %v1645 = vrot.slane %v1613, 6
      %v1646 = vrot.slane %v1614, 6
      %v1647 = vrot.slane %v1615, 6
      %v1648 = vrot.slane %v1616, 6
      %v1649 = vrot.slane %v1617, 6
      %v1650 = vrot.slane %v1618, 6
      %v1651 = vrot.slane %v1619, 6
      %v1652 = vrot.slane %v1620, 6
      %v1653 = vrot.slane %v1621, 6
      %v1654 = vrot.slane %v1622, 6
      %v1655 = vrot.slane %v1623, 6
      %v1656 = vrot.slane %v1624, 6
      %v1657 = vrot.slane %v1625, 6
      %v1658 = vrot.slane %v1626, 6
      %v1659 = vrot.slane %v1627, 6
      %v1660 = vrot.slane %v1628, 6
      %v1661 = vrot.slane %v1629, 6
      %v1662 = vrot.slane %v1630, 6
      %v1663 = vrot.slane %v1631, 6
      %v1664 = vrot.slane %v1632, 6
      %v1665 = vrot.slane %v1633, 6
      %v1666 = vrot.slane %v1634, 6
      %v1667 = vrot.slane %v1635, 6
      %v1668 = vrot.slane %v1636, 6
      %v1669 = vrot.slane %v1637, 6
      %v1670 = vrot.slane %v1638, 6
      %v1671 = vrot.slane %v1639, 6
      %v1672 = vrot.slane %v1640, 6
      %v1673 = vrot.slane %v1641, 6
      %v1674 = vrot.slane %v1642, 6
      %v1675 = vrot.slane %v1643, 6
      %vm1676 = vcmp.lt.s32.totalorder %v254, 2
      %v1677 = vsel %vm1676, %v1674, %v1675
      %v1678 = vsel %vm1676, %v1673, %v1674
      %v1679 = vsel %vm1676, %v1672, %v1673
      %v1680 = vsel %vm1676, %v1671, %v1672
      %v1681 = vsel %vm1676, %v1670, %v1671
      %v1682 = vsel %vm1676, %v1669, %v1670
      %v1683 = vsel %vm1676, %v1668, %v1669
      %v1684 = vsel %vm1676, %v1667, %v1668
      %v1685 = vsel %vm1676, %v1666, %v1667
      %v1686 = vsel %vm1676, %v1665, %v1666
      %v1687 = vsel %vm1676, %v1664, %v1665
      %v1688 = vsel %vm1676, %v1663, %v1664
      %v1689 = vsel %vm1676, %v1662, %v1663
      %v1690 = vsel %vm1676, %v1661, %v1662
      %v1691 = vsel %vm1676, %v1660, %v1661
      %v1692 = vsel %vm1676, %v1659, %v1660
      %v1693 = vsel %vm1676, %v1658, %v1659
      %v1694 = vsel %vm1676, %v1657, %v1658
      %v1695 = vsel %vm1676, %v1656, %v1657
      %v1696 = vsel %vm1676, %v1655, %v1656
      %v1697 = vsel %vm1676, %v1654, %v1655
      %v1698 = vsel %vm1676, %v1653, %v1654
      %v1699 = vsel %vm1676, %v1652, %v1653
      %v1700 = vsel %vm1676, %v1651, %v1652
      %v1701 = vsel %vm1676, %v1650, %v1651
      %v1702 = vsel %vm1676, %v1649, %v1650
      %v1703 = vsel %vm1676, %v1648, %v1649
      %v1704 = vsel %vm1676, %v1647, %v1648
      %v1705 = vsel %vm1676, %v1646, %v1647
      %v1706 = vsel %vm1676, %v1645, %v1646
      %v1707 = vsel %vm1676, %v1644, %v1645
      %v1708 = vsel %vm1676, %v1675, %v1644
      %v1709 = vsel %vm446, 1, 0
      %v1710 = vsel %vm447, 1, 0
      %v1711 = vsel %vm448, 1, 0
      %v1712 = vsel %vm449, 1, 0
      %v1713 = vsel %vm450, 1, 0
      %v1714 = vsel %vm451, 1, 0
      %v1715 = vsel %vm452, 1, 0
      %v1716 = vsel %vm453, 1, 0
      %v1717 = vsel %vm454, 1, 0
      %v1718 = vsel %vm455, 1, 0
      %v1719 = vsel %vm456, 1, 0
      %v1720 = vsel %vm457, 1, 0
      %v1721 = vsel %vm458, 1, 0
      %v1722 = vsel %vm459, 1, 0
      %v1723 = vsel %vm460, 1, 0
      %v1724 = vsel %vm461, 1, 0
      %v1725 = vsel %vm462, 1, 0
      %v1726 = vsel %vm463, 1, 0
      %v1727 = vsel %vm464, 1, 0
      %v1728 = vsel %vm465, 1, 0
      %v1729 = vsel %vm466, 1, 0
      %v1730 = vsel %vm467, 1, 0
      %v1731 = vsel %vm468, 1, 0
      %v1732 = vsel %vm469, 1, 0
      %v1733 = vsel %vm470, 1, 0
      %v1734 = vsel %vm471, 1, 0
      %v1735 = vsel %vm472, 1, 0
      %v1736 = vsel %vm473, 1, 0
      %v1737 = vsel %vm474, 1, 0
      %v1738 = vsel %vm475, 1, 0
      %v1739 = vsel %vm476, 1, 0
      %v1740 = vsel %vm477, 1, 0
      %1741 = vset.pattern.permute.xlu0 0
      %1742 = vperm.xlu0 %1741, %v1709
      %v1743 = vpop.permute.xlu0 %1742
      %1744 = vset.pattern.permute.xlu0 0
      %1745 = vperm.xlu0 %1744, %v1710
      %v1746 = vpop.permute.xlu0 %1745
      %1747 = vset.pattern.permute.xlu0 0
      %1748 = vperm.xlu0 %1747, %v1711
      %v1749 = vpop.permute.xlu0 %1748
      %1750 = vset.pattern.permute.xlu0 0
      %1751 = vperm.xlu0 %1750, %v1712
      %v1752 = vpop.permute.xlu0 %1751
      %1753 = vset.pattern.permute.xlu0 0
      %1754 = vperm.xlu0 %1753, %v1713
      %v1755 = vpop.permute.xlu0 %1754
      %1756 = vset.pattern.permute.xlu0 0
      %1757 = vperm.xlu0 %1756, %v1714
      %v1758 = vpop.permute.xlu0 %1757
      %1759 = vset.pattern.permute.xlu0 0
      %1760 = vperm.xlu0 %1759, %v1715
      %v1761 = vpop.permute.xlu0 %1760
      %1762 = vset.pattern.permute.xlu0 0
      %1763 = vperm.xlu0 %1762, %v1716
      %v1764 = vpop.permute.xlu0 %1763
      %1765 = vset.pattern.permute.xlu0 0
      %1766 = vperm.xlu0 %1765, %v1717
      %v1767 = vpop.permute.xlu0 %1766
      %1768 = vset.pattern.permute.xlu0 0
      %1769 = vperm.xlu0 %1768, %v1718
      %v1770 = vpop.permute.xlu0 %1769
      %1771 = vset.pattern.permute.xlu0 0
      %1772 = vperm.xlu0 %1771, %v1719
      %v1773 = vpop.permute.xlu0 %1772
      %1774 = vset.pattern.permute.xlu0 0
      %1775 = vperm.xlu0 %1774, %v1720
      %v1776 = vpop.permute.xlu0 %1775
      %1777 = vset.pattern.permute.xlu0 0
      %1778 = vperm.xlu0 %1777, %v1721
      %v1779 = vpop.permute.xlu0 %1778
      %1780 = vset.pattern.permute.xlu0 0
      %1781 = vperm.xlu0 %1780, %v1722
      %v1782 = vpop.permute.xlu0 %1781
      %1783 = vset.pattern.permute.xlu0 0
      %1784 = vperm.xlu0 %1783, %v1723
      %v1785 = vpop.permute.xlu0 %1784
      %1786 = vset.pattern.permute.xlu0 0
      %1787 = vperm.xlu0 %1786, %v1724
      %v1788 = vpop.permute.xlu0 %1787
      %1789 = vset.pattern.permute.xlu0 0
      %1790 = vperm.xlu0 %1789, %v1725
      %v1791 = vpop.permute.xlu0 %1790
      %1792 = vset.pattern.permute.xlu0 0
      %1793 = vperm.xlu0 %1792, %v1726
      %v1794 = vpop.permute.xlu0 %1793
      %1795 = vset.pattern.permute.xlu0 0
      %1796 = vperm.xlu0 %1795, %v1727
      %v1797 = vpop.permute.xlu0 %1796
      %1798 = vset.pattern.permute.xlu0 0
      %1799 = vperm.xlu0 %1798, %v1728
      %v1800 = vpop.permute.xlu0 %1799
      %1801 = vset.pattern.permute.xlu0 0
      %1802 = vperm.xlu0 %1801, %v1729
      %v1803 = vpop.permute.xlu0 %1802
      %1804 = vset.pattern.permute.xlu0 0
      %1805 = vperm.xlu0 %1804, %v1730
      %v1806 = vpop.permute.xlu0 %1805
      %1807 = vset.pattern.permute.xlu0 0
      %1808 = vperm.xlu0 %1807, %v1731
      %v1809 = vpop.permute.xlu0 %1808
      %1810 = vset.pattern.permute.xlu0 0
      %1811 = vperm.xlu0 %1810, %v1732
      %v1812 = vpop.permute.xlu0 %1811
      %1813 = vset.pattern.permute.xlu0 0
      %1814 = vperm.xlu0 %1813, %v1733
      %v1815 = vpop.permute.xlu0 %1814
      %1816 = vset.pattern.permute.xlu0 0
      %1817 = vperm.xlu0 %1816, %v1734
      %v1818 = vpop.permute.xlu0 %1817
      %1819 = vset.pattern.permute.xlu0 0
      %1820 = vperm.xlu0 %1819, %v1735
      %v1821 = vpop.permute.xlu0 %1820
      %1822 = vset.pattern.permute.xlu0 0
      %1823 = vperm.xlu0 %1822, %v1736
      %v1824 = vpop.permute.xlu0 %1823
      %1825 = vset.pattern.permute.xlu0 0
      %1826 = vperm.xlu0 %1825, %v1737
      %v1827 = vpop.permute.xlu0 %1826
      %1828 = vset.pattern.permute.xlu0 0
      %1829 = vperm.xlu0 %1828, %v1738
      %v1830 = vpop.permute.xlu0 %1829
      %1831 = vset.pattern.permute.xlu0 0
      %1832 = vperm.xlu0 %1831, %v1739
      %v1833 = vpop.permute.xlu0 %1832
      %1834 = vset.pattern.permute.xlu0 0
      %1835 = vperm.xlu0 %1834, %v1740
      %v1836 = vpop.permute.xlu0 %1835
      %vm1837 = vcmp.eq.s32.totalorder %v1743, 1
      %vm1838 = vcmp.eq.s32.totalorder %v1746, 1
      %vm1839 = vcmp.eq.s32.totalorder %v1749, 1
      %vm1840 = vcmp.eq.s32.totalorder %v1752, 1
      %vm1841 = vcmp.eq.s32.totalorder %v1755, 1
      %vm1842 = vcmp.eq.s32.totalorder %v1758, 1
      %vm1843 = vcmp.eq.s32.totalorder %v1761, 1
      %vm1844 = vcmp.eq.s32.totalorder %v1764, 1
      %vm1845 = vcmp.eq.s32.totalorder %v1767, 1
      %vm1846 = vcmp.eq.s32.totalorder %v1770, 1
      %vm1847 = vcmp.eq.s32.totalorder %v1773, 1
      %vm1848 = vcmp.eq.s32.totalorder %v1776, 1
      %vm1849 = vcmp.eq.s32.totalorder %v1779, 1
      %vm1850 = vcmp.eq.s32.totalorder %v1782, 1
      %vm1851 = vcmp.eq.s32.totalorder %v1785, 1
      %vm1852 = vcmp.eq.s32.totalorder %v1788, 1
      %vm1853 = vcmp.eq.s32.totalorder %v1791, 1
      %vm1854 = vcmp.eq.s32.totalorder %v1794, 1
      %vm1855 = vcmp.eq.s32.totalorder %v1797, 1
      %vm1856 = vcmp.eq.s32.totalorder %v1800, 1
      %vm1857 = vcmp.eq.s32.totalorder %v1803, 1
      %vm1858 = vcmp.eq.s32.totalorder %v1806, 1
      %vm1859 = vcmp.eq.s32.totalorder %v1809, 1
      %vm1860 = vcmp.eq.s32.totalorder %v1812, 1
      %vm1861 = vcmp.eq.s32.totalorder %v1815, 1
      %vm1862 = vcmp.eq.s32.totalorder %v1818, 1
      %vm1863 = vcmp.eq.s32.totalorder %v1821, 1
      %vm1864 = vcmp.eq.s32.totalorder %v1824, 1
      %vm1865 = vcmp.eq.s32.totalorder %v1827, 1
      %vm1866 = vcmp.eq.s32.totalorder %v1830, 1
      %vm1867 = vcmp.eq.s32.totalorder %v1833, 1
      %vm1868 = vcmp.eq.s32.totalorder %v1836, 1
      %v1869 = vsel %vm1837, %v1708, -inf
      %v1870 = vsel %vm1838, %v1707, -inf
      %v1871 = vsel %vm1839, %v1706, -inf
      %v1872 = vsel %vm1840, %v1705, -inf
      %v1873 = vsel %vm1841, %v1704, -inf
      %v1874 = vsel %vm1842, %v1703, -inf
      %v1875 = vsel %vm1843, %v1702, -inf
      %v1876 = vsel %vm1844, %v1701, -inf
      %v1877 = vsel %vm1845, %v1700, -inf
      %v1878 = vsel %vm1846, %v1699, -inf
      %v1879 = vsel %vm1847, %v1698, -inf
      %v1880 = vsel %vm1848, %v1697, -inf
      %v1881 = vsel %vm1849, %v1696, -inf
      %v1882 = vsel %vm1850, %v1695, -inf
      %v1883 = vsel %vm1851, %v1694, -inf
      %v1884 = vsel %vm1852, %v1693, -inf
      %v1885 = vsel %vm1853, %v1692, -inf
      %v1886 = vsel %vm1854, %v1691, -inf
      %v1887 = vsel %vm1855, %v1690, -inf
      %v1888 = vsel %vm1856, %v1689, -inf
      %v1889 = vsel %vm1857, %v1688, -inf
      %v1890 = vsel %vm1858, %v1687, -inf
      %v1891 = vsel %vm1859, %v1686, -inf
      %v1892 = vsel %vm1860, %v1685, -inf
      %v1893 = vsel %vm1861, %v1684, -inf
      %v1894 = vsel %vm1862, %v1683, -inf
      %v1895 = vsel %vm1863, %v1682, -inf
      %v1896 = vsel %vm1864, %v1681, -inf
      %v1897 = vsel %vm1865, %v1680, -inf
      %v1898 = vsel %vm1866, %v1679, -inf
      %v1899 = vsel %vm1867, %v1678, -inf
      %v1900 = vsel %vm1868, %v1677, -inf
      %v1901 = vmax.f32 %v1612, %v1869
      %v1902 = vmax.f32 %v1613, %v1870
      %v1903 = vmax.f32 %v1614, %v1871
      %v1904 = vmax.f32 %v1615, %v1872
      %v1905 = vmax.f32 %v1616, %v1873
      %v1906 = vmax.f32 %v1617, %v1874
      %v1907 = vmax.f32 %v1618, %v1875
      %v1908 = vmax.f32 %v1619, %v1876
      %v1909 = vmax.f32 %v1620, %v1877
      %v1910 = vmax.f32 %v1621, %v1878
      %v1911 = vmax.f32 %v1622, %v1879
      %v1912 = vmax.f32 %v1623, %v1880
      %v1913 = vmax.f32 %v1624, %v1881
      %v1914 = vmax.f32 %v1625, %v1882
      %v1915 = vmax.f32 %v1626, %v1883
      %v1916 = vmax.f32 %v1627, %v1884
      %v1917 = vmax.f32 %v1628, %v1885
      %v1918 = vmax.f32 %v1629, %v1886
      %v1919 = vmax.f32 %v1630, %v1887
      %v1920 = vmax.f32 %v1631, %v1888
      %v1921 = vmax.f32 %v1632, %v1889
      %v1922 = vmax.f32 %v1633, %v1890
      %v1923 = vmax.f32 %v1634, %v1891
      %v1924 = vmax.f32 %v1635, %v1892
      %v1925 = vmax.f32 %v1636, %v1893
      %v1926 = vmax.f32 %v1637, %v1894
      %v1927 = vmax.f32 %v1638, %v1895
      %v1928 = vmax.f32 %v1639, %v1896
      %v1929 = vmax.f32 %v1640, %v1897
      %v1930 = vmax.f32 %v1641, %v1898
      %v1931 = vmax.f32 %v1642, %v1899
      %v1932 = vmax.f32 %v1643, %v1900
      %v1933 = vrot.slane %v1612, 7
      %v1934 = vrot.slane %v1613, 7
      %v1935 = vrot.slane %v1614, 7
      %v1936 = vrot.slane %v1615, 7
      %v1937 = vrot.slane %v1616, 7
      %v1938 = vrot.slane %v1617, 7
      %v1939 = vrot.slane %v1618, 7
      %v1940 = vrot.slane %v1619, 7
      %v1941 = vrot.slane %v1620, 7
      %v1942 = vrot.slane %v1621, 7
      %v1943 = vrot.slane %v1622, 7
      %v1944 = vrot.slane %v1623, 7
      %v1945 = vrot.slane %v1624, 7
      %v1946 = vrot.slane %v1625, 7
      %v1947 = vrot.slane %v1626, 7
      %v1948 = vrot.slane %v1627, 7
      %v1949 = vrot.slane %v1628, 7
      %v1950 = vrot.slane %v1629, 7
      %v1951 = vrot.slane %v1630, 7
      %v1952 = vrot.slane %v1631, 7
      %v1953 = vrot.slane %v1632, 7
      %v1954 = vrot.slane %v1633, 7
      %v1955 = vrot.slane %v1634, 7
      %v1956 = vrot.slane %v1635, 7
      %v1957 = vrot.slane %v1636, 7
      %v1958 = vrot.slane %v1637, 7
      %v1959 = vrot.slane %v1638, 7
      %v1960 = vrot.slane %v1639, 7
      %v1961 = vrot.slane %v1640, 7
      %v1962 = vrot.slane %v1641, 7
      %v1963 = vrot.slane %v1642, 7
      %v1964 = vrot.slane %v1643, 7
      %vm1965 = vcmp.lt.s32.totalorder %v254, 1
      %v1966 = vsel %vm1965, %v1963, %v1964
      %v1967 = vsel %vm1965, %v1962, %v1963
      %v1968 = vsel %vm1965, %v1961, %v1962
      %v1969 = vsel %vm1965, %v1960, %v1961
      %v1970 = vsel %vm1965, %v1959, %v1960
      %v1971 = vsel %vm1965, %v1958, %v1959
      %v1972 = vsel %vm1965, %v1957, %v1958
      %v1973 = vsel %vm1965, %v1956, %v1957
      %v1974 = vsel %vm1965, %v1955, %v1956
      %v1975 = vsel %vm1965, %v1954, %v1955
      %v1976 = vsel %vm1965, %v1953, %v1954
      %v1977 = vsel %vm1965, %v1952, %v1953
      %v1978 = vsel %vm1965, %v1951, %v1952
      %v1979 = vsel %vm1965, %v1950, %v1951
      %v1980 = vsel %vm1965, %v1949, %v1950
      %v1981 = vsel %vm1965, %v1948, %v1949
      %v1982 = vsel %vm1965, %v1947, %v1948
      %v1983 = vsel %vm1965, %v1946, %v1947
      %v1984 = vsel %vm1965, %v1945, %v1946
      %v1985 = vsel %vm1965, %v1944, %v1945
      %v1986 = vsel %vm1965, %v1943, %v1944
      %v1987 = vsel %vm1965, %v1942, %v1943
      %v1988 = vsel %vm1965, %v1941, %v1942
      %v1989 = vsel %vm1965, %v1940, %v1941
      %v1990 = vsel %vm1965, %v1939, %v1940
      %v1991 = vsel %vm1965, %v1938, %v1939
      %v1992 = vsel %vm1965, %v1937, %v1938
      %v1993 = vsel %vm1965, %v1936, %v1937
      %v1994 = vsel %vm1965, %v1935, %v1936
      %v1995 = vsel %vm1965, %v1934, %v1935
      %v1996 = vsel %vm1965, %v1933, %v1934
      %v1997 = vsel %vm1965, %v1964, %v1933
      %v1998 = vsel %vm478, 1, 0
      %v1999 = vsel %vm479, 1, 0
      %v2000 = vsel %vm480, 1, 0
      %v2001 = vsel %vm481, 1, 0
      %v2002 = vsel %vm482, 1, 0
      %v2003 = vsel %vm483, 1, 0
      %v2004 = vsel %vm484, 1, 0
      %v2005 = vsel %vm485, 1, 0
      %v2006 = vsel %vm486, 1, 0
      %v2007 = vsel %vm487, 1, 0
      %v2008 = vsel %vm488, 1, 0
      %v2009 = vsel %vm489, 1, 0
      %v2010 = vsel %vm490, 1, 0
      %v2011 = vsel %vm491, 1, 0
      %v2012 = vsel %vm492, 1, 0
      %v2013 = vsel %vm493, 1, 0
      %v2014 = vsel %vm494, 1, 0
      %v2015 = vsel %vm495, 1, 0
      %v2016 = vsel %vm496, 1, 0
      %v2017 = vsel %vm497, 1, 0
      %v2018 = vsel %vm498, 1, 0
      %v2019 = vsel %vm499, 1, 0
      %v2020 = vsel %vm500, 1, 0
      %v2021 = vsel %vm501, 1, 0
      %v2022 = vsel %vm502, 1, 0
      %v2023 = vsel %vm503, 1, 0
      %v2024 = vsel %vm504, 1, 0
      %v2025 = vsel %vm505, 1, 0
      %v2026 = vsel %vm506, 1, 0
      %v2027 = vsel %vm507, 1, 0
      %v2028 = vsel %vm508, 1, 0
      %v2029 = vsel %vm509, 1, 0
      %2030 = vset.pattern.permute.xlu0 0
      %2031 = vperm.xlu0 %2030, %v1998
      %v2032 = vpop.permute.xlu0 %2031
      %2033 = vset.pattern.permute.xlu0 0
      %2034 = vperm.xlu0 %2033, %v1999
      %v2035 = vpop.permute.xlu0 %2034
      %2036 = vset.pattern.permute.xlu0 0
      %2037 = vperm.xlu0 %2036, %v2000
      %v2038 = vpop.permute.xlu0 %2037
      %2039 = vset.pattern.permute.xlu0 0
      %2040 = vperm.xlu0 %2039, %v2001
      %v2041 = vpop.permute.xlu0 %2040
      %2042 = vset.pattern.permute.xlu0 0
      %2043 = vperm.xlu0 %2042, %v2002
      %v2044 = vpop.permute.xlu0 %2043
      %2045 = vset.pattern.permute.xlu0 0
      %2046 = vperm.xlu0 %2045, %v2003
      %v2047 = vpop.permute.xlu0 %2046
      %2048 = vset.pattern.permute.xlu0 0
      %2049 = vperm.xlu0 %2048, %v2004
      %v2050 = vpop.permute.xlu0 %2049
      %2051 = vset.pattern.permute.xlu0 0
      %2052 = vperm.xlu0 %2051, %v2005
      %v2053 = vpop.permute.xlu0 %2052
      %2054 = vset.pattern.permute.xlu0 0
      %2055 = vperm.xlu0 %2054, %v2006
      %v2056 = vpop.permute.xlu0 %2055
      %2057 = vset.pattern.permute.xlu0 0
      %2058 = vperm.xlu0 %2057, %v2007
      %v2059 = vpop.permute.xlu0 %2058
      %2060 = vset.pattern.permute.xlu0 0
      %2061 = vperm.xlu0 %2060, %v2008
      %v2062 = vpop.permute.xlu0 %2061
      %2063 = vset.pattern.permute.xlu0 0
      %2064 = vperm.xlu0 %2063, %v2009
      %v2065 = vpop.permute.xlu0 %2064
      %2066 = vset.pattern.permute.xlu0 0
      %2067 = vperm.xlu0 %2066, %v2010
      %v2068 = vpop.permute.xlu0 %2067
      %2069 = vset.pattern.permute.xlu0 0
      %2070 = vperm.xlu0 %2069, %v2011
      %v2071 = vpop.permute.xlu0 %2070
      %2072 = vset.pattern.permute.xlu0 0
      %2073 = vperm.xlu0 %2072, %v2012
      %v2074 = vpop.permute.xlu0 %2073
      %2075 = vset.pattern.permute.xlu0 0
      %2076 = vperm.xlu0 %2075, %v2013
      %v2077 = vpop.permute.xlu0 %2076
      %2078 = vset.pattern.permute.xlu0 0
      %2079 = vperm.xlu0 %2078, %v2014
      %v2080 = vpop.permute.xlu0 %2079
      %2081 = vset.pattern.permute.xlu0 0
      %2082 = vperm.xlu0 %2081, %v2015
      %v2083 = vpop.permute.xlu0 %2082
      %2084 = vset.pattern.permute.xlu0 0
      %2085 = vperm.xlu0 %2084, %v2016
      %v2086 = vpop.permute.xlu0 %2085
      %2087 = vset.pattern.permute.xlu0 0
      %2088 = vperm.xlu0 %2087, %v2017
      %v2089 = vpop.permute.xlu0 %2088
      %2090 = vset.pattern.permute.xlu0 0
      %2091 = vperm.xlu0 %2090, %v2018
      %v2092 = vpop.permute.xlu0 %2091
      %2093 = vset.pattern.permute.xlu0 0
      %2094 = vperm.xlu0 %2093, %v2019
      %v2095 = vpop.permute.xlu0 %2094
      %2096 = vset.pattern.permute.xlu0 0
      %2097 = vperm.xlu0 %2096, %v2020
      %v2098 = vpop.permute.xlu0 %2097
      %2099 = vset.pattern.permute.xlu0 0
      %2100 = vperm.xlu0 %2099, %v2021
      %v2101 = vpop.permute.xlu0 %2100
      %2102 = vset.pattern.permute.xlu0 0
      %2103 = vperm.xlu0 %2102, %v2022
      %v2104 = vpop.permute.xlu0 %2103
      %2105 = vset.pattern.permute.xlu0 0
      %2106 = vperm.xlu0 %2105, %v2023
      %v2107 = vpop.permute.xlu0 %2106
      %2108 = vset.pattern.permute.xlu0 0
      %2109 = vperm.xlu0 %2108, %v2024
      %v2110 = vpop.permute.xlu0 %2109
      %2111 = vset.pattern.permute.xlu0 0
      %2112 = vperm.xlu0 %2111, %v2025
      %v2113 = vpop.permute.xlu0 %2112
      %2114 = vset.pattern.permute.xlu0 0
      %2115 = vperm.xlu0 %2114, %v2026
      %v2116 = vpop.permute.xlu0 %2115
      %2117 = vset.pattern.permute.xlu0 0
      %2118 = vperm.xlu0 %2117, %v2027
      %v2119 = vpop.permute.xlu0 %2118
      %2120 = vset.pattern.permute.xlu0 0
      %2121 = vperm.xlu0 %2120, %v2028
      %v2122 = vpop.permute.xlu0 %2121
      %2123 = vset.pattern.permute.xlu0 0
      %2124 = vperm.xlu0 %2123, %v2029
      %v2125 = vpop.permute.xlu0 %2124
      %vm2126 = vcmp.eq.s32.totalorder %v2032, 1
      %vm2127 = vcmp.eq.s32.totalorder %v2035, 1
      %vm2128 = vcmp.eq.s32.totalorder %v2038, 1
      %vm2129 = vcmp.eq.s32.totalorder %v2041, 1
      %vm2130 = vcmp.eq.s32.totalorder %v2044, 1
      %vm2131 = vcmp.eq.s32.totalorder %v2047, 1
      %vm2132 = vcmp.eq.s32.totalorder %v2050, 1
      %vm2133 = vcmp.eq.s32.totalorder %v2053, 1
      %vm2134 = vcmp.eq.s32.totalorder %v2056, 1
      %vm2135 = vcmp.eq.s32.totalorder %v2059, 1
      %vm2136 = vcmp.eq.s32.totalorder %v2062, 1
      %vm2137 = vcmp.eq.s32.totalorder %v2065, 1
      %vm2138 = vcmp.eq.s32.totalorder %v2068, 1
      %vm2139 = vcmp.eq.s32.totalorder %v2071, 1
      %vm2140 = vcmp.eq.s32.totalorder %v2074, 1
      %vm2141 = vcmp.eq.s32.totalorder %v2077, 1
      %vm2142 = vcmp.eq.s32.totalorder %v2080, 1
      %vm2143 = vcmp.eq.s32.totalorder %v2083, 1
      %vm2144 = vcmp.eq.s32.totalorder %v2086, 1
      %vm2145 = vcmp.eq.s32.totalorder %v2089, 1
      %vm2146 = vcmp.eq.s32.totalorder %v2092, 1
      %vm2147 = vcmp.eq.s32.totalorder %v2095, 1
      %vm2148 = vcmp.eq.s32.totalorder %v2098, 1
      %vm2149 = vcmp.eq.s32.totalorder %v2101, 1
      %vm2150 = vcmp.eq.s32.totalorder %v2104, 1
      %vm2151 = vcmp.eq.s32.totalorder %v2107, 1
      %vm2152 = vcmp.eq.s32.totalorder %v2110, 1
      %vm2153 = vcmp.eq.s32.totalorder %v2113, 1
      %vm2154 = vcmp.eq.s32.totalorder %v2116, 1
      %vm2155 = vcmp.eq.s32.totalorder %v2119, 1
      %vm2156 = vcmp.eq.s32.totalorder %v2122, 1
      %vm2157 = vcmp.eq.s32.totalorder %v2125, 1
      %v2158 = vsel %vm2126, %v1997, -inf
      %v2159 = vsel %vm2127, %v1996, -inf
      %v2160 = vsel %vm2128, %v1995, -inf
      %v2161 = vsel %vm2129, %v1994, -inf
      %v2162 = vsel %vm2130, %v1993, -inf
      %v2163 = vsel %vm2131, %v1992, -inf
      %v2164 = vsel %vm2132, %v1991, -inf
      %v2165 = vsel %vm2133, %v1990, -inf
      %v2166 = vsel %vm2134, %v1989, -inf
      %v2167 = vsel %vm2135, %v1988, -inf
      %v2168 = vsel %vm2136, %v1987, -inf
      %v2169 = vsel %vm2137, %v1986, -inf
      %v2170 = vsel %vm2138, %v1985, -inf
      %v2171 = vsel %vm2139, %v1984, -inf
      %v2172 = vsel %vm2140, %v1983, -inf
      %v2173 = vsel %vm2141, %v1982, -inf
      %v2174 = vsel %vm2142, %v1981, -inf
      %v2175 = vsel %vm2143, %v1980, -inf
      %v2176 = vsel %vm2144, %v1979, -inf
      %v2177 = vsel %vm2145, %v1978, -inf
      %v2178 = vsel %vm2146, %v1977, -inf
      %v2179 = vsel %vm2147, %v1976, -inf
      %v2180 = vsel %vm2148, %v1975, -inf
      %v2181 = vsel %vm2149, %v1974, -inf
      %v2182 = vsel %vm2150, %v1973, -inf
      %v2183 = vsel %vm2151, %v1972, -inf
      %v2184 = vsel %vm2152, %v1971, -inf
      %v2185 = vsel %vm2153, %v1970, -inf
      %v2186 = vsel %vm2154, %v1969, -inf
      %v2187 = vsel %vm2155, %v1968, -inf
      %v2188 = vsel %vm2156, %v1967, -inf
      %v2189 = vsel %vm2157, %v1966, -inf
      %v2190 = vmax.f32 %v1901, %v2158
      %v2191 = vmax.f32 %v1902, %v2159
      %v2192 = vmax.f32 %v1903, %v2160
      %v2193 = vmax.f32 %v1904, %v2161
      %v2194 = vmax.f32 %v1905, %v2162
      %v2195 = vmax.f32 %v1906, %v2163
      %v2196 = vmax.f32 %v1907, %v2164
      %v2197 = vmax.f32 %v1908, %v2165
      %v2198 = vmax.f32 %v1909, %v2166
      %v2199 = vmax.f32 %v1910, %v2167
      %v2200 = vmax.f32 %v1911, %v2168
      %v2201 = vmax.f32 %v1912, %v2169
      %v2202 = vmax.f32 %v1913, %v2170
      %v2203 = vmax.f32 %v1914, %v2171
      %v2204 = vmax.f32 %v1915, %v2172
      %v2205 = vmax.f32 %v1916, %v2173
      %v2206 = vmax.f32 %v1917, %v2174
      %v2207 = vmax.f32 %v1918, %v2175
      %v2208 = vmax.f32 %v1919, %v2176
      %v2209 = vmax.f32 %v1920, %v2177
      %v2210 = vmax.f32 %v1921, %v2178
      %v2211 = vmax.f32 %v1922, %v2179
      %v2212 = vmax.f32 %v1923, %v2180
      %v2213 = vmax.f32 %v1924, %v2181
      %v2214 = vmax.f32 %v1925, %v2182
      %v2215 = vmax.f32 %v1926, %v2183
      %v2216 = vmax.f32 %v1927, %v2184
      %v2217 = vmax.f32 %v1928, %v2185
      %v2218 = vmax.f32 %v1929, %v2186
      %v2219 = vmax.f32 %v1930, %v2187
      %v2220 = vmax.f32 %v1931, %v2188
      %v2221 = vmax.f32 %v1932, %v2189
      %v2222 = vrot.slane %v1612, 1
      %v2223 = vrot.slane %v1613, 1
      %v2224 = vrot.slane %v1614, 1
      %v2225 = vrot.slane %v1615, 1
      %v2226 = vrot.slane %v1616, 1
      %v2227 = vrot.slane %v1617, 1
      %v2228 = vrot.slane %v1618, 1
      %v2229 = vrot.slane %v1619, 1
      %v2230 = vrot.slane %v1620, 1
      %v2231 = vrot.slane %v1621, 1
      %v2232 = vrot.slane %v1622, 1
      %v2233 = vrot.slane %v1623, 1
      %v2234 = vrot.slane %v1624, 1
      %v2235 = vrot.slane %v1625, 1
      %v2236 = vrot.slane %v1626, 1
      %v2237 = vrot.slane %v1627, 1
      %v2238 = vrot.slane %v1628, 1
      %v2239 = vrot.slane %v1629, 1
      %v2240 = vrot.slane %v1630, 1
      %v2241 = vrot.slane %v1631, 1
      %v2242 = vrot.slane %v1632, 1
      %v2243 = vrot.slane %v1633, 1
      %v2244 = vrot.slane %v1634, 1
      %v2245 = vrot.slane %v1635, 1
      %v2246 = vrot.slane %v1636, 1
      %v2247 = vrot.slane %v1637, 1
      %v2248 = vrot.slane %v1638, 1
      %v2249 = vrot.slane %v1639, 1
      %v2250 = vrot.slane %v1640, 1
      %v2251 = vrot.slane %v1641, 1
      %v2252 = vrot.slane %v1642, 1
      %v2253 = vrot.slane %v1643, 1
      %vm2254 = vcmp.lt.s32.totalorder %v254, 7
      %v2255 = vsel %vm2254, %v2252, %v2253
      %v2256 = vsel %vm2254, %v2251, %v2252
      %v2257 = vsel %vm2254, %v2250, %v2251
      %v2258 = vsel %vm2254, %v2249, %v2250
      %v2259 = vsel %vm2254, %v2248, %v2249
      %v2260 = vsel %vm2254, %v2247, %v2248
      %v2261 = vsel %vm2254, %v2246, %v2247
      %v2262 = vsel %vm2254, %v2245, %v2246
      %v2263 = vsel %vm2254, %v2244, %v2245
      %v2264 = vsel %vm2254, %v2243, %v2244
      %v2265 = vsel %vm2254, %v2242, %v2243
      %v2266 = vsel %vm2254, %v2241, %v2242
      %v2267 = vsel %vm2254, %v2240, %v2241
      %v2268 = vsel %vm2254, %v2239, %v2240
      %v2269 = vsel %vm2254, %v2238, %v2239
      %v2270 = vsel %vm2254, %v2237, %v2238
      %v2271 = vsel %vm2254, %v2236, %v2237
      %v2272 = vsel %vm2254, %v2235, %v2236
      %v2273 = vsel %vm2254, %v2234, %v2235
      %v2274 = vsel %vm2254, %v2233, %v2234
      %v2275 = vsel %vm2254, %v2232, %v2233
      %v2276 = vsel %vm2254, %v2231, %v2232
      %v2277 = vsel %vm2254, %v2230, %v2231
      %v2278 = vsel %vm2254, %v2229, %v2230
      %v2279 = vsel %vm2254, %v2228, %v2229
      %v2280 = vsel %vm2254, %v2227, %v2228
      %v2281 = vsel %vm2254, %v2226, %v2227
      %v2282 = vsel %vm2254, %v2225, %v2226
      %v2283 = vsel %vm2254, %v2224, %v2225
      %v2284 = vsel %vm2254, %v2223, %v2224
      %v2285 = vsel %vm2254, %v2222, %v2223
      %v2286 = vsel %vm2254, %v2253, %v2222
      %v2287 = vsel %vm510, 1, 0
      %v2288 = vsel %vm511, 1, 0
      %v2289 = vsel %vm512, 1, 0
      %v2290 = vsel %vm513, 1, 0
      %v2291 = vsel %vm514, 1, 0
      %v2292 = vsel %vm515, 1, 0
      %v2293 = vsel %vm516, 1, 0
      %v2294 = vsel %vm517, 1, 0
      %v2295 = vsel %vm518, 1, 0
      %v2296 = vsel %vm519, 1, 0
      %v2297 = vsel %vm520, 1, 0
      %v2298 = vsel %vm521, 1, 0
      %v2299 = vsel %vm522, 1, 0
      %v2300 = vsel %vm523, 1, 0
      %v2301 = vsel %vm524, 1, 0
      %v2302 = vsel %vm525, 1, 0
      %v2303 = vsel %vm526, 1, 0
      %v2304 = vsel %vm527, 1, 0
      %v2305 = vsel %vm528, 1, 0
      %v2306 = vsel %vm529, 1, 0
      %v2307 = vsel %vm530, 1, 0
      %v2308 = vsel %vm531, 1, 0
      %v2309 = vsel %vm532, 1, 0
      %v2310 = vsel %vm533, 1, 0
      %v2311 = vsel %vm534, 1, 0
      %v2312 = vsel %vm535, 1, 0
      %v2313 = vsel %vm536, 1, 0
      %v2314 = vsel %vm537, 1, 0
      %v2315 = vsel %vm538, 1, 0
      %v2316 = vsel %vm539, 1, 0
      %v2317 = vsel %vm540, 1, 0
      %v2318 = vsel %vm541, 1, 0
      %2319 = vset.pattern.permute.xlu0 0
      %2320 = vperm.xlu0 %2319, %v2287
      %v2321 = vpop.permute.xlu0 %2320
      %2322 = vset.pattern.permute.xlu0 0
      %2323 = vperm.xlu0 %2322, %v2288
      %v2324 = vpop.permute.xlu0 %2323
      %2325 = vset.pattern.permute.xlu0 0
      %2326 = vperm.xlu0 %2325, %v2289
      %v2327 = vpop.permute.xlu0 %2326
      %2328 = vset.pattern.permute.xlu0 0
      %2329 = vperm.xlu0 %2328, %v2290
      %v2330 = vpop.permute.xlu0 %2329
      %2331 = vset.pattern.permute.xlu0 0
      %2332 = vperm.xlu0 %2331, %v2291
      %v2333 = vpop.permute.xlu0 %2332
      %2334 = vset.pattern.permute.xlu0 0
      %2335 = vperm.xlu0 %2334, %v2292
      %v2336 = vpop.permute.xlu0 %2335
      %2337 = vset.pattern.permute.xlu0 0
      %2338 = vperm.xlu0 %2337, %v2293
      %v2339 = vpop.permute.xlu0 %2338
      %2340 = vset.pattern.permute.xlu0 0
      %2341 = vperm.xlu0 %2340, %v2294
      %v2342 = vpop.permute.xlu0 %2341
      %2343 = vset.pattern.permute.xlu0 0
      %2344 = vperm.xlu0 %2343, %v2295
      %v2345 = vpop.permute.xlu0 %2344
      %2346 = vset.pattern.permute.xlu0 0
      %2347 = vperm.xlu0 %2346, %v2296
      %v2348 = vpop.permute.xlu0 %2347
      %2349 = vset.pattern.permute.xlu0 0
      %2350 = vperm.xlu0 %2349, %v2297
      %v2351 = vpop.permute.xlu0 %2350
      %2352 = vset.pattern.permute.xlu0 0
      %2353 = vperm.xlu0 %2352, %v2298
      %v2354 = vpop.permute.xlu0 %2353
      %2355 = vset.pattern.permute.xlu0 0
      %2356 = vperm.xlu0 %2355, %v2299
      %v2357 = vpop.permute.xlu0 %2356
      %2358 = vset.pattern.permute.xlu0 0
      %2359 = vperm.xlu0 %2358, %v2300
      %v2360 = vpop.permute.xlu0 %2359
      %2361 = vset.pattern.permute.xlu0 0
      %2362 = vperm.xlu0 %2361, %v2301
      %v2363 = vpop.permute.xlu0 %2362
      %2364 = vset.pattern.permute.xlu0 0
      %2365 = vperm.xlu0 %2364, %v2302
      %v2366 = vpop.permute.xlu0 %2365
      %2367 = vset.pattern.permute.xlu0 0
      %2368 = vperm.xlu0 %2367, %v2303
      %v2369 = vpop.permute.xlu0 %2368
      %2370 = vset.pattern.permute.xlu0 0
      %2371 = vperm.xlu0 %2370, %v2304
      %v2372 = vpop.permute.xlu0 %2371
      %2373 = vset.pattern.permute.xlu0 0
      %2374 = vperm.xlu0 %2373, %v2305
      %v2375 = vpop.permute.xlu0 %2374
      %2376 = vset.pattern.permute.xlu0 0
      %2377 = vperm.xlu0 %2376, %v2306
      %v2378 = vpop.permute.xlu0 %2377
      %2379 = vset.pattern.permute.xlu0 0
      %2380 = vperm.xlu0 %2379, %v2307
      %v2381 = vpop.permute.xlu0 %2380
      %2382 = vset.pattern.permute.xlu0 0
      %2383 = vperm.xlu0 %2382, %v2308
      %v2384 = vpop.permute.xlu0 %2383
      %2385 = vset.pattern.permute.xlu0 0
      %2386 = vperm.xlu0 %2385, %v2309
      %v2387 = vpop.permute.xlu0 %2386
      %2388 = vset.pattern.permute.xlu0 0
      %2389 = vperm.xlu0 %2388, %v2310
      %v2390 = vpop.permute.xlu0 %2389
      %2391 = vset.pattern.permute.xlu0 0
      %2392 = vperm.xlu0 %2391, %v2311
      %v2393 = vpop.permute.xlu0 %2392
      %2394 = vset.pattern.permute.xlu0 0
      %2395 = vperm.xlu0 %2394, %v2312
      %v2396 = vpop.permute.xlu0 %2395
      %2397 = vset.pattern.permute.xlu0 0
      %2398 = vperm.xlu0 %2397, %v2313
      %v2399 = vpop.permute.xlu0 %2398
      %2400 = vset.pattern.permute.xlu0 0
      %2401 = vperm.xlu0 %2400, %v2314
      %v2402 = vpop.permute.xlu0 %2401
      %2403 = vset.pattern.permute.xlu0 0
      %2404 = vperm.xlu0 %2403, %v2315
      %v2405 = vpop.permute.xlu0 %2404
      %2406 = vset.pattern.permute.xlu0 0
      %2407 = vperm.xlu0 %2406, %v2316
      %v2408 = vpop.permute.xlu0 %2407
      %2409 = vset.pattern.permute.xlu0 0
      %2410 = vperm.xlu0 %2409, %v2317
      %v2411 = vpop.permute.xlu0 %2410
      %2412 = vset.pattern.permute.xlu0 0
      %2413 = vperm.xlu0 %2412, %v2318
      %v2414 = vpop.permute.xlu0 %2413
      %vm2415 = vcmp.eq.s32.totalorder %v2321, 1
      %vm2416 = vcmp.eq.s32.totalorder %v2324, 1
      %vm2417 = vcmp.eq.s32.totalorder %v2327, 1
      %vm2418 = vcmp.eq.s32.totalorder %v2330, 1
      %vm2419 = vcmp.eq.s32.totalorder %v2333, 1
      %vm2420 = vcmp.eq.s32.totalorder %v2336, 1
      %vm2421 = vcmp.eq.s32.totalorder %v2339, 1
      %vm2422 = vcmp.eq.s32.totalorder %v2342, 1
      %vm2423 = vcmp.eq.s32.totalorder %v2345, 1
      %vm2424 = vcmp.eq.s32.totalorder %v2348, 1
      %vm2425 = vcmp.eq.s32.totalorder %v2351, 1
      %vm2426 = vcmp.eq.s32.totalorder %v2354, 1
      %vm2427 = vcmp.eq.s32.totalorder %v2357, 1
      %vm2428 = vcmp.eq.s32.totalorder %v2360, 1
      %vm2429 = vcmp.eq.s32.totalorder %v2363, 1
      %vm2430 = vcmp.eq.s32.totalorder %v2366, 1
      %vm2431 = vcmp.eq.s32.totalorder %v2369, 1
      %vm2432 = vcmp.eq.s32.totalorder %v2372, 1
      %vm2433 = vcmp.eq.s32.totalorder %v2375, 1
      %vm2434 = vcmp.eq.s32.totalorder %v2378, 1
      %vm2435 = vcmp.eq.s32.totalorder %v2381, 1
      %vm2436 = vcmp.eq.s32.totalorder %v2384, 1
      %vm2437 = vcmp.eq.s32.totalorder %v2387, 1
      %vm2438 = vcmp.eq.s32.totalorder %v2390, 1
      %vm2439 = vcmp.eq.s32.totalorder %v2393, 1
      %vm2440 = vcmp.eq.s32.totalorder %v2396, 1
      %vm2441 = vcmp.eq.s32.totalorder %v2399, 1
      %vm2442 = vcmp.eq.s32.totalorder %v2402, 1
      %vm2443 = vcmp.eq.s32.totalorder %v2405, 1
      %vm2444 = vcmp.eq.s32.totalorder %v2408, 1
      %vm2445 = vcmp.eq.s32.totalorder %v2411, 1
      %vm2446 = vcmp.eq.s32.totalorder %v2414, 1
      %v2447 = vsel %vm2415, %v2285, -inf
      %v2448 = vsel %vm2416, %v2284, -inf
      %v2449 = vsel %vm2417, %v2283, -inf
      %v2450 = vsel %vm2418, %v2282, -inf
      %v2451 = vsel %vm2419, %v2281, -inf
      %v2452 = vsel %vm2420, %v2280, -inf
      %v2453 = vsel %vm2421, %v2279, -inf
      %v2454 = vsel %vm2422, %v2278, -inf
      %v2455 = vsel %vm2423, %v2277, -inf
      %v2456 = vsel %vm2424, %v2276, -inf
      %v2457 = vsel %vm2425, %v2275, -inf
      %v2458 = vsel %vm2426, %v2274, -inf
      %v2459 = vsel %vm2427, %v2273, -inf
      %v2460 = vsel %vm2428, %v2272, -inf
      %v2461 = vsel %vm2429, %v2271, -inf
      %v2462 = vsel %vm2430, %v2270, -inf
      %v2463 = vsel %vm2431, %v2269, -inf
      %v2464 = vsel %vm2432, %v2268, -inf
      %v2465 = vsel %vm2433, %v2267, -inf
      %v2466 = vsel %vm2434, %v2266, -inf
      %v2467 = vsel %vm2435, %v2265, -inf
      %v2468 = vsel %vm2436, %v2264, -inf
      %v2469 = vsel %vm2437, %v2263, -inf
      %v2470 = vsel %vm2438, %v2262, -inf
      %v2471 = vsel %vm2439, %v2261, -inf
      %v2472 = vsel %vm2440, %v2260, -inf
      %v2473 = vsel %vm2441, %v2259, -inf
      %v2474 = vsel %vm2442, %v2258, -inf
      %v2475 = vsel %vm2443, %v2257, -inf
      %v2476 = vsel %vm2444, %v2256, -inf
      %v2477 = vsel %vm2445, %v2255, -inf
      %v2478 = vsel %vm2446, %v2286, -inf
      %v2479 = vmax.f32 %v2190, %v2447
      %v2480 = vmax.f32 %v2191, %v2448
      %v2481 = vmax.f32 %v2192, %v2449
      %v2482 = vmax.f32 %v2193, %v2450
      %v2483 = vmax.f32 %v2194, %v2451
      %v2484 = vmax.f32 %v2195, %v2452
      %v2485 = vmax.f32 %v2196, %v2453
      %v2486 = vmax.f32 %v2197, %v2454
      %v2487 = vmax.f32 %v2198, %v2455
      %v2488 = vmax.f32 %v2199, %v2456
      %v2489 = vmax.f32 %v2200, %v2457
      %v2490 = vmax.f32 %v2201, %v2458
      %v2491 = vmax.f32 %v2202, %v2459
      %v2492 = vmax.f32 %v2203, %v2460
      %v2493 = vmax.f32 %v2204, %v2461
      %v2494 = vmax.f32 %v2205, %v2462
      %v2495 = vmax.f32 %v2206, %v2463
      %v2496 = vmax.f32 %v2207, %v2464
      %v2497 = vmax.f32 %v2208, %v2465
      %v2498 = vmax.f32 %v2209, %v2466
      %v2499 = vmax.f32 %v2210, %v2467
      %v2500 = vmax.f32 %v2211, %v2468
      %v2501 = vmax.f32 %v2212, %v2469
      %v2502 = vmax.f32 %v2213, %v2470
      %v2503 = vmax.f32 %v2214, %v2471
      %v2504 = vmax.f32 %v2215, %v2472
      %v2505 = vmax.f32 %v2216, %v2473
      %v2506 = vmax.f32 %v2217, %v2474
      %v2507 = vmax.f32 %v2218, %v2475
      %v2508 = vmax.f32 %v2219, %v2476
      %v2509 = vmax.f32 %v2220, %v2477
      %v2510 = vmax.f32 %v2221, %v2478
      %v2511 = vrot.slane %v1612, 2
      %v2512 = vrot.slane %v1613, 2
      %v2513 = vrot.slane %v1614, 2
      %v2514 = vrot.slane %v1615, 2
      %v2515 = vrot.slane %v1616, 2
      %v2516 = vrot.slane %v1617, 2
      %v2517 = vrot.slane %v1618, 2
      %v2518 = vrot.slane %v1619, 2
      %v2519 = vrot.slane %v1620, 2
      %v2520 = vrot.slane %v1621, 2
      %v2521 = vrot.slane %v1622, 2
      %v2522 = vrot.slane %v1623, 2
      %v2523 = vrot.slane %v1624, 2
      %v2524 = vrot.slane %v1625, 2
      %v2525 = vrot.slane %v1626, 2
      %v2526 = vrot.slane %v1627, 2
      %v2527 = vrot.slane %v1628, 2
      %v2528 = vrot.slane %v1629, 2
      %v2529 = vrot.slane %v1630, 2
      %v2530 = vrot.slane %v1631, 2
      %v2531 = vrot.slane %v1632, 2
      %v2532 = vrot.slane %v1633, 2
      %v2533 = vrot.slane %v1634, 2
      %v2534 = vrot.slane %v1635, 2
      %v2535 = vrot.slane %v1636, 2
      %v2536 = vrot.slane %v1637, 2
      %v2537 = vrot.slane %v1638, 2
      %v2538 = vrot.slane %v1639, 2
      %v2539 = vrot.slane %v1640, 2
      %v2540 = vrot.slane %v1641, 2
      %v2541 = vrot.slane %v1642, 2
      %v2542 = vrot.slane %v1643, 2
      %vm2543 = vcmp.lt.s32.totalorder %v254, 6
      %v2544 = vsel %vm2543, %v2541, %v2542
      %v2545 = vsel %vm2543, %v2540, %v2541
      %v2546 = vsel %vm2543, %v2539, %v2540
      %v2547 = vsel %vm2543, %v2538, %v2539
      %v2548 = vsel %vm2543, %v2537, %v2538
      %v2549 = vsel %vm2543, %v2536, %v2537
      %v2550 = vsel %vm2543, %v2535, %v2536
      %v2551 = vsel %vm2543, %v2534, %v2535
      %v2552 = vsel %vm2543, %v2533, %v2534
      %v2553 = vsel %vm2543, %v2532, %v2533
      %v2554 = vsel %vm2543, %v2531, %v2532
      %v2555 = vsel %vm2543, %v2530, %v2531
      %v2556 = vsel %vm2543, %v2529, %v2530
      %v2557 = vsel %vm2543, %v2528, %v2529
      %v2558 = vsel %vm2543, %v2527, %v2528
      %v2559 = vsel %vm2543, %v2526, %v2527
      %v2560 = vsel %vm2543, %v2525, %v2526
      %v2561 = vsel %vm2543, %v2524, %v2525
      %v2562 = vsel %vm2543, %v2523, %v2524
      %v2563 = vsel %vm2543, %v2522, %v2523
      %v2564 = vsel %vm2543, %v2521, %v2522
      %v2565 = vsel %vm2543, %v2520, %v2521
      %v2566 = vsel %vm2543, %v2519, %v2520
      %v2567 = vsel %vm2543, %v2518, %v2519
      %v2568 = vsel %vm2543, %v2517, %v2518
      %v2569 = vsel %vm2543, %v2516, %v2517
      %v2570 = vsel %vm2543, %v2515, %v2516
      %v2571 = vsel %vm2543, %v2514, %v2515
      %v2572 = vsel %vm2543, %v2513, %v2514
      %v2573 = vsel %vm2543, %v2512, %v2513
      %v2574 = vsel %vm2543, %v2511, %v2512
      %v2575 = vsel %vm2543, %v2542, %v2511
      %v2576 = vsel %vm542, 1, 0
      %v2577 = vsel %vm543, 1, 0
      %v2578 = vsel %vm544, 1, 0
      %v2579 = vsel %vm545, 1, 0
      %v2580 = vsel %vm546, 1, 0
      %v2581 = vsel %vm547, 1, 0
      %v2582 = vsel %vm548, 1, 0
      %v2583 = vsel %vm549, 1, 0
      %v2584 = vsel %vm550, 1, 0
      %v2585 = vsel %vm551, 1, 0
      %v2586 = vsel %vm552, 1, 0
      %v2587 = vsel %vm553, 1, 0
      %v2588 = vsel %vm554, 1, 0
      %v2589 = vsel %vm555, 1, 0
      %v2590 = vsel %vm556, 1, 0
      %v2591 = vsel %vm557, 1, 0
      %v2592 = vsel %vm558, 1, 0
      %v2593 = vsel %vm559, 1, 0
      %v2594 = vsel %vm560, 1, 0
      %v2595 = vsel %vm561, 1, 0
      %v2596 = vsel %vm562, 1, 0
      %v2597 = vsel %vm563, 1, 0
      %v2598 = vsel %vm564, 1, 0
      %v2599 = vsel %vm565, 1, 0
      %v2600 = vsel %vm566, 1, 0
      %v2601 = vsel %vm567, 1, 0
      %v2602 = vsel %vm568, 1, 0
      %v2603 = vsel %vm569, 1, 0
      %v2604 = vsel %vm570, 1, 0
      %v2605 = vsel %vm571, 1, 0
      %v2606 = vsel %vm572, 1, 0
      %v2607 = vsel %vm573, 1, 0
      %2608 = vset.pattern.permute.xlu0 0
      %2609 = vperm.xlu0 %2608, %v2576
      %v2610 = vpop.permute.xlu0 %2609
      %2611 = vset.pattern.permute.xlu0 0
      %2612 = vperm.xlu0 %2611, %v2577
      %v2613 = vpop.permute.xlu0 %2612
      %2614 = vset.pattern.permute.xlu0 0
      %2615 = vperm.xlu0 %2614, %v2578
      %v2616 = vpop.permute.xlu0 %2615
      %2617 = vset.pattern.permute.xlu0 0
      %2618 = vperm.xlu0 %2617, %v2579
      %v2619 = vpop.permute.xlu0 %2618
      %2620 = vset.pattern.permute.xlu0 0
      %2621 = vperm.xlu0 %2620, %v2580
      %v2622 = vpop.permute.xlu0 %2621
      %2623 = vset.pattern.permute.xlu0 0
      %2624 = vperm.xlu0 %2623, %v2581
      %v2625 = vpop.permute.xlu0 %2624
      %2626 = vset.pattern.permute.xlu0 0
      %2627 = vperm.xlu0 %2626, %v2582
      %v2628 = vpop.permute.xlu0 %2627
      %2629 = vset.pattern.permute.xlu0 0
      %2630 = vperm.xlu0 %2629, %v2583
      %v2631 = vpop.permute.xlu0 %2630
      %2632 = vset.pattern.permute.xlu0 0
      %2633 = vperm.xlu0 %2632, %v2584
      %v2634 = vpop.permute.xlu0 %2633
      %2635 = vset.pattern.permute.xlu0 0
      %2636 = vperm.xlu0 %2635, %v2585
      %v2637 = vpop.permute.xlu0 %2636
      %2638 = vset.pattern.permute.xlu0 0
      %2639 = vperm.xlu0 %2638, %v2586
      %v2640 = vpop.permute.xlu0 %2639
      %2641 = vset.pattern.permute.xlu0 0
      %2642 = vperm.xlu0 %2641, %v2587
      %v2643 = vpop.permute.xlu0 %2642
      %2644 = vset.pattern.permute.xlu0 0
      %2645 = vperm.xlu0 %2644, %v2588
      %v2646 = vpop.permute.xlu0 %2645
      %2647 = vset.pattern.permute.xlu0 0
      %2648 = vperm.xlu0 %2647, %v2589
      %v2649 = vpop.permute.xlu0 %2648
      %2650 = vset.pattern.permute.xlu0 0
      %2651 = vperm.xlu0 %2650, %v2590
      %v2652 = vpop.permute.xlu0 %2651
      %2653 = vset.pattern.permute.xlu0 0
      %2654 = vperm.xlu0 %2653, %v2591
      %v2655 = vpop.permute.xlu0 %2654
      %2656 = vset.pattern.permute.xlu0 0
      %2657 = vperm.xlu0 %2656, %v2592
      %v2658 = vpop.permute.xlu0 %2657
      %2659 = vset.pattern.permute.xlu0 0
      %2660 = vperm.xlu0 %2659, %v2593
      %v2661 = vpop.permute.xlu0 %2660
      %2662 = vset.pattern.permute.xlu0 0
      %2663 = vperm.xlu0 %2662, %v2594
      %v2664 = vpop.permute.xlu0 %2663
      %2665 = vset.pattern.permute.xlu0 0
      %2666 = vperm.xlu0 %2665, %v2595
      %v2667 = vpop.permute.xlu0 %2666
      %2668 = vset.pattern.permute.xlu0 0
      %2669 = vperm.xlu0 %2668, %v2596
      %v2670 = vpop.permute.xlu0 %2669
      %2671 = vset.pattern.permute.xlu0 0
      %2672 = vperm.xlu0 %2671, %v2597
      %v2673 = vpop.permute.xlu0 %2672
      %2674 = vset.pattern.permute.xlu0 0
      %2675 = vperm.xlu0 %2674, %v2598
      %v2676 = vpop.permute.xlu0 %2675
      %2677 = vset.pattern.permute.xlu0 0
      %2678 = vperm.xlu0 %2677, %v2599
      %v2679 = vpop.permute.xlu0 %2678
      %2680 = vset.pattern.permute.xlu0 0
      %2681 = vperm.xlu0 %2680, %v2600
      %v2682 = vpop.permute.xlu0 %2681
      %2683 = vset.pattern.permute.xlu0 0
      %2684 = vperm.xlu0 %2683, %v2601
      %v2685 = vpop.permute.xlu0 %2684
      %2686 = vset.pattern.permute.xlu0 0
      %2687 = vperm.xlu0 %2686, %v2602
      %v2688 = vpop.permute.xlu0 %2687
      %2689 = vset.pattern.permute.xlu0 0
      %2690 = vperm.xlu0 %2689, %v2603
      %v2691 = vpop.permute.xlu0 %2690
      %2692 = vset.pattern.permute.xlu0 0
      %2693 = vperm.xlu0 %2692, %v2604
      %v2694 = vpop.permute.xlu0 %2693
      %2695 = vset.pattern.permute.xlu0 0
      %2696 = vperm.xlu0 %2695, %v2605
      %v2697 = vpop.permute.xlu0 %2696
      %2698 = vset.pattern.permute.xlu0 0
      %2699 = vperm.xlu0 %2698, %v2606
      %v2700 = vpop.permute.xlu0 %2699
      %2701 = vset.pattern.permute.xlu0 0
      %2702 = vperm.xlu0 %2701, %v2607
      %v2703 = vpop.permute.xlu0 %2702
      %vm2704 = vcmp.eq.s32.totalorder %v2610, 1
      %vm2705 = vcmp.eq.s32.totalorder %v2613, 1
      %vm2706 = vcmp.eq.s32.totalorder %v2616, 1
      %vm2707 = vcmp.eq.s32.totalorder %v2619, 1
      %vm2708 = vcmp.eq.s32.totalorder %v2622, 1
      %vm2709 = vcmp.eq.s32.totalorder %v2625, 1
      %vm2710 = vcmp.eq.s32.totalorder %v2628, 1
      %vm2711 = vcmp.eq.s32.totalorder %v2631, 1
      %vm2712 = vcmp.eq.s32.totalorder %v2634, 1
      %vm2713 = vcmp.eq.s32.totalorder %v2637, 1
      %vm2714 = vcmp.eq.s32.totalorder %v2640, 1
      %vm2715 = vcmp.eq.s32.totalorder %v2643, 1
      %vm2716 = vcmp.eq.s32.totalorder %v2646, 1
      %vm2717 = vcmp.eq.s32.totalorder %v2649, 1
      %vm2718 = vcmp.eq.s32.totalorder %v2652, 1
      %vm2719 = vcmp.eq.s32.totalorder %v2655, 1
      %vm2720 = vcmp.eq.s32.totalorder %v2658, 1
      %vm2721 = vcmp.eq.s32.totalorder %v2661, 1
      %vm2722 = vcmp.eq.s32.totalorder %v2664, 1
      %vm2723 = vcmp.eq.s32.totalorder %v2667, 1
      %vm2724 = vcmp.eq.s32.totalorder %v2670, 1
      %vm2725 = vcmp.eq.s32.totalorder %v2673, 1
      %vm2726 = vcmp.eq.s32.totalorder %v2676, 1
      %vm2727 = vcmp.eq.s32.totalorder %v2679, 1
      %vm2728 = vcmp.eq.s32.totalorder %v2682, 1
      %vm2729 = vcmp.eq.s32.totalorder %v2685, 1
      %vm2730 = vcmp.eq.s32.totalorder %v2688, 1
      %vm2731 = vcmp.eq.s32.totalorder %v2691, 1
      %vm2732 = vcmp.eq.s32.totalorder %v2694, 1
      %vm2733 = vcmp.eq.s32.totalorder %v2697, 1
      %vm2734 = vcmp.eq.s32.totalorder %v2700, 1
      %vm2735 = vcmp.eq.s32.totalorder %v2703, 1
      %v2736 = vsel %vm2704, %v2574, -inf
      %v2737 = vsel %vm2705, %v2573, -inf
      %v2738 = vsel %vm2706, %v2572, -inf
      %v2739 = vsel %vm2707, %v2571, -inf
      %v2740 = vsel %vm2708, %v2570, -inf
      %v2741 = vsel %vm2709, %v2569, -inf
      %v2742 = vsel %vm2710, %v2568, -inf
      %v2743 = vsel %vm2711, %v2567, -inf
      %v2744 = vsel %vm2712, %v2566, -inf
      %v2745 = vsel %vm2713, %v2565, -inf
      %v2746 = vsel %vm2714, %v2564, -inf
      %v2747 = vsel %vm2715, %v2563, -inf
      %v2748 = vsel %vm2716, %v2562, -inf
      %v2749 = vsel %vm2717, %v2561, -inf
      %v2750 = vsel %vm2718, %v2560, -inf
      %v2751 = vsel %vm2719, %v2559, -inf
      %v2752 = vsel %vm2720, %v2558, -inf
      %v2753 = vsel %vm2721, %v2557, -inf
      %v2754 = vsel %vm2722, %v2556, -inf
      %v2755 = vsel %vm2723, %v2555, -inf
      %v2756 = vsel %vm2724, %v2554, -inf
      %v2757 = vsel %vm2725, %v2553, -inf
      %v2758 = vsel %vm2726, %v2552, -inf
      %v2759 = vsel %vm2727, %v2551, -inf
      %v2760 = vsel %vm2728, %v2550, -inf
      %v2761 = vsel %vm2729, %v2549, -inf
      %v2762 = vsel %vm2730, %v2548, -inf
      %v2763 = vsel %vm2731, %v2547, -inf
      %v2764 = vsel %vm2732, %v2546, -inf
      %v2765 = vsel %vm2733, %v2545, -inf
      %v2766 = vsel %vm2734, %v2544, -inf
      %v2767 = vsel %vm2735, %v2575, -inf
      %v2768 = vmax.f32 %v2479, %v2736
      %v2769 = vmax.f32 %v2480, %v2737
      %v2770 = vmax.f32 %v2481, %v2738
      %v2771 = vmax.f32 %v2482, %v2739
      %v2772 = vmax.f32 %v2483, %v2740
      %v2773 = vmax.f32 %v2484, %v2741
      %v2774 = vmax.f32 %v2485, %v2742
      %v2775 = vmax.f32 %v2486, %v2743
      %v2776 = vmax.f32 %v2487, %v2744
      %v2777 = vmax.f32 %v2488, %v2745
      %v2778 = vmax.f32 %v2489, %v2746
      %v2779 = vmax.f32 %v2490, %v2747
      %v2780 = vmax.f32 %v2491, %v2748
      %v2781 = vmax.f32 %v2492, %v2749
      %v2782 = vmax.f32 %v2493, %v2750
      %v2783 = vmax.f32 %v2494, %v2751
      %v2784 = vmax.f32 %v2495, %v2752
      %v2785 = vmax.f32 %v2496, %v2753
      %v2786 = vmax.f32 %v2497, %v2754
      %v2787 = vmax.f32 %v2498, %v2755
      %v2788 = vmax.f32 %v2499, %v2756
      %v2789 = vmax.f32 %v2500, %v2757
      %v2790 = vmax.f32 %v2501, %v2758
      %v2791 = vmax.f32 %v2502, %v2759
      %v2792 = vmax.f32 %v2503, %v2760
      %v2793 = vmax.f32 %v2504, %v2761
      %v2794 = vmax.f32 %v2505, %v2762
      %v2795 = vmax.f32 %v2506, %v2763
      %v2796 = vmax.f32 %v2507, %v2764
      %v2797 = vmax.f32 %v2508, %v2765
      %v2798 = vmax.f32 %v2509, %v2766
      %v2799 = vmax.f32 %v2510, %v2767
      %v2800 = vpack.c.bf16 %v1101, %v1100
      %v2801 = vpack.c.bf16 %v1103, %v1102
      %v2802 = vpack.c.bf16 %v1105, %v1104
      %v2803 = vpack.c.bf16 %v1107, %v1106
      %v2804 = vpack.c.bf16 %v1109, %v1108
      %v2805 = vpack.c.bf16 %v1111, %v1110
      %v2806 = vpack.c.bf16 %v1113, %v1112
      %v2807 = vpack.c.bf16 %v1115, %v1114
      %v2808 = vpack.c.bf16 %v1117, %v1116
      %v2809 = vpack.c.bf16 %v1119, %v1118
      %v2810 = vpack.c.bf16 %v1121, %v1120
      %v2811 = vpack.c.bf16 %v1123, %v1122
      %v2812 = vpack.c.bf16 %v1125, %v1124
      %v2813 = vpack.c.bf16 %v1127, %v1126
      %v2814 = vpack.c.bf16 %v1129, %v1128
      %v2815 = vpack.c.bf16 %v1131, %v1130
      %v2816 = vpack.c.bf16 %v2769, %v2768
      %v2817 = vpack.c.bf16 %v2771, %v2770
      %v2818 = vpack.c.bf16 %v2773, %v2772
      %v2819 = vpack.c.bf16 %v2775, %v2774
      %v2820 = vpack.c.bf16 %v2777, %v2776
      %v2821 = vpack.c.bf16 %v2779, %v2778
      %v2822 = vpack.c.bf16 %v2781, %v2780
      %v2823 = vpack.c.bf16 %v2783, %v2782
      %v2824 = vpack.c.bf16 %v2785, %v2784
      %v2825 = vpack.c.bf16 %v2787, %v2786
      %v2826 = vpack.c.bf16 %v2789, %v2788
      %v2827 = vpack.c.bf16 %v2791, %v2790
      %v2828 = vpack.c.bf16 %v2793, %v2792
      %v2829 = vpack.c.bf16 %v2795, %v2794
      %v2830 = vpack.c.bf16 %v2797, %v2796
      %v2831 = vpack.c.bf16 %v2799, %v2798
      %2848 = vrot.lane.b32.xlu0 %v2816, 8
      %v2849 = vpop.permute.xlu0 %2848
      %2850 = vrot.lane.b32.xlu0 %v2817, 8
      %v2851 = vpop.permute.xlu0 %2850
      %2852 = vrot.lane.b32.xlu0 %v2818, 8
      %v2853 = vpop.permute.xlu0 %2852
      %2854 = vrot.lane.b32.xlu0 %v2819, 8
      %v2855 = vpop.permute.xlu0 %2854
      %2856 = vrot.lane.b32.xlu0 %v2820, 8
      %v2857 = vpop.permute.xlu0 %2856
      %2858 = vrot.lane.b32.xlu0 %v2821, 8
      %v2859 = vpop.permute.xlu0 %2858
      %2860 = vrot.lane.b32.xlu0 %v2822, 8
      %v2861 = vpop.permute.xlu0 %2860
      %2862 = vrot.lane.b32.xlu0 %v2823, 8
      %v2863 = vpop.permute.xlu0 %2862
      %2864 = vrot.lane.b32.xlu0 %v2824, 8
      %v2865 = vpop.permute.xlu0 %2864
      %2866 = vrot.lane.b32.xlu0 %v2825, 8
      %v2867 = vpop.permute.xlu0 %2866
      %2868 = vrot.lane.b32.xlu0 %v2826, 8
      %v2869 = vpop.permute.xlu0 %2868
      %2870 = vrot.lane.b32.xlu0 %v2827, 8
      %v2871 = vpop.permute.xlu0 %2870
      %2872 = vrot.lane.b32.xlu0 %v2828, 8
      %v2873 = vpop.permute.xlu0 %2872
      %2874 = vrot.lane.b32.xlu0 %v2829, 8
      %v2875 = vpop.permute.xlu0 %2874
      %2876 = vrot.lane.b32.xlu0 %v2830, 8
      %v2877 = vpop.permute.xlu0 %2876
      %2878 = vrot.lane.b32.xlu0 %v2831, 8
      %v2879 = vpop.permute.xlu0 %2878
      %v2882 = vsel %vm694, %v2800, %v2849
      %v2885 = vsel %vm694, %v2801, %v2851
      %v2888 = vsel %vm694, %v2802, %v2853
      %v2891 = vsel %vm694, %v2803, %v2855
      %v2894 = vsel %vm694, %v2804, %v2857
      %v2897 = vsel %vm694, %v2805, %v2859
      %v2900 = vsel %vm694, %v2806, %v2861
      %v2903 = vsel %vm694, %v2807, %v2863
      %v2906 = vsel %vm694, %v2808, %v2865
      %v2909 = vsel %vm694, %v2809, %v2867
      %v2912 = vsel %vm694, %v2810, %v2869
      %v2915 = vsel %vm694, %v2811, %v2871
      %v2918 = vsel %vm694, %v2812, %v2873
      %v2921 = vsel %vm694, %v2813, %v2875
      %v2924 = vsel %vm694, %v2814, %v2877
      %v2927 = vsel %vm694, %v2815, %v2879
      %v2928 = vld [vmem:[%s4] sm:$0xf]
      %v2929 = vld [vmem:[%s4 + $0x4] sm:$0xf]
      %v2930 = vsel %vm1164, %v2796, -inf
      %v2931 = vsel %vm1165, %v2797, -inf
      %v2932 = vsel %vm1166, %v2798, -inf
      %v2933 = vsel %vm1167, %v2799, -inf
      %v2934 = vsel %vm1168, %v2768, -inf
      %v2935 = vsel %vm1169, %v2769, -inf
      %v2936 = vsel %vm1170, %v2770, -inf
      %v2937 = vsel %vm1171, %v2771, -inf
      %v2938 = vsel %vm1172, %v2772, -inf
      %v2939 = vsel %vm1173, %v2773, -inf
      %v2940 = vsel %vm1174, %v2774, -inf
      %v2941 = vsel %vm1175, %v2775, -inf
      %v2942 = vsel %vm1176, %v2776, -inf
      %v2943 = vsel %vm1177, %v2777, -inf
      %v2944 = vsel %vm1178, %v2778, -inf
      %v2945 = vsel %vm1179, %v2779, -inf
      %v2946 = vsel %vm1180, %v2780, -inf
      %v2947 = vsel %vm1181, %v2781, -inf
      %v2948 = vsel %vm1182, %v2782, -inf
      %v2949 = vsel %vm1183, %v2783, -inf
      %v2950 = vsel %vm1184, %v2784, -inf
      %v2951 = vsel %vm1185, %v2785, -inf
      %v2952 = vsel %vm1186, %v2786, -inf
      %v2953 = vsel %vm1187, %v2787, -inf
      %v2954 = vsel %vm1188, %v2788, -inf
      %v2955 = vsel %vm1189, %v2789, -inf
      %v2956 = vsel %vm1190, %v2790, -inf
      %v2957 = vsel %vm1191, %v2791, -inf
      %v2958 = vsel %vm1192, %v2792, -inf
      %v2959 = vsel %vm1193, %v2793, -inf
      %v2960 = vsel %vm1194, %v2794, -inf
      %v2961 = vsel %vm1195, %v2795, -inf
      %v2962 = vmax.f32 %v2768, %v2930
      %v2963 = vmax.f32 %v2769, %v2931
      %v2964 = vmax.f32 %v2770, %v2932
      %v2965 = vmax.f32 %v2771, %v2933
      %v2966 = vmax.f32 %v2772, %v2934
      %v2967 = vmax.f32 %v2773, %v2935
      %v2968 = vmax.f32 %v2774, %v2936
      %v2969 = vmax.f32 %v2775, %v2937
      %v2970 = vmax.f32 %v2776, %v2938
      %v2971 = vmax.f32 %v2777, %v2939
      %v2972 = vmax.f32 %v2778, %v2940
      %v2973 = vmax.f32 %v2779, %v2941
      %v2974 = vmax.f32 %v2780, %v2942
      %v2975 = vmax.f32 %v2781, %v2943
      %v2976 = vmax.f32 %v2782, %v2944
      %v2977 = vmax.f32 %v2783, %v2945
      %v2978 = vmax.f32 %v2784, %v2946
      %v2979 = vmax.f32 %v2785, %v2947
      %v2980 = vmax.f32 %v2786, %v2948
      %v2981 = vmax.f32 %v2787, %v2949
      %v2982 = vmax.f32 %v2788, %v2950
      %v2983 = vmax.f32 %v2789, %v2951
      %v2984 = vmax.f32 %v2790, %v2952
      %v2985 = vmax.f32 %v2791, %v2953
      %v2986 = vmax.f32 %v2792, %v2954
      %v2987 = vmax.f32 %v2793, %v2955
      %v2988 = vmax.f32 %v2794, %v2956
      %v2989 = vmax.f32 %v2795, %v2957
      %v2990 = vmax.f32 %v2796, %v2958
      %v2991 = vmax.f32 %v2797, %v2959
      %v2992 = vmax.f32 %v2798, %v2960
      %v2993 = vmax.f32 %v2799, %v2961
      %v2994 = vsel %vm1292, %v2798, -inf
      %v2995 = vsel %vm1293, %v2799, -inf
      %v2996 = vsel %vm1294, %v2768, -inf
      %v2997 = vsel %vm1295, %v2769, -inf
      %v2998 = vsel %vm1296, %v2770, -inf
      %v2999 = vsel %vm1297, %v2771, -inf
      %v3000 = vsel %vm1298, %v2772, -inf
      %v3001 = vsel %vm1299, %v2773, -inf
      %v3002 = vsel %vm1300, %v2774, -inf
      %v3003 = vsel %vm1301, %v2775, -inf
      %v3004 = vsel %vm1302, %v2776, -inf
      %v3005 = vsel %vm1303, %v2777, -inf
      %v3006 = vsel %vm1304, %v2778, -inf
      %v3007 = vsel %vm1305, %v2779, -inf
      %v3008 = vsel %vm1306, %v2780, -inf
      %v3009 = vsel %vm1307, %v2781, -inf
      %v3010 = vsel %vm1308, %v2782, -inf
      %v3011 = vsel %vm1309, %v2783, -inf
      %v3012 = vsel %vm1310, %v2784, -inf
      %v3013 = vsel %vm1311, %v2785, -inf
      %v3014 = vsel %vm1312, %v2786, -inf
      %v3015 = vsel %vm1313, %v2787, -inf
      %v3016 = vsel %vm1314, %v2788, -inf
      %v3017 = vsel %vm1315, %v2789, -inf
      %v3018 = vsel %vm1316, %v2790, -inf
      %v3019 = vsel %vm1317, %v2791, -inf
      %v3020 = vsel %vm1318, %v2792, -inf
      %v3021 = vsel %vm1319, %v2793, -inf
      %v3022 = vsel %vm1320, %v2794, -inf
      %v3023 = vsel %vm1321, %v2795, -inf
      %v3024 = vsel %vm1322, %v2796, -inf
      %v3025 = vsel %vm1323, %v2797, -inf
      %v3026 = vmax.f32 %v2962, %v2994
      %v3027 = vmax.f32 %v2963, %v2995
      %v3028 = vmax.f32 %v2964, %v2996
      %v3029 = vmax.f32 %v2965, %v2997
      %v3030 = vmax.f32 %v2966, %v2998
      %v3031 = vmax.f32 %v2967, %v2999
      %v3032 = vmax.f32 %v2968, %v3000
      %v3033 = vmax.f32 %v2969, %v3001
      %v3034 = vmax.f32 %v2970, %v3002
      %v3035 = vmax.f32 %v2971, %v3003
      %v3036 = vmax.f32 %v2972, %v3004
      %v3037 = vmax.f32 %v2973, %v3005
      %v3038 = vmax.f32 %v2974, %v3006
      %v3039 = vmax.f32 %v2975, %v3007
      %v3040 = vmax.f32 %v2976, %v3008
      %v3041 = vmax.f32 %v2977, %v3009
      %v3042 = vmax.f32 %v2978, %v3010
      %v3043 = vmax.f32 %v2979, %v3011
      %v3044 = vmax.f32 %v2980, %v3012
      %v3045 = vmax.f32 %v2981, %v3013
      %v3046 = vmax.f32 %v2982, %v3014
      %v3047 = vmax.f32 %v2983, %v3015
      %v3048 = vmax.f32 %v2984, %v3016
      %v3049 = vmax.f32 %v2985, %v3017
      %v3050 = vmax.f32 %v2986, %v3018
      %v3051 = vmax.f32 %v2987, %v3019
      %v3052 = vmax.f32 %v2988, %v3020
      %v3053 = vmax.f32 %v2989, %v3021
      %v3054 = vmax.f32 %v2990, %v3022
      %v3055 = vmax.f32 %v2991, %v3023
      %v3056 = vmax.f32 %v2992, %v3024
      %v3057 = vmax.f32 %v2993, %v3025
      %v3058 = vsel %vm1420, %v2770, -inf
      %v3059 = vsel %vm1421, %v2771, -inf
      %v3060 = vsel %vm1422, %v2772, -inf
      %v3061 = vsel %vm1423, %v2773, -inf
      %v3062 = vsel %vm1424, %v2774, -inf
      %v3063 = vsel %vm1425, %v2775, -inf
      %v3064 = vsel %vm1426, %v2776, -inf
      %v3065 = vsel %vm1427, %v2777, -inf
      %v3066 = vsel %vm1428, %v2778, -inf
      %v3067 = vsel %vm1429, %v2779, -inf
      %v3068 = vsel %vm1430, %v2780, -inf
      %v3069 = vsel %vm1431, %v2781, -inf
      %v3070 = vsel %vm1432, %v2782, -inf
      %v3071 = vsel %vm1433, %v2783, -inf
      %v3072 = vsel %vm1434, %v2784, -inf
      %v3073 = vsel %vm1435, %v2785, -inf
      %v3074 = vsel %vm1436, %v2786, -inf
      %v3075 = vsel %vm1437, %v2787, -inf
      %v3076 = vsel %vm1438, %v2788, -inf
      %v3077 = vsel %vm1439, %v2789, -inf
      %v3078 = vsel %vm1440, %v2790, -inf
      %v3079 = vsel %vm1441, %v2791, -inf
      %v3080 = vsel %vm1442, %v2792, -inf
      %v3081 = vsel %vm1443, %v2793, -inf
      %v3082 = vsel %vm1444, %v2794, -inf
      %v3083 = vsel %vm1445, %v2795, -inf
      %v3084 = vsel %vm1446, %v2796, -inf
      %v3085 = vsel %vm1447, %v2797, -inf
      %v3086 = vsel %vm1448, %v2798, -inf
      %v3087 = vsel %vm1449, %v2799, -inf
      %v3088 = vsel %vm1450, %v2768, -inf
      %v3089 = vsel %vm1451, %v2769, -inf
      %v3090 = vmax.f32 %v3026, %v3058
      %v3091 = vmax.f32 %v3027, %v3059
      %v3092 = vmax.f32 %v3028, %v3060
      %v3093 = vmax.f32 %v3029, %v3061
      %v3094 = vmax.f32 %v3030, %v3062
      %v3095 = vmax.f32 %v3031, %v3063
      %v3096 = vmax.f32 %v3032, %v3064
      %v3097 = vmax.f32 %v3033, %v3065
      %v3098 = vmax.f32 %v3034, %v3066
      %v3099 = vmax.f32 %v3035, %v3067
      %v3100 = vmax.f32 %v3036, %v3068
      %v3101 = vmax.f32 %v3037, %v3069
      %v3102 = vmax.f32 %v3038, %v3070
      %v3103 = vmax.f32 %v3039, %v3071
      %v3104 = vmax.f32 %v3040, %v3072
      %v3105 = vmax.f32 %v3041, %v3073
      %v3106 = vmax.f32 %v3042, %v3074
      %v3107 = vmax.f32 %v3043, %v3075
      %v3108 = vmax.f32 %v3044, %v3076
      %v3109 = vmax.f32 %v3045, %v3077
      %v3110 = vmax.f32 %v3046, %v3078
      %v3111 = vmax.f32 %v3047, %v3079
      %v3112 = vmax.f32 %v3048, %v3080
      %v3113 = vmax.f32 %v3049, %v3081
      %v3114 = vmax.f32 %v3050, %v3082
      %v3115 = vmax.f32 %v3051, %v3083
      %v3116 = vmax.f32 %v3052, %v3084
      %v3117 = vmax.f32 %v3053, %v3085
      %v3118 = vmax.f32 %v3054, %v3086
      %v3119 = vmax.f32 %v3055, %v3087
      %v3120 = vmax.f32 %v3056, %v3088
      %v3121 = vmax.f32 %v3057, %v3089
      %v3122 = vsel %vm1548, %v2772, -inf
      %v3123 = vsel %vm1549, %v2773, -inf
      %v3124 = vsel %vm1550, %v2774, -inf
      %v3125 = vsel %vm1551, %v2775, -inf
      %v3126 = vsel %vm1552, %v2776, -inf
      %v3127 = vsel %vm1553, %v2777, -inf
      %v3128 = vsel %vm1554, %v2778, -inf
      %v3129 = vsel %vm1555, %v2779, -inf
      %v3130 = vsel %vm1556, %v2780, -inf
      %v3131 = vsel %vm1557, %v2781, -inf
      %v3132 = vsel %vm1558, %v2782, -inf
      %v3133 = vsel %vm1559, %v2783, -inf
      %v3134 = vsel %vm1560, %v2784, -inf
      %v3135 = vsel %vm1561, %v2785, -inf
      %v3136 = vsel %vm1562, %v2786, -inf
      %v3137 = vsel %vm1563, %v2787, -inf
      %v3138 = vsel %vm1564, %v2788, -inf
      %v3139 = vsel %vm1565, %v2789, -inf
      %v3140 = vsel %vm1566, %v2790, -inf
      %v3141 = vsel %vm1567, %v2791, -inf
      %v3142 = vsel %vm1568, %v2792, -inf
      %v3143 = vsel %vm1569, %v2793, -inf
      %v3144 = vsel %vm1570, %v2794, -inf
      %v3145 = vsel %vm1571, %v2795, -inf
      %v3146 = vsel %vm1572, %v2796, -inf
      %v3147 = vsel %vm1573, %v2797, -inf
      %v3148 = vsel %vm1574, %v2798, -inf
      %v3149 = vsel %vm1575, %v2799, -inf
      %v3150 = vsel %vm1576, %v2768, -inf
      %v3151 = vsel %vm1577, %v2769, -inf
      %v3152 = vsel %vm1578, %v2770, -inf
      %v3153 = vsel %vm1579, %v2771, -inf
      %v3154 = vmax.f32 %v3090, %v3122
      %v3155 = vmax.f32 %v3091, %v3123
      %v3156 = vmax.f32 %v3092, %v3124
      %v3157 = vmax.f32 %v3093, %v3125
      %v3158 = vmax.f32 %v3094, %v3126
      %v3159 = vmax.f32 %v3095, %v3127
      %v3160 = vmax.f32 %v3096, %v3128
      %v3161 = vmax.f32 %v3097, %v3129
      %v3162 = vmax.f32 %v3098, %v3130
      %v3163 = vmax.f32 %v3099, %v3131
      %v3164 = vmax.f32 %v3100, %v3132
      %v3165 = vmax.f32 %v3101, %v3133
      %v3166 = vmax.f32 %v3102, %v3134
      %v3167 = vmax.f32 %v3103, %v3135
      %v3168 = vmax.f32 %v3104, %v3136
      %v3169 = vmax.f32 %v3105, %v3137
      %v3170 = vmax.f32 %v3106, %v3138
      %v3171 = vmax.f32 %v3107, %v3139
      %v3172 = vmax.f32 %v3108, %v3140
      %v3173 = vmax.f32 %v3109, %v3141
      %v3174 = vmax.f32 %v3110, %v3142
      %v3175 = vmax.f32 %v3111, %v3143
      %v3176 = vmax.f32 %v3112, %v3144
      %v3177 = vmax.f32 %v3113, %v3145
      %v3178 = vmax.f32 %v3114, %v3146
      %v3179 = vmax.f32 %v3115, %v3147
      %v3180 = vmax.f32 %v3116, %v3148
      %v3181 = vmax.f32 %v3117, %v3149
      %v3182 = vmax.f32 %v3118, %v3150
      %v3183 = vmax.f32 %v3119, %v3151
      %v3184 = vmax.f32 %v3120, %v3152
      %v3185 = vmax.f32 %v3121, %v3153
      %v3186 = vrot.slane %v3154, 6
      %v3187 = vrot.slane %v3155, 6
      %v3188 = vrot.slane %v3156, 6
      %v3189 = vrot.slane %v3157, 6
      %v3190 = vrot.slane %v3158, 6
      %v3191 = vrot.slane %v3159, 6
      %v3192 = vrot.slane %v3160, 6
      %v3193 = vrot.slane %v3161, 6
      %v3194 = vrot.slane %v3162, 6
      %v3195 = vrot.slane %v3163, 6
      %v3196 = vrot.slane %v3164, 6
      %v3197 = vrot.slane %v3165, 6
      %v3198 = vrot.slane %v3166, 6
      %v3199 = vrot.slane %v3167, 6
      %v3200 = vrot.slane %v3168, 6
      %v3201 = vrot.slane %v3169, 6
      %v3202 = vrot.slane %v3170, 6
      %v3203 = vrot.slane %v3171, 6
      %v3204 = vrot.slane %v3172, 6
      %v3205 = vrot.slane %v3173, 6
      %v3206 = vrot.slane %v3174, 6
      %v3207 = vrot.slane %v3175, 6
      %v3208 = vrot.slane %v3176, 6
      %v3209 = vrot.slane %v3177, 6
      %v3210 = vrot.slane %v3178, 6
      %v3211 = vrot.slane %v3179, 6
      %v3212 = vrot.slane %v3180, 6
      %v3213 = vrot.slane %v3181, 6
      %v3214 = vrot.slane %v3182, 6
      %v3215 = vrot.slane %v3183, 6
      %v3216 = vrot.slane %v3184, 6
      %v3217 = vrot.slane %v3185, 6
      %v3218 = vsel %vm1676, %v3216, %v3217
      %v3219 = vsel %vm1676, %v3215, %v3216
      %v3220 = vsel %vm1676, %v3214, %v3215
      %v3221 = vsel %vm1676, %v3213, %v3214
      %v3222 = vsel %vm1676, %v3212, %v3213
      %v3223 = vsel %vm1676, %v3211, %v3212
      %v3224 = vsel %vm1676, %v3210, %v3211
      %v3225 = vsel %vm1676, %v3209, %v3210
      %v3226 = vsel %vm1676, %v3208, %v3209
      %v3227 = vsel %vm1676, %v3207, %v3208
      %v3228 = vsel %vm1676, %v3206, %v3207
      %v3229 = vsel %vm1676, %v3205, %v3206
      %v3230 = vsel %vm1676, %v3204, %v3205
      %v3231 = vsel %vm1676, %v3203, %v3204
      %v3232 = vsel %vm1676, %v3202, %v3203
      %v3233 = vsel %vm1676, %v3201, %v3202
      %v3234 = vsel %vm1676, %v3200, %v3201
      %v3235 = vsel %vm1676, %v3199, %v3200
      %v3236 = vsel %vm1676, %v3198, %v3199
      %v3237 = vsel %vm1676, %v3197, %v3198
      %v3238 = vsel %vm1676, %v3196, %v3197
      %v3239 = vsel %vm1676, %v3195, %v3196
      %v3240 = vsel %vm1676, %v3194, %v3195
      %v3241 = vsel %vm1676, %v3193, %v3194
      %v3242 = vsel %vm1676, %v3192, %v3193
      %v3243 = vsel %vm1676, %v3191, %v3192
      %v3244 = vsel %vm1676, %v3190, %v3191
      %v3245 = vsel %vm1676, %v3189, %v3190
      %v3246 = vsel %vm1676, %v3188, %v3189
      %v3247 = vsel %vm1676, %v3187, %v3188
      %v3248 = vsel %vm1676, %v3186, %v3187
      %v3249 = vsel %vm1676, %v3217, %v3186
      %v3250 = vsel %vm1837, %v3249, -inf
      %v3251 = vsel %vm1838, %v3248, -inf
      %v3252 = vsel %vm1839, %v3247, -inf
      %v3253 = vsel %vm1840, %v3246, -inf
      %v3254 = vsel %vm1841, %v3245, -inf
      %v3255 = vsel %vm1842, %v3244, -inf
      %v3256 = vsel %vm1843, %v3243, -inf
      %v3257 = vsel %vm1844, %v3242, -inf
      %v3258 = vsel %vm1845, %v3241, -inf
      %v3259 = vsel %vm1846, %v3240, -inf
      %v3260 = vsel %vm1847, %v3239, -inf
      %v3261 = vsel %vm1848, %v3238, -inf
      %v3262 = vsel %vm1849, %v3237, -inf
      %v3263 = vsel %vm1850, %v3236, -inf
      %v3264 = vsel %vm1851, %v3235, -inf
      %v3265 = vsel %vm1852, %v3234, -inf
      %v3266 = vsel %vm1853, %v3233, -inf
      %v3267 = vsel %vm1854, %v3232, -inf
      %v3268 = vsel %vm1855, %v3231, -inf
      %v3269 = vsel %vm1856, %v3230, -inf
      %v3270 = vsel %vm1857, %v3229, -inf
      %v3271 = vsel %vm1858, %v3228, -inf
      %v3272 = vsel %vm1859, %v3227, -inf
      %v3273 = vsel %vm1860, %v3226, -inf
      %v3274 = vsel %vm1861, %v3225, -inf
      %v3275 = vsel %vm1862, %v3224, -inf
      %v3276 = vsel %vm1863, %v3223, -inf
      %v3277 = vsel %vm1864, %v3222, -inf
      %v3278 = vsel %vm1865, %v3221, -inf
      %v3279 = vsel %vm1866, %v3220, -inf
      %v3280 = vsel %vm1867, %v3219, -inf
      %v3281 = vsel %vm1868, %v3218, -inf
      %v3282 = vmax.f32 %v3154, %v3250
      %v3283 = vmax.f32 %v3155, %v3251
      %v3284 = vmax.f32 %v3156, %v3252
      %v3285 = vmax.f32 %v3157, %v3253
      %v3286 = vmax.f32 %v3158, %v3254
      %v3287 = vmax.f32 %v3159, %v3255
      %v3288 = vmax.f32 %v3160, %v3256
      %v3289 = vmax.f32 %v3161, %v3257
      %v3290 = vmax.f32 %v3162, %v3258
      %v3291 = vmax.f32 %v3163, %v3259
      %v3292 = vmax.f32 %v3164, %v3260
      %v3293 = vmax.f32 %v3165, %v3261
      %v3294 = vmax.f32 %v3166, %v3262
      %v3295 = vmax.f32 %v3167, %v3263
      %v3296 = vmax.f32 %v3168, %v3264
      %v3297 = vmax.f32 %v3169, %v3265
      %v3298 = vmax.f32 %v3170, %v3266
      %v3299 = vmax.f32 %v3171, %v3267
      %v3300 = vmax.f32 %v3172, %v3268
      %v3301 = vmax.f32 %v3173, %v3269
      %v3302 = vmax.f32 %v3174, %v3270
      %v3303 = vmax.f32 %v3175, %v3271
      %v3304 = vmax.f32 %v3176, %v3272
      %v3305 = vmax.f32 %v3177, %v3273
      %v3306 = vmax.f32 %v3178, %v3274
      %v3307 = vmax.f32 %v3179, %v3275
      %v3308 = vmax.f32 %v3180, %v3276
      %v3309 = vmax.f32 %v3181, %v3277
      %v3310 = vmax.f32 %v3182, %v3278
      %v3311 = vmax.f32 %v3183, %v3279
      %v3312 = vmax.f32 %v3184, %v3280
      %v3313 = vmax.f32 %v3185, %v3281
      %v3314 = vrot.slane %v3154, 7
      %v3315 = vrot.slane %v3155, 7
      %v3316 = vrot.slane %v3156, 7
      %v3317 = vrot.slane %v3157, 7
      %v3318 = vrot.slane %v3158, 7
      %v3319 = vrot.slane %v3159, 7
      %v3320 = vrot.slane %v3160, 7
      %v3321 = vrot.slane %v3161, 7
      %v3322 = vrot.slane %v3162, 7
      %v3323 = vrot.slane %v3163, 7
      %v3324 = vrot.slane %v3164, 7
      %v3325 = vrot.slane %v3165, 7
      %v3326 = vrot.slane %v3166, 7
      %v3327 = vrot.slane %v3167, 7
      %v3328 = vrot.slane %v3168, 7
      %v3329 = vrot.slane %v3169, 7
      %v3330 = vrot.slane %v3170, 7
      %v3331 = vrot.slane %v3171, 7
      %v3332 = vrot.slane %v3172, 7
      %v3333 = vrot.slane %v3173, 7
      %v3334 = vrot.slane %v3174, 7
      %v3335 = vrot.slane %v3175, 7
      %v3336 = vrot.slane %v3176, 7
      %v3337 = vrot.slane %v3177, 7
      %v3338 = vrot.slane %v3178, 7
      %v3339 = vrot.slane %v3179, 7
      %v3340 = vrot.slane %v3180, 7
      %v3341 = vrot.slane %v3181, 7
      %v3342 = vrot.slane %v3182, 7
      %v3343 = vrot.slane %v3183, 7
      %v3344 = vrot.slane %v3184, 7
      %v3345 = vrot.slane %v3185, 7
      %v3346 = vsel %vm1965, %v3344, %v3345
      %v3347 = vsel %vm1965, %v3343, %v3344
      %v3348 = vsel %vm1965, %v3342, %v3343
      %v3349 = vsel %vm1965, %v3341, %v3342
      %v3350 = vsel %vm1965, %v3340, %v3341
      %v3351 = vsel %vm1965, %v3339, %v3340
      %v3352 = vsel %vm1965, %v3338, %v3339
      %v3353 = vsel %vm1965, %v3337, %v3338
      %v3354 = vsel %vm1965, %v3336, %v3337
      %v3355 = vsel %vm1965, %v3335, %v3336
      %v3356 = vsel %vm1965, %v3334, %v3335
      %v3357 = vsel %vm1965, %v3333, %v3334
      %v3358 = vsel %vm1965, %v3332, %v3333
      %v3359 = vsel %vm1965, %v3331, %v3332
      %v3360 = vsel %vm1965, %v3330, %v3331
      %v3361 = vsel %vm1965, %v3329, %v3330
      %v3362 = vsel %vm1965, %v3328, %v3329
      %v3363 = vsel %vm1965, %v3327, %v3328
      %v3364 = vsel %vm1965, %v3326, %v3327
      %v3365 = vsel %vm1965, %v3325, %v3326
      %v3366 = vsel %vm1965, %v3324, %v3325
      %v3367 = vsel %vm1965, %v3323, %v3324
      %v3368 = vsel %vm1965, %v3322, %v3323
      %v3369 = vsel %vm1965, %v3321, %v3322
      %v3370 = vsel %vm1965, %v3320, %v3321
      %v3371 = vsel %vm1965, %v3319, %v3320
      %v3372 = vsel %vm1965, %v3318, %v3319
      %v3373 = vsel %vm1965, %v3317, %v3318
      %v3374 = vsel %vm1965, %v3316, %v3317
      %v3375 = vsel %vm1965, %v3315, %v3316
      %v3376 = vsel %vm1965, %v3314, %v3315
      %v3377 = vsel %vm1965, %v3345, %v3314
      %v3378 = vsel %vm2126, %v3377, -inf
      %v3379 = vsel %vm2127, %v3376, -inf
      %v3380 = vsel %vm2128, %v3375, -inf
      %v3381 = vsel %vm2129, %v3374, -inf
      %v3382 = vsel %vm2130, %v3373, -inf
      %v3383 = vsel %vm2131, %v3372, -inf
      %v3384 = vsel %vm2132, %v3371, -inf
      %v3385 = vsel %vm2133, %v3370, -inf
      %v3386 = vsel %vm2134, %v3369, -inf
      %v3387 = vsel %vm2135, %v3368, -inf
      %v3388 = vsel %vm2136, %v3367, -inf
      %v3389 = vsel %vm2137, %v3366, -inf
      %v3390 = vsel %vm2138, %v3365, -inf
      %v3391 = vsel %vm2139, %v3364, -inf
      %v3392 = vsel %vm2140, %v3363, -inf
      %v3393 = vsel %vm2141, %v3362, -inf
      %v3394 = vsel %vm2142, %v3361, -inf
      %v3395 = vsel %vm2143, %v3360, -inf
      %v3396 = vsel %vm2144, %v3359, -inf
      %v3397 = vsel %vm2145, %v3358, -inf
      %v3398 = vsel %vm2146, %v3357, -inf
      %v3399 = vsel %vm2147, %v3356, -inf
      %v3400 = vsel %vm2148, %v3355, -inf
      %v3401 = vsel %vm2149, %v3354, -inf
      %v3402 = vsel %vm2150, %v3353, -inf
      %v3403 = vsel %vm2151, %v3352, -inf
      %v3404 = vsel %vm2152, %v3351, -inf
      %v3405 = vsel %vm2153, %v3350, -inf
      %v3406 = vsel %vm2154, %v3349, -inf
      %v3407 = vsel %vm2155, %v3348, -inf
      %v3408 = vsel %vm2156, %v3347, -inf
      %v3409 = vsel %vm2157, %v3346, -inf
      %v3410 = vmax.f32 %v3282, %v3378
      %v3411 = vmax.f32 %v3283, %v3379
      %v3412 = vmax.f32 %v3284, %v3380
      %v3413 = vmax.f32 %v3285, %v3381
      %v3414 = vmax.f32 %v3286, %v3382
      %v3415 = vmax.f32 %v3287, %v3383
      %v3416 = vmax.f32 %v3288, %v3384
      %v3417 = vmax.f32 %v3289, %v3385
      %v3418 = vmax.f32 %v3290, %v3386
      %v3419 = vmax.f32 %v3291, %v3387
      %v3420 = vmax.f32 %v3292, %v3388
      %v3421 = vmax.f32 %v3293, %v3389
      %v3422 = vmax.f32 %v3294, %v3390
      %v3423 = vmax.f32 %v3295, %v3391
      %v3424 = vmax.f32 %v3296, %v3392
      %v3425 = vmax.f32 %v3297, %v3393
      %v3426 = vmax.f32 %v3298, %v3394
      %v3427 = vmax.f32 %v3299, %v3395
      %v3428 = vmax.f32 %v3300, %v3396
      %v3429 = vmax.f32 %v3301, %v3397
      %v3430 = vmax.f32 %v3302, %v3398
      %v3431 = vmax.f32 %v3303, %v3399
      %v3432 = vmax.f32 %v3304, %v3400
      %v3433 = vmax.f32 %v3305, %v3401
      %v3434 = vmax.f32 %v3306, %v3402
      %v3435 = vmax.f32 %v3307, %v3403
      %v3436 = vmax.f32 %v3308, %v3404
      %v3437 = vmax.f32 %v3309, %v3405
      %v3438 = vmax.f32 %v3310, %v3406
      %v3439 = vmax.f32 %v3311, %v3407
      %v3440 = vmax.f32 %v3312, %v3408
      %v3441 = vmax.f32 %v3313, %v3409
      %v3442 = vrot.slane %v3154, 1
      %v3443 = vrot.slane %v3155, 1
      %v3444 = vrot.slane %v3156, 1
      %v3445 = vrot.slane %v3157, 1
      %v3446 = vrot.slane %v3158, 1
      %v3447 = vrot.slane %v3159, 1
      %v3448 = vrot.slane %v3160, 1
      %v3449 = vrot.slane %v3161, 1
      %v3450 = vrot.slane %v3162, 1
      %v3451 = vrot.slane %v3163, 1
      %v3452 = vrot.slane %v3164, 1
      %v3453 = vrot.slane %v3165, 1
      %v3454 = vrot.slane %v3166, 1
      %v3455 = vrot.slane %v3167, 1
      %v3456 = vrot.slane %v3168, 1
      %v3457 = vrot.slane %v3169, 1
      %v3458 = vrot.slane %v3170, 1
      %v3459 = vrot.slane %v3171, 1
      %v3460 = vrot.slane %v3172, 1
      %v3461 = vrot.slane %v3173, 1
      %v3462 = vrot.slane %v3174, 1
      %v3463 = vrot.slane %v3175, 1
      %v3464 = vrot.slane %v3176, 1
      %v3465 = vrot.slane %v3177, 1
      %v3466 = vrot.slane %v3178, 1
      %v3467 = vrot.slane %v3179, 1
      %v3468 = vrot.slane %v3180, 1
      %v3469 = vrot.slane %v3181, 1
      %v3470 = vrot.slane %v3182, 1
      %v3471 = vrot.slane %v3183, 1
      %v3472 = vrot.slane %v3184, 1
      %v3473 = vrot.slane %v3185, 1
      %v3474 = vsel %vm2254, %v3472, %v3473
      %v3475 = vsel %vm2254, %v3471, %v3472
      %v3476 = vsel %vm2254, %v3470, %v3471
      %v3477 = vsel %vm2254, %v3469, %v3470
      %v3478 = vsel %vm2254, %v3468, %v3469
      %v3479 = vsel %vm2254, %v3467, %v3468
      %v3480 = vsel %vm2254, %v3466, %v3467
      %v3481 = vsel %vm2254, %v3465, %v3466
      %v3482 = vsel %vm2254, %v3464, %v3465
      %v3483 = vsel %vm2254, %v3463, %v3464
      %v3484 = vsel %vm2254, %v3462, %v3463
      %v3485 = vsel %vm2254, %v3461, %v3462
      %v3486 = vsel %vm2254, %v3460, %v3461
      %v3487 = vsel %vm2254, %v3459, %v3460
      %v3488 = vsel %vm2254, %v3458, %v3459
      %v3489 = vsel %vm2254, %v3457, %v3458
      %v3490 = vsel %vm2254, %v3456, %v3457
      %v3491 = vsel %vm2254, %v3455, %v3456
      %v3492 = vsel %vm2254, %v3454, %v3455
      %v3493 = vsel %vm2254, %v3453, %v3454
      %v3494 = vsel %vm2254, %v3452, %v3453
      %v3495 = vsel %vm2254, %v3451, %v3452
      %v3496 = vsel %vm2254, %v3450, %v3451
      %v3497 = vsel %vm2254, %v3449, %v3450
      %v3498 = vsel %vm2254, %v3448, %v3449
      %v3499 = vsel %vm2254, %v3447, %v3448
      %v3500 = vsel %vm2254, %v3446, %v3447
      %v3501 = vsel %vm2254, %v3445, %v3446
      %v3502 = vsel %vm2254, %v3444, %v3445
      %v3503 = vsel %vm2254, %v3443, %v3444
      %v3504 = vsel %vm2254, %v3442, %v3443
      %v3505 = vsel %vm2254, %v3473, %v3442
      %v3506 = vsel %vm2415, %v3504, -inf
      %v3507 = vsel %vm2416, %v3503, -inf
      %v3508 = vsel %vm2417, %v3502, -inf
      %v3509 = vsel %vm2418, %v3501, -inf
      %v3510 = vsel %vm2419, %v3500, -inf
      %v3511 = vsel %vm2420, %v3499, -inf
      %v3512 = vsel %vm2421, %v3498, -inf
      %v3513 = vsel %vm2422, %v3497, -inf
      %v3514 = vsel %vm2423, %v3496, -inf
      %v3515 = vsel %vm2424, %v3495, -inf
      %v3516 = vsel %vm2425, %v3494, -inf
      %v3517 = vsel %vm2426, %v3493, -inf
      %v3518 = vsel %vm2427, %v3492, -inf
      %v3519 = vsel %vm2428, %v3491, -inf
      %v3520 = vsel %vm2429, %v3490, -inf
      %v3521 = vsel %vm2430, %v3489, -inf
      %v3522 = vsel %vm2431, %v3488, -inf
      %v3523 = vsel %vm2432, %v3487, -inf
      %v3524 = vsel %vm2433, %v3486, -inf
      %v3525 = vsel %vm2434, %v3485, -inf
      %v3526 = vsel %vm2435, %v3484, -inf
      %v3527 = vsel %vm2436, %v3483, -inf
      %v3528 = vsel %vm2437, %v3482, -inf
      %v3529 = vsel %vm2438, %v3481, -inf
      %v3530 = vsel %vm2439, %v3480, -inf
      %v3531 = vsel %vm2440, %v3479, -inf
      %v3532 = vsel %vm2441, %v3478, -inf
      %v3533 = vsel %vm2442, %v3477, -inf
      %v3534 = vsel %vm2443, %v3476, -inf
      %v3535 = vsel %vm2444, %v3475, -inf
      %v3536 = vsel %vm2445, %v3474, -inf
      %v3537 = vsel %vm2446, %v3505, -inf
      %v3538 = vmax.f32 %v3410, %v3506
      %v3539 = vmax.f32 %v3411, %v3507
      %v3540 = vmax.f32 %v3412, %v3508
      %v3541 = vmax.f32 %v3413, %v3509
      %v3542 = vmax.f32 %v3414, %v3510
      %v3543 = vmax.f32 %v3415, %v3511
      %v3544 = vmax.f32 %v3416, %v3512
      %v3545 = vmax.f32 %v3417, %v3513
      %v3546 = vmax.f32 %v3418, %v3514
      %v3547 = vmax.f32 %v3419, %v3515
      %v3548 = vmax.f32 %v3420, %v3516
      %v3549 = vmax.f32 %v3421, %v3517
      %v3550 = vmax.f32 %v3422, %v3518
      %v3551 = vmax.f32 %v3423, %v3519
      %v3552 = vmax.f32 %v3424, %v3520
      %v3553 = vmax.f32 %v3425, %v3521
      %v3554 = vmax.f32 %v3426, %v3522
      %v3555 = vmax.f32 %v3427, %v3523
      %v3556 = vmax.f32 %v3428, %v3524
      %v3557 = vmax.f32 %v3429, %v3525
      %v3558 = vmax.f32 %v3430, %v3526
      %v3559 = vmax.f32 %v3431, %v3527
      %v3560 = vmax.f32 %v3432, %v3528
      %v3561 = vmax.f32 %v3433, %v3529
      %v3562 = vmax.f32 %v3434, %v3530
      %v3563 = vmax.f32 %v3435, %v3531
      %v3564 = vmax.f32 %v3436, %v3532
      %v3565 = vmax.f32 %v3437, %v3533
      %v3566 = vmax.f32 %v3438, %v3534
      %v3567 = vmax.f32 %v3439, %v3535
      %v3568 = vmax.f32 %v3440, %v3536
      %v3569 = vmax.f32 %v3441, %v3537
      %v3570 = vrot.slane %v3154, 2
      %v3571 = vrot.slane %v3155, 2
      %v3572 = vrot.slane %v3156, 2
      %v3573 = vrot.slane %v3157, 2
      %v3574 = vrot.slane %v3158, 2
      %v3575 = vrot.slane %v3159, 2
      %v3576 = vrot.slane %v3160, 2
      %v3577 = vrot.slane %v3161, 2
      %v3578 = vrot.slane %v3162, 2
      %v3579 = vrot.slane %v3163, 2
      %v3580 = vrot.slane %v3164, 2
      %v3581 = vrot.slane %v3165, 2
      %v3582 = vrot.slane %v3166, 2
      %v3583 = vrot.slane %v3167, 2
      %v3584 = vrot.slane %v3168, 2
      %v3585 = vrot.slane %v3169, 2
      %v3586 = vrot.slane %v3170, 2
      %v3587 = vrot.slane %v3171, 2
      %v3588 = vrot.slane %v3172, 2
      %v3589 = vrot.slane %v3173, 2
      %v3590 = vrot.slane %v3174, 2
      %v3591 = vrot.slane %v3175, 2
      %v3592 = vrot.slane %v3176, 2
      %v3593 = vrot.slane %v3177, 2
      %v3594 = vrot.slane %v3178, 2
      %v3595 = vrot.slane %v3179, 2
      %v3596 = vrot.slane %v3180, 2
      %v3597 = vrot.slane %v3181, 2
      %v3598 = vrot.slane %v3182, 2
      %v3599 = vrot.slane %v3183, 2
      %v3600 = vrot.slane %v3184, 2
      %v3601 = vrot.slane %v3185, 2
      %v3602 = vsel %vm2543, %v3600, %v3601
      %v3603 = vsel %vm2543, %v3599, %v3600
      %v3604 = vsel %vm2543, %v3598, %v3599
      %v3605 = vsel %vm2543, %v3597, %v3598
      %v3606 = vsel %vm2543, %v3596, %v3597
      %v3607 = vsel %vm2543, %v3595, %v3596
      %v3608 = vsel %vm2543, %v3594, %v3595
      %v3609 = vsel %vm2543, %v3593, %v3594
      %v3610 = vsel %vm2543, %v3592, %v3593
      %v3611 = vsel %vm2543, %v3591, %v3592
      %v3612 = vsel %vm2543, %v3590, %v3591
      %v3613 = vsel %vm2543, %v3589, %v3590
      %v3614 = vsel %vm2543, %v3588, %v3589
      %v3615 = vsel %vm2543, %v3587, %v3588
      %v3616 = vsel %vm2543, %v3586, %v3587
      %v3617 = vsel %vm2543, %v3585, %v3586
      %v3618 = vsel %vm2543, %v3584, %v3585
      %v3619 = vsel %vm2543, %v3583, %v3584
      %v3620 = vsel %vm2543, %v3582, %v3583
      %v3621 = vsel %vm2543, %v3581, %v3582
      %v3622 = vsel %vm2543, %v3580, %v3581
      %v3623 = vsel %vm2543, %v3579, %v3580
      %v3624 = vsel %vm2543, %v3578, %v3579
      %v3625 = vsel %vm2543, %v3577, %v3578
      %v3626 = vsel %vm2543, %v3576, %v3577
      %v3627 = vsel %vm2543, %v3575, %v3576
      %v3628 = vsel %vm2543, %v3574, %v3575
      %v3629 = vsel %vm2543, %v3573, %v3574
      %v3630 = vsel %vm2543, %v3572, %v3573
      %v3631 = vsel %vm2543, %v3571, %v3572
      %v3632 = vsel %vm2543, %v3570, %v3571
      %v3633 = vsel %vm2543, %v3601, %v3570
      %v3634 = vsel %vm2704, %v3632, -inf
      %v3635 = vsel %vm2705, %v3631, -inf
      %v3636 = vsel %vm2706, %v3630, -inf
      %v3637 = vsel %vm2707, %v3629, -inf
      %v3638 = vsel %vm2708, %v3628, -inf
      %v3639 = vsel %vm2709, %v3627, -inf
      %v3640 = vsel %vm2710, %v3626, -inf
      %v3641 = vsel %vm2711, %v3625, -inf
      %v3642 = vsel %vm2712, %v3624, -inf
      %v3643 = vsel %vm2713, %v3623, -inf
      %v3644 = vsel %vm2714, %v3622, -inf
      %v3645 = vsel %vm2715, %v3621, -inf
      %v3646 = vsel %vm2716, %v3620, -inf
      %v3647 = vsel %vm2717, %v3619, -inf
      %v3648 = vsel %vm2718, %v3618, -inf
      %v3649 = vsel %vm2719, %v3617, -inf
      %v3650 = vsel %vm2720, %v3616, -inf
      %v3651 = vsel %vm2721, %v3615, -inf
      %v3652 = vsel %vm2722, %v3614, -inf
      %v3653 = vsel %vm2723, %v3613, -inf
      %v3654 = vsel %vm2724, %v3612, -inf
      %v3655 = vsel %vm2725, %v3611, -inf
      %v3656 = vsel %vm2726, %v3610, -inf
      %v3657 = vsel %vm2727, %v3609, -inf
      %v3658 = vsel %vm2728, %v3608, -inf
      %v3659 = vsel %vm2729, %v3607, -inf
      %v3660 = vsel %vm2730, %v3606, -inf
      %v3661 = vsel %vm2731, %v3605, -inf
      %v3662 = vsel %vm2732, %v3604, -inf
      %v3663 = vsel %vm2733, %v3603, -inf
      %v3664 = vsel %vm2734, %v3602, -inf
      %v3665 = vsel %vm2735, %v3633, -inf
      %v3666 = vmax.f32 %v3538, %v3634
      %v3667 = vmax.f32 %v3539, %v3635
      %v3668 = vmax.f32 %v3540, %v3636
      %v3669 = vmax.f32 %v3541, %v3637
      %v3670 = vmax.f32 %v3542, %v3638
      %v3671 = vmax.f32 %v3543, %v3639
      %v3672 = vmax.f32 %v3544, %v3640
      %v3673 = vmax.f32 %v3545, %v3641
      %v3674 = vmax.f32 %v3546, %v3642
      %v3675 = vmax.f32 %v3547, %v3643
      %v3676 = vmax.f32 %v3548, %v3644
      %v3677 = vmax.f32 %v3549, %v3645
      %v3678 = vmax.f32 %v3550, %v3646
      %v3679 = vmax.f32 %v3551, %v3647
      %v3680 = vmax.f32 %v3552, %v3648
      %v3681 = vmax.f32 %v3553, %v3649
      %v3682 = vmax.f32 %v3554, %v3650
      %v3683 = vmax.f32 %v3555, %v3651
      %v3684 = vmax.f32 %v3556, %v3652
      %v3685 = vmax.f32 %v3557, %v3653
      %v3686 = vmax.f32 %v3558, %v3654
      %v3687 = vmax.f32 %v3559, %v3655
      %v3688 = vmax.f32 %v3560, %v3656
      %v3689 = vmax.f32 %v3561, %v3657
      %v3690 = vmax.f32 %v3562, %v3658
      %v3691 = vmax.f32 %v3563, %v3659
      %v3692 = vmax.f32 %v3564, %v3660
      %v3693 = vmax.f32 %v3565, %v3661
      %v3694 = vmax.f32 %v3566, %v3662
      %v3695 = vmax.f32 %v3567, %v3663
      %v3696 = vmax.f32 %v3568, %v3664
      %v3697 = vmax.f32 %v3569, %v3665
      %v3698 = vsel %vm1164, %v3694, -inf
      %v3699 = vsel %vm1165, %v3695, -inf
      %v3700 = vsel %vm1166, %v3696, -inf
      %v3701 = vsel %vm1167, %v3697, -inf
      %v3702 = vsel %vm1168, %v3666, -inf
      %v3703 = vsel %vm1169, %v3667, -inf
      %v3704 = vsel %vm1170, %v3668, -inf
      %v3705 = vsel %vm1171, %v3669, -inf
      %v3706 = vsel %vm1172, %v3670, -inf
      %v3707 = vsel %vm1173, %v3671, -inf
      %v3708 = vsel %vm1174, %v3672, -inf
      %v3709 = vsel %vm1175, %v3673, -inf
      %v3710 = vsel %vm1176, %v3674, -inf
      %v3711 = vsel %vm1177, %v3675, -inf
      %v3712 = vsel %vm1178, %v3676, -inf
      %v3713 = vsel %vm1179, %v3677, -inf
      %v3714 = vsel %vm1180, %v3678, -inf
      %v3715 = vsel %vm1181, %v3679, -inf
      %v3716 = vsel %vm1182, %v3680, -inf
      %v3717 = vsel %vm1183, %v3681, -inf
      %v3718 = vsel %vm1184, %v3682, -inf
      %v3719 = vsel %vm1185, %v3683, -inf
      %v3720 = vsel %vm1186, %v3684, -inf
      %v3721 = vsel %vm1187, %v3685, -inf
      %v3722 = vsel %vm1188, %v3686, -inf
      %v3723 = vsel %vm1189, %v3687, -inf
      %v3724 = vsel %vm1190, %v3688, -inf
      %v3725 = vsel %vm1191, %v3689, -inf
      %v3726 = vsel %vm1192, %v3690, -inf
      %v3727 = vsel %vm1193, %v3691, -inf
      %v3728 = vsel %vm1194, %v3692, -inf
      %v3729 = vsel %vm1195, %v3693, -inf
      %v3730 = vmax.f32 %v3666, %v3698
      %v3731 = vmax.f32 %v3667, %v3699
      %v3732 = vmax.f32 %v3668, %v3700
      %v3733 = vmax.f32 %v3669, %v3701
      %v3734 = vmax.f32 %v3670, %v3702
      %v3735 = vmax.f32 %v3671, %v3703
      %v3736 = vmax.f32 %v3672, %v3704
      %v3737 = vmax.f32 %v3673, %v3705
      %v3738 = vmax.f32 %v3674, %v3706
      %v3739 = vmax.f32 %v3675, %v3707
      %v3740 = vmax.f32 %v3676, %v3708
      %v3741 = vmax.f32 %v3677, %v3709
      %v3742 = vmax.f32 %v3678, %v3710
      %v3743 = vmax.f32 %v3679, %v3711
      %v3744 = vmax.f32 %v3680, %v3712
      %v3745 = vmax.f32 %v3681, %v3713
      %v3746 = vmax.f32 %v3682, %v3714
      %v3747 = vmax.f32 %v3683, %v3715
      %v3748 = vmax.f32 %v3684, %v3716
      %v3749 = vmax.f32 %v3685, %v3717
      %v3750 = vmax.f32 %v3686, %v3718
      %v3751 = vmax.f32 %v3687, %v3719
      %v3752 = vmax.f32 %v3688, %v3720
      %v3753 = vmax.f32 %v3689, %v3721
      %v3754 = vmax.f32 %v3690, %v3722
      %v3755 = vmax.f32 %v3691, %v3723
      %v3756 = vmax.f32 %v3692, %v3724
      %v3757 = vmax.f32 %v3693, %v3725
      %v3758 = vmax.f32 %v3694, %v3726
      %v3759 = vmax.f32 %v3695, %v3727
      %v3760 = vmax.f32 %v3696, %v3728
      %v3761 = vmax.f32 %v3697, %v3729
      %v3762 = vsel %vm1292, %v3696, -inf
      %v3763 = vsel %vm1293, %v3697, -inf
      %v3764 = vsel %vm1294, %v3666, -inf
      %v3765 = vsel %vm1295, %v3667, -inf
      %v3766 = vsel %vm1296, %v3668, -inf
      %v3767 = vsel %vm1297, %v3669, -inf
      %v3768 = vsel %vm1298, %v3670, -inf
      %v3769 = vsel %vm1299, %v3671, -inf
      %v3770 = vsel %vm1300, %v3672, -inf
      %v3771 = vsel %vm1301, %v3673, -inf
      %v3772 = vsel %vm1302, %v3674, -inf
      %v3773 = vsel %vm1303, %v3675, -inf
      %v3774 = vsel %vm1304, %v3676, -inf
      %v3775 = vsel %vm1305, %v3677, -inf
      %v3776 = vsel %vm1306, %v3678, -inf
      %v3777 = vsel %vm1307, %v3679, -inf
      %v3778 = vsel %vm1308, %v3680, -inf
      %v3779 = vsel %vm1309, %v3681, -inf
      %v3780 = vsel %vm1310, %v3682, -inf
      %v3781 = vsel %vm1311, %v3683, -inf
      %v3782 = vsel %vm1312, %v3684, -inf
      %v3783 = vsel %vm1313, %v3685, -inf
      %v3784 = vsel %vm1314, %v3686, -inf
      %v3785 = vsel %vm1315, %v3687, -inf
      %v3786 = vsel %vm1316, %v3688, -inf
      %v3787 = vsel %vm1317, %v3689, -inf
      %v3788 = vsel %vm1318, %v3690, -inf
      %v3789 = vsel %vm1319, %v3691, -inf
      %v3790 = vsel %vm1320, %v3692, -inf
      %v3791 = vsel %vm1321, %v3693, -inf
      %v3792 = vsel %vm1322, %v3694, -inf
      %v3793 = vsel %vm1323, %v3695, -inf
      %v3794 = vmax.f32 %v3730, %v3762
      %v3795 = vmax.f32 %v3731, %v3763
      %v3796 = vmax.f32 %v3732, %v3764
      %v3797 = vmax.f32 %v3733, %v3765
      %v3798 = vmax.f32 %v3734, %v3766
      %v3799 = vmax.f32 %v3735, %v3767
      %v3800 = vmax.f32 %v3736, %v3768
      %v3801 = vmax.f32 %v3737, %v3769
      %v3802 = vmax.f32 %v3738, %v3770
      %v3803 = vmax.f32 %v3739, %v3771
      %v3804 = vmax.f32 %v3740, %v3772
      %v3805 = vmax.f32 %v3741, %v3773
      %v3806 = vmax.f32 %v3742, %v3774
      %v3807 = vmax.f32 %v3743, %v3775
      %v3808 = vmax.f32 %v3744, %v3776
      %v3809 = vmax.f32 %v3745, %v3777
      %v3810 = vmax.f32 %v3746, %v3778
      %v3811 = vmax.f32 %v3747, %v3779
      %v3812 = vmax.f32 %v3748, %v3780
      %v3813 = vmax.f32 %v3749, %v3781
      %v3814 = vmax.f32 %v3750, %v3782
      %v3815 = vmax.f32 %v3751, %v3783
      %v3816 = vmax.f32 %v3752, %v3784
      %v3817 = vmax.f32 %v3753, %v3785
      %v3818 = vmax.f32 %v3754, %v3786
      %v3819 = vmax.f32 %v3755, %v3787
      %v3820 = vmax.f32 %v3756, %v3788
      %v3821 = vmax.f32 %v3757, %v3789
      %v3822 = vmax.f32 %v3758, %v3790
      %v3823 = vmax.f32 %v3759, %v3791
      %v3824 = vmax.f32 %v3760, %v3792
      %v3825 = vmax.f32 %v3761, %v3793
      %v3826 = vsel %vm1420, %v3668, -inf
      %v3827 = vsel %vm1421, %v3669, -inf
      %v3828 = vsel %vm1422, %v3670, -inf
      %v3829 = vsel %vm1423, %v3671, -inf
      %v3830 = vsel %vm1424, %v3672, -inf
      %v3831 = vsel %vm1425, %v3673, -inf
      %v3832 = vsel %vm1426, %v3674, -inf
      %v3833 = vsel %vm1427, %v3675, -inf
      %v3834 = vsel %vm1428, %v3676, -inf
      %v3835 = vsel %vm1429, %v3677, -inf
      %v3836 = vsel %vm1430, %v3678, -inf
      %v3837 = vsel %vm1431, %v3679, -inf
      %v3838 = vsel %vm1432, %v3680, -inf
      %v3839 = vsel %vm1433, %v3681, -inf
      %v3840 = vsel %vm1434, %v3682, -inf
      %v3841 = vsel %vm1435, %v3683, -inf
      %v3842 = vsel %vm1436, %v3684, -inf
      %v3843 = vsel %vm1437, %v3685, -inf
      %v3844 = vsel %vm1438, %v3686, -inf
      %v3845 = vsel %vm1439, %v3687, -inf
      %v3846 = vsel %vm1440, %v3688, -inf
      %v3847 = vsel %vm1441, %v3689, -inf
      %v3848 = vsel %vm1442, %v3690, -inf
      %v3849 = vsel %vm1443, %v3691, -inf
      %v3850 = vsel %vm1444, %v3692, -inf
      %v3851 = vsel %vm1445, %v3693, -inf
      %v3852 = vsel %vm1446, %v3694, -inf
      %v3853 = vsel %vm1447, %v3695, -inf
      %v3854 = vsel %vm1448, %v3696, -inf
      %v3855 = vsel %vm1449, %v3697, -inf
      %v3856 = vsel %vm1450, %v3666, -inf
      %v3857 = vsel %vm1451, %v3667, -inf
      %v3858 = vmax.f32 %v3794, %v3826
      %v3859 = vmax.f32 %v3795, %v3827
      %v3860 = vmax.f32 %v3796, %v3828
      %v3861 = vmax.f32 %v3797, %v3829
      %v3862 = vmax.f32 %v3798, %v3830
      %v3863 = vmax.f32 %v3799, %v3831
      %v3864 = vmax.f32 %v3800, %v3832
      %v3865 = vmax.f32 %v3801, %v3833
      %v3866 = vmax.f32 %v3802, %v3834
      %v3867 = vmax.f32 %v3803, %v3835
      %v3868 = vmax.f32 %v3804, %v3836
      %v3869 = vmax.f32 %v3805, %v3837
      %v3870 = vmax.f32 %v3806, %v3838
      %v3871 = vmax.f32 %v3807, %v3839
      %v3872 = vmax.f32 %v3808, %v3840
      %v3873 = vmax.f32 %v3809, %v3841
      %v3874 = vmax.f32 %v3810, %v3842
      %v3875 = vmax.f32 %v3811, %v3843
      %v3876 = vmax.f32 %v3812, %v3844
      %v3877 = vmax.f32 %v3813, %v3845
      %v3878 = vmax.f32 %v3814, %v3846
      %v3879 = vmax.f32 %v3815, %v3847
      %v3880 = vmax.f32 %v3816, %v3848
      %v3881 = vmax.f32 %v3817, %v3849
      %v3882 = vmax.f32 %v3818, %v3850
      %v3883 = vmax.f32 %v3819, %v3851
      %v3884 = vmax.f32 %v3820, %v3852
      %v3885 = vmax.f32 %v3821, %v3853
      %v3886 = vmax.f32 %v3822, %v3854
      %v3887 = vmax.f32 %v3823, %v3855
      %v3888 = vmax.f32 %v3824, %v3856
      %v3889 = vmax.f32 %v3825, %v3857
      %v3890 = vsel %vm1548, %v3670, -inf
      %v3891 = vsel %vm1549, %v3671, -inf
      %v3892 = vsel %vm1550, %v3672, -inf
      %v3893 = vsel %vm1551, %v3673, -inf
      %v3894 = vsel %vm1552, %v3674, -inf
      %v3895 = vsel %vm1553, %v3675, -inf
      %v3896 = vsel %vm1554, %v3676, -inf
      %v3897 = vsel %vm1555, %v3677, -inf
      %v3898 = vsel %vm1556, %v3678, -inf
      %v3899 = vsel %vm1557, %v3679, -inf
      %v3900 = vsel %vm1558, %v3680, -inf
      %v3901 = vsel %vm1559, %v3681, -inf
      %v3902 = vsel %vm1560, %v3682, -inf
      %v3903 = vsel %vm1561, %v3683, -inf
      %v3904 = vsel %vm1562, %v3684, -inf
      %v3905 = vsel %vm1563, %v3685, -inf
      %v3906 = vsel %vm1564, %v3686, -inf
      %v3907 = vsel %vm1565, %v3687, -inf
      %v3908 = vsel %vm1566, %v3688, -inf
      %v3909 = vsel %vm1567, %v3689, -inf
      %v3910 = vsel %vm1568, %v3690, -inf
      %v3911 = vsel %vm1569, %v3691, -inf
      %v3912 = vsel %vm1570, %v3692, -inf
      %v3913 = vsel %vm1571, %v3693, -inf
      %v3914 = vsel %vm1572, %v3694, -inf
      %v3915 = vsel %vm1573, %v3695, -inf
      %v3916 = vsel %vm1574, %v3696, -inf
      %v3917 = vsel %vm1575, %v3697, -inf
      %v3918 = vsel %vm1576, %v3666, -inf
      %v3919 = vsel %vm1577, %v3667, -inf
      %v3920 = vsel %vm1578, %v3668, -inf
      %v3921 = vsel %vm1579, %v3669, -inf
      %v3922 = vmax.f32 %v3858, %v3890
      %v3923 = vmax.f32 %v3859, %v3891
      %v3924 = vmax.f32 %v3860, %v3892
      %v3925 = vmax.f32 %v3861, %v3893
      %v3926 = vmax.f32 %v3862, %v3894
      %v3927 = vmax.f32 %v3863, %v3895
      %v3928 = vmax.f32 %v3864, %v3896
      %v3929 = vmax.f32 %v3865, %v3897
      %v3930 = vmax.f32 %v3866, %v3898
      %v3931 = vmax.f32 %v3867, %v3899
      %v3932 = vmax.f32 %v3868, %v3900
      %v3933 = vmax.f32 %v3869, %v3901
      %v3934 = vmax.f32 %v3870, %v3902
      %v3935 = vmax.f32 %v3871, %v3903
      %v3936 = vmax.f32 %v3872, %v3904
      %v3937 = vmax.f32 %v3873, %v3905
      %v3938 = vmax.f32 %v3874, %v3906
      %v3939 = vmax.f32 %v3875, %v3907
      %v3940 = vmax.f32 %v3876, %v3908
      %v3941 = vmax.f32 %v3877, %v3909
      %v3942 = vmax.f32 %v3878, %v3910
      %v3943 = vmax.f32 %v3879, %v3911
      %v3944 = vmax.f32 %v3880, %v3912
      %v3945 = vmax.f32 %v3881, %v3913
      %v3946 = vmax.f32 %v3882, %v3914
      %v3947 = vmax.f32 %v3883, %v3915
      %v3948 = vmax.f32 %v3884, %v3916
      %v3949 = vmax.f32 %v3885, %v3917
      %v3950 = vmax.f32 %v3886, %v3918
      %v3951 = vmax.f32 %v3887, %v3919
      %v3952 = vmax.f32 %v3888, %v3920
      %v3953 = vmax.f32 %v3889, %v3921
      %v3954 = vrot.slane %v3922, 6
      %v3955 = vrot.slane %v3923, 6
      %v3956 = vrot.slane %v3924, 6
      %v3957 = vrot.slane %v3925, 6
      %v3958 = vrot.slane %v3926, 6
      %v3959 = vrot.slane %v3927, 6
      %v3960 = vrot.slane %v3928, 6
      %v3961 = vrot.slane %v3929, 6
      %v3962 = vrot.slane %v3930, 6
      %v3963 = vrot.slane %v3931, 6
      %v3964 = vrot.slane %v3932, 6
      %v3965 = vrot.slane %v3933, 6
      %v3966 = vrot.slane %v3934, 6
      %v3967 = vrot.slane %v3935, 6
      %v3968 = vrot.slane %v3936, 6
      %v3969 = vrot.slane %v3937, 6
      %v3970 = vrot.slane %v3938, 6
      %v3971 = vrot.slane %v3939, 6
      %v3972 = vrot.slane %v3940, 6
      %v3973 = vrot.slane %v3941, 6
      %v3974 = vrot.slane %v3942, 6
      %v3975 = vrot.slane %v3943, 6
      %v3976 = vrot.slane %v3944, 6
      %v3977 = vrot.slane %v3945, 6
      %v3978 = vrot.slane %v3946, 6
      %v3979 = vrot.slane %v3947, 6
      %v3980 = vrot.slane %v3948, 6
      %v3981 = vrot.slane %v3949, 6
      %v3982 = vrot.slane %v3950, 6
      %v3983 = vrot.slane %v3951, 6
      %v3984 = vrot.slane %v3952, 6
      %v3985 = vrot.slane %v3953, 6
      %v3986 = vsel %vm1676, %v3984, %v3985
      %v3987 = vsel %vm1676, %v3983, %v3984
      %v3988 = vsel %vm1676, %v3982, %v3983
      %v3989 = vsel %vm1676, %v3981, %v3982
      %v3990 = vsel %vm1676, %v3980, %v3981
      %v3991 = vsel %vm1676, %v3979, %v3980
      %v3992 = vsel %vm1676, %v3978, %v3979
      %v3993 = vsel %vm1676, %v3977, %v3978
      %v3994 = vsel %vm1676, %v3976, %v3977
      %v3995 = vsel %vm1676, %v3975, %v3976
      %v3996 = vsel %vm1676, %v3974, %v3975
      %v3997 = vsel %vm1676, %v3973, %v3974
      %v3998 = vsel %vm1676, %v3972, %v3973
      %v3999 = vsel %vm1676, %v3971, %v3972
      %v4000 = vsel %vm1676, %v3970, %v3971
      %v4001 = vsel %vm1676, %v3969, %v3970
      %v4002 = vsel %vm1676, %v3968, %v3969
      %v4003 = vsel %vm1676, %v3967, %v3968
      %v4004 = vsel %vm1676, %v3966, %v3967
      %v4005 = vsel %vm1676, %v3965, %v3966
      %v4006 = vsel %vm1676, %v3964, %v3965
      %v4007 = vsel %vm1676, %v3963, %v3964
      %v4008 = vsel %vm1676, %v3962, %v3963
      %v4009 = vsel %vm1676, %v3961, %v3962
      %v4010 = vsel %vm1676, %v3960, %v3961
      %v4011 = vsel %vm1676, %v3959, %v3960
      %v4012 = vsel %vm1676, %v3958, %v3959
      %v4013 = vsel %vm1676, %v3957, %v3958
      %v4014 = vsel %vm1676, %v3956, %v3957
      %v4015 = vsel %vm1676, %v3955, %v3956
      %v4016 = vsel %vm1676, %v3954, %v3955
      %v4017 = vsel %vm1676, %v3985, %v3954
      %v4018 = vsel %vm1837, %v4017, -inf
      %v4019 = vsel %vm1838, %v4016, -inf
      %v4020 = vsel %vm1839, %v4015, -inf
      %v4021 = vsel %vm1840, %v4014, -inf
      %v4022 = vsel %vm1841, %v4013, -inf
      %v4023 = vsel %vm1842, %v4012, -inf
      %v4024 = vsel %vm1843, %v4011, -inf
      %v4025 = vsel %vm1844, %v4010, -inf
      %v4026 = vsel %vm1845, %v4009, -inf
      %v4027 = vsel %vm1846, %v4008, -inf
      %v4028 = vsel %vm1847, %v4007, -inf
      %v4029 = vsel %vm1848, %v4006, -inf
      %v4030 = vsel %vm1849, %v4005, -inf
      %v4031 = vsel %vm1850, %v4004, -inf
      %v4032 = vsel %vm1851, %v4003, -inf
      %v4033 = vsel %vm1852, %v4002, -inf
      %v4034 = vsel %vm1853, %v4001, -inf
      %v4035 = vsel %vm1854, %v4000, -inf
      %v4036 = vsel %vm1855, %v3999, -inf
      %v4037 = vsel %vm1856, %v3998, -inf
      %v4038 = vsel %vm1857, %v3997, -inf
      %v4039 = vsel %vm1858, %v3996, -inf
      %v4040 = vsel %vm1859, %v3995, -inf
      %v4041 = vsel %vm1860, %v3994, -inf
      %v4042 = vsel %vm1861, %v3993, -inf
      %v4043 = vsel %vm1862, %v3992, -inf
      %v4044 = vsel %vm1863, %v3991, -inf
      %v4045 = vsel %vm1864, %v3990, -inf
      %v4046 = vsel %vm1865, %v3989, -inf
      %v4047 = vsel %vm1866, %v3988, -inf
      %v4048 = vsel %vm1867, %v3987, -inf
      %v4049 = vsel %vm1868, %v3986, -inf
      %v4050 = vmax.f32 %v3922, %v4018
      %v4051 = vmax.f32 %v3923, %v4019
      %v4052 = vmax.f32 %v3924, %v4020
      %v4053 = vmax.f32 %v3925, %v4021
      %v4054 = vmax.f32 %v3926, %v4022
      %v4055 = vmax.f32 %v3927, %v4023
      %v4056 = vmax.f32 %v3928, %v4024
      %v4057 = vmax.f32 %v3929, %v4025
      %v4058 = vmax.f32 %v3930, %v4026
      %v4059 = vmax.f32 %v3931, %v4027
      %v4060 = vmax.f32 %v3932, %v4028
      %v4061 = vmax.f32 %v3933, %v4029
      %v4062 = vmax.f32 %v3934, %v4030
      %v4063 = vmax.f32 %v3935, %v4031
      %v4064 = vmax.f32 %v3936, %v4032
      %v4065 = vmax.f32 %v3937, %v4033
      %v4066 = vmax.f32 %v3938, %v4034
      %v4067 = vmax.f32 %v3939, %v4035
      %v4068 = vmax.f32 %v3940, %v4036
      %v4069 = vmax.f32 %v3941, %v4037
      %v4070 = vmax.f32 %v3942, %v4038
      %v4071 = vmax.f32 %v3943, %v4039
      %v4072 = vmax.f32 %v3944, %v4040
      %v4073 = vmax.f32 %v3945, %v4041
      %v4074 = vmax.f32 %v3946, %v4042
      %v4075 = vmax.f32 %v3947, %v4043
      %v4076 = vmax.f32 %v3948, %v4044
      %v4077 = vmax.f32 %v3949, %v4045
      %v4078 = vmax.f32 %v3950, %v4046
      %v4079 = vmax.f32 %v3951, %v4047
      %v4080 = vmax.f32 %v3952, %v4048
      %v4081 = vmax.f32 %v3953, %v4049
      %v4082 = vrot.slane %v3922, 7
      %v4083 = vrot.slane %v3923, 7
      %v4084 = vrot.slane %v3924, 7
      %v4085 = vrot.slane %v3925, 7
      %v4086 = vrot.slane %v3926, 7
      %v4087 = vrot.slane %v3927, 7
      %v4088 = vrot.slane %v3928, 7
      %v4089 = vrot.slane %v3929, 7
      %v4090 = vrot.slane %v3930, 7
      %v4091 = vrot.slane %v3931, 7
      %v4092 = vrot.slane %v3932, 7
      %v4093 = vrot.slane %v3933, 7
      %v4094 = vrot.slane %v3934, 7
      %v4095 = vrot.slane %v3935, 7
      %v4096 = vrot.slane %v3936, 7
      %v4097 = vrot.slane %v3937, 7
      %v4098 = vrot.slane %v3938, 7
      %v4099 = vrot.slane %v3939, 7
      %v4100 = vrot.slane %v3940, 7
      %v4101 = vrot.slane %v3941, 7
      %v4102 = vrot.slane %v3942, 7
      %v4103 = vrot.slane %v3943, 7
      %v4104 = vrot.slane %v3944, 7
      %v4105 = vrot.slane %v3945, 7
      %v4106 = vrot.slane %v3946, 7
      %v4107 = vrot.slane %v3947, 7
      %v4108 = vrot.slane %v3948, 7
      %v4109 = vrot.slane %v3949, 7
      %v4110 = vrot.slane %v3950, 7
      %v4111 = vrot.slane %v3951, 7
      %v4112 = vrot.slane %v3952, 7
      %v4113 = vrot.slane %v3953, 7
      %v4114 = vsel %vm1965, %v4112, %v4113
      %v4115 = vsel %vm1965, %v4111, %v4112
      %v4116 = vsel %vm1965, %v4110, %v4111
      %v4117 = vsel %vm1965, %v4109, %v4110
      %v4118 = vsel %vm1965, %v4108, %v4109
      %v4119 = vsel %vm1965, %v4107, %v4108
      %v4120 = vsel %vm1965, %v4106, %v4107
      %v4121 = vsel %vm1965, %v4105, %v4106
      %v4122 = vsel %vm1965, %v4104, %v4105
      %v4123 = vsel %vm1965, %v4103, %v4104
      %v4124 = vsel %vm1965, %v4102, %v4103
      %v4125 = vsel %vm1965, %v4101, %v4102
      %v4126 = vsel %vm1965, %v4100, %v4101
      %v4127 = vsel %vm1965, %v4099, %v4100
      %v4128 = vsel %vm1965, %v4098, %v4099
      %v4129 = vsel %vm1965, %v4097, %v4098
      %v4130 = vsel %vm1965, %v4096, %v4097
      %v4131 = vsel %vm1965, %v4095, %v4096
      %v4132 = vsel %vm1965, %v4094, %v4095
      %v4133 = vsel %vm1965, %v4093, %v4094
      %v4134 = vsel %vm1965, %v4092, %v4093
      %v4135 = vsel %vm1965, %v4091, %v4092
      %v4136 = vsel %vm1965, %v4090, %v4091
      %v4137 = vsel %vm1965, %v4089, %v4090
      %v4138 = vsel %vm1965, %v4088, %v4089
      %v4139 = vsel %vm1965, %v4087, %v4088
      %v4140 = vsel %vm1965, %v4086, %v4087
      %v4141 = vsel %vm1965, %v4085, %v4086
      %v4142 = vsel %vm1965, %v4084, %v4085
      %v4143 = vsel %vm1965, %v4083, %v4084
      %v4144 = vsel %vm1965, %v4082, %v4083
      %v4145 = vsel %vm1965, %v4113, %v4082
      %v4146 = vsel %vm2126, %v4145, -inf
      %v4147 = vsel %vm2127, %v4144, -inf
      %v4148 = vsel %vm2128, %v4143, -inf
      %v4149 = vsel %vm2129, %v4142, -inf
      %v4150 = vsel %vm2130, %v4141, -inf
      %v4151 = vsel %vm2131, %v4140, -inf
      %v4152 = vsel %vm2132, %v4139, -inf
      %v4153 = vsel %vm2133, %v4138, -inf
      %v4154 = vsel %vm2134, %v4137, -inf
      %v4155 = vsel %vm2135, %v4136, -inf
      %v4156 = vsel %vm2136, %v4135, -inf
      %v4157 = vsel %vm2137, %v4134, -inf
      %v4158 = vsel %vm2138, %v4133, -inf
      %v4159 = vsel %vm2139, %v4132, -inf
      %v4160 = vsel %vm2140, %v4131, -inf
      %v4161 = vsel %vm2141, %v4130, -inf
      %v4162 = vsel %vm2142, %v4129, -inf
      %v4163 = vsel %vm2143, %v4128, -inf
      %v4164 = vsel %vm2144, %v4127, -inf
      %v4165 = vsel %vm2145, %v4126, -inf
      %v4166 = vsel %vm2146, %v4125, -inf
      %v4167 = vsel %vm2147, %v4124, -inf
      %v4168 = vsel %vm2148, %v4123, -inf
      %v4169 = vsel %vm2149, %v4122, -inf
      %v4170 = vsel %vm2150, %v4121, -inf
      %v4171 = vsel %vm2151, %v4120, -inf
      %v4172 = vsel %vm2152, %v4119, -inf
      %v4173 = vsel %vm2153, %v4118, -inf
      %v4174 = vsel %vm2154, %v4117, -inf
      %v4175 = vsel %vm2155, %v4116, -inf
      %v4176 = vsel %vm2156, %v4115, -inf
      %v4177 = vsel %vm2157, %v4114, -inf
      %v4178 = vmax.f32 %v4050, %v4146
      %v4179 = vmax.f32 %v4051, %v4147
      %v4180 = vmax.f32 %v4052, %v4148
      %v4181 = vmax.f32 %v4053, %v4149
      %v4182 = vmax.f32 %v4054, %v4150
      %v4183 = vmax.f32 %v4055, %v4151
      %v4184 = vmax.f32 %v4056, %v4152
      %v4185 = vmax.f32 %v4057, %v4153
      %v4186 = vmax.f32 %v4058, %v4154
      %v4187 = vmax.f32 %v4059, %v4155
      %v4188 = vmax.f32 %v4060, %v4156
      %v4189 = vmax.f32 %v4061, %v4157
      %v4190 = vmax.f32 %v4062, %v4158
      %v4191 = vmax.f32 %v4063, %v4159
      %v4192 = vmax.f32 %v4064, %v4160
      %v4193 = vmax.f32 %v4065, %v4161
      %v4194 = vmax.f32 %v4066, %v4162
      %v4195 = vmax.f32 %v4067, %v4163
      %v4196 = vmax.f32 %v4068, %v4164
      %v4197 = vmax.f32 %v4069, %v4165
      %v4198 = vmax.f32 %v4070, %v4166
      %v4199 = vmax.f32 %v4071, %v4167
      %v4200 = vmax.f32 %v4072, %v4168
      %v4201 = vmax.f32 %v4073, %v4169
      %v4202 = vmax.f32 %v4074, %v4170
      %v4203 = vmax.f32 %v4075, %v4171
      %v4204 = vmax.f32 %v4076, %v4172
      %v4205 = vmax.f32 %v4077, %v4173
      %v4206 = vmax.f32 %v4078, %v4174
      %v4207 = vmax.f32 %v4079, %v4175
      %v4208 = vmax.f32 %v4080, %v4176
      %v4209 = vmax.f32 %v4081, %v4177
      %v4210 = vrot.slane %v3922, 1
      %v4211 = vrot.slane %v3923, 1
      %v4212 = vrot.slane %v3924, 1
      %v4213 = vrot.slane %v3925, 1
      %v4214 = vrot.slane %v3926, 1
      %v4215 = vrot.slane %v3927, 1
      %v4216 = vrot.slane %v3928, 1
      %v4217 = vrot.slane %v3929, 1
      %v4218 = vrot.slane %v3930, 1
      %v4219 = vrot.slane %v3931, 1
      %v4220 = vrot.slane %v3932, 1
      %v4221 = vrot.slane %v3933, 1
      %v4222 = vrot.slane %v3934, 1
      %v4223 = vrot.slane %v3935, 1
      %v4224 = vrot.slane %v3936, 1
      %v4225 = vrot.slane %v3937, 1
      %v4226 = vrot.slane %v3938, 1
      %v4227 = vrot.slane %v3939, 1
      %v4228 = vrot.slane %v3940, 1
      %v4229 = vrot.slane %v3941, 1
      %v4230 = vrot.slane %v3942, 1
      %v4231 = vrot.slane %v3943, 1
      %v4232 = vrot.slane %v3944, 1
      %v4233 = vrot.slane %v3945, 1
      %v4234 = vrot.slane %v3946, 1
      %v4235 = vrot.slane %v3947, 1
      %v4236 = vrot.slane %v3948, 1
      %v4237 = vrot.slane %v3949, 1
      %v4238 = vrot.slane %v3950, 1
      %v4239 = vrot.slane %v3951, 1
      %v4240 = vrot.slane %v3952, 1
      %v4241 = vrot.slane %v3953, 1
      %v4242 = vsel %vm2254, %v4240, %v4241
      %v4243 = vsel %vm2254, %v4239, %v4240
      %v4244 = vsel %vm2254, %v4238, %v4239
      %v4245 = vsel %vm2254, %v4237, %v4238
      %v4246 = vsel %vm2254, %v4236, %v4237
      %v4247 = vsel %vm2254, %v4235, %v4236
      %v4248 = vsel %vm2254, %v4234, %v4235
      %v4249 = vsel %vm2254, %v4233, %v4234
      %v4250 = vsel %vm2254, %v4232, %v4233
      %v4251 = vsel %vm2254, %v4231, %v4232
      %v4252 = vsel %vm2254, %v4230, %v4231
      %v4253 = vsel %vm2254, %v4229, %v4230
      %v4254 = vsel %vm2254, %v4228, %v4229
      %v4255 = vsel %vm2254, %v4227, %v4228
      %v4256 = vsel %vm2254, %v4226, %v4227
      %v4257 = vsel %vm2254, %v4225, %v4226
      %v4258 = vsel %vm2254, %v4224, %v4225
      %v4259 = vsel %vm2254, %v4223, %v4224
      %v4260 = vsel %vm2254, %v4222, %v4223
      %v4261 = vsel %vm2254, %v4221, %v4222
      %v4262 = vsel %vm2254, %v4220, %v4221
      %v4263 = vsel %vm2254, %v4219, %v4220
      %v4264 = vsel %vm2254, %v4218, %v4219
      %v4265 = vsel %vm2254, %v4217, %v4218
      %v4266 = vsel %vm2254, %v4216, %v4217
      %v4267 = vsel %vm2254, %v4215, %v4216
      %v4268 = vsel %vm2254, %v4214, %v4215
      %v4269 = vsel %vm2254, %v4213, %v4214
      %v4270 = vsel %vm2254, %v4212, %v4213
      %v4271 = vsel %vm2254, %v4211, %v4212
      %v4272 = vsel %vm2254, %v4210, %v4211
      %v4273 = vsel %vm2254, %v4241, %v4210
      %v4274 = vsel %vm2415, %v4272, -inf
      %v4275 = vsel %vm2416, %v4271, -inf
      %v4276 = vsel %vm2417, %v4270, -inf
      %v4277 = vsel %vm2418, %v4269, -inf
      %v4278 = vsel %vm2419, %v4268, -inf
      %v4279 = vsel %vm2420, %v4267, -inf
      %v4280 = vsel %vm2421, %v4266, -inf
      %v4281 = vsel %vm2422, %v4265, -inf
      %v4282 = vsel %vm2423, %v4264, -inf
      %v4283 = vsel %vm2424, %v4263, -inf
      %v4284 = vsel %vm2425, %v4262, -inf
      %v4285 = vsel %vm2426, %v4261, -inf
      %v4286 = vsel %vm2427, %v4260, -inf
      %v4287 = vsel %vm2428, %v4259, -inf
      %v4288 = vsel %vm2429, %v4258, -inf
      %v4289 = vsel %vm2430, %v4257, -inf
      %v4290 = vsel %vm2431, %v4256, -inf
      %v4291 = vsel %vm2432, %v4255, -inf
      %v4292 = vsel %vm2433, %v4254, -inf
      %v4293 = vsel %vm2434, %v4253, -inf
      %v4294 = vsel %vm2435, %v4252, -inf
      %v4295 = vsel %vm2436, %v4251, -inf
      %v4296 = vsel %vm2437, %v4250, -inf
      %v4297 = vsel %vm2438, %v4249, -inf
      %v4298 = vsel %vm2439, %v4248, -inf
      %v4299 = vsel %vm2440, %v4247, -inf
      %v4300 = vsel %vm2441, %v4246, -inf
      %v4301 = vsel %vm2442, %v4245, -inf
      %v4302 = vsel %vm2443, %v4244, -inf
      %v4303 = vsel %vm2444, %v4243, -inf
      %v4304 = vsel %vm2445, %v4242, -inf
      %v4305 = vsel %vm2446, %v4273, -inf
      %v4306 = vmax.f32 %v4178, %v4274
      %v4307 = vmax.f32 %v4179, %v4275
      %v4308 = vmax.f32 %v4180, %v4276
      %v4309 = vmax.f32 %v4181, %v4277
      %v4310 = vmax.f32 %v4182, %v4278
      %v4311 = vmax.f32 %v4183, %v4279
      %v4312 = vmax.f32 %v4184, %v4280
      %v4313 = vmax.f32 %v4185, %v4281
      %v4314 = vmax.f32 %v4186, %v4282
      %v4315 = vmax.f32 %v4187, %v4283
      %v4316 = vmax.f32 %v4188, %v4284
      %v4317 = vmax.f32 %v4189, %v4285
      %v4318 = vmax.f32 %v4190, %v4286
      %v4319 = vmax.f32 %v4191, %v4287
      %v4320 = vmax.f32 %v4192, %v4288
      %v4321 = vmax.f32 %v4193, %v4289
      %v4322 = vmax.f32 %v4194, %v4290
      %v4323 = vmax.f32 %v4195, %v4291
      %v4324 = vmax.f32 %v4196, %v4292
      %v4325 = vmax.f32 %v4197, %v4293
      %v4326 = vmax.f32 %v4198, %v4294
      %v4327 = vmax.f32 %v4199, %v4295
      %v4328 = vmax.f32 %v4200, %v4296
      %v4329 = vmax.f32 %v4201, %v4297
      %v4330 = vmax.f32 %v4202, %v4298
      %v4331 = vmax.f32 %v4203, %v4299
      %v4332 = vmax.f32 %v4204, %v4300
      %v4333 = vmax.f32 %v4205, %v4301
      %v4334 = vmax.f32 %v4206, %v4302
      %v4335 = vmax.f32 %v4207, %v4303
      %v4336 = vmax.f32 %v4208, %v4304
      %v4337 = vmax.f32 %v4209, %v4305
      %v4338 = vrot.slane %v3922, 2
      %v4339 = vrot.slane %v3923, 2
      %v4340 = vrot.slane %v3924, 2
      %v4341 = vrot.slane %v3925, 2
      %v4342 = vrot.slane %v3926, 2
      %v4343 = vrot.slane %v3927, 2
      %v4344 = vrot.slane %v3928, 2
      %v4345 = vrot.slane %v3929, 2
      %v4346 = vrot.slane %v3930, 2
      %v4347 = vrot.slane %v3931, 2
      %v4348 = vrot.slane %v3932, 2
      %v4349 = vrot.slane %v3933, 2
      %v4350 = vrot.slane %v3934, 2
      %v4351 = vrot.slane %v3935, 2
      %v4352 = vrot.slane %v3936, 2
      %v4353 = vrot.slane %v3937, 2
      %v4354 = vrot.slane %v3938, 2
      %v4355 = vrot.slane %v3939, 2
      %v4356 = vrot.slane %v3940, 2
      %v4357 = vrot.slane %v3941, 2
      %v4358 = vrot.slane %v3942, 2
      %v4359 = vrot.slane %v3943, 2
      %v4360 = vrot.slane %v3944, 2
      %v4361 = vrot.slane %v3945, 2
      %v4362 = vrot.slane %v3946, 2
      %v4363 = vrot.slane %v3947, 2
      %v4364 = vrot.slane %v3948, 2
      %v4365 = vrot.slane %v3949, 2
      %v4366 = vrot.slane %v3950, 2
      %v4367 = vrot.slane %v3951, 2
      %v4368 = vrot.slane %v3952, 2
      %v4369 = vrot.slane %v3953, 2
      %v4370 = vsel %vm2543, %v4368, %v4369
      %v4371 = vsel %vm2543, %v4367, %v4368
      %v4372 = vsel %vm2543, %v4366, %v4367
      %v4373 = vsel %vm2543, %v4365, %v4366
      %v4374 = vsel %vm2543, %v4364, %v4365
      %v4375 = vsel %vm2543, %v4363, %v4364
      %v4376 = vsel %vm2543, %v4362, %v4363
      %v4377 = vsel %vm2543, %v4361, %v4362
      %v4378 = vsel %vm2543, %v4360, %v4361
      %v4379 = vsel %vm2543, %v4359, %v4360
      %v4380 = vsel %vm2543, %v4358, %v4359
      %v4381 = vsel %vm2543, %v4357, %v4358
      %v4382 = vsel %vm2543, %v4356, %v4357
      %v4383 = vsel %vm2543, %v4355, %v4356
      %v4384 = vsel %vm2543, %v4354, %v4355
      %v4385 = vsel %vm2543, %v4353, %v4354
      %v4386 = vsel %vm2543, %v4352, %v4353
      %v4387 = vsel %vm2543, %v4351, %v4352
      %v4388 = vsel %vm2543, %v4350, %v4351
      %v4389 = vsel %vm2543, %v4349, %v4350
      %v4390 = vsel %vm2543, %v4348, %v4349
      %v4391 = vsel %vm2543, %v4347, %v4348
      %v4392 = vsel %vm2543, %v4346, %v4347
      %v4393 = vsel %vm2543, %v4345, %v4346
      %v4394 = vsel %vm2543, %v4344, %v4345
      %v4395 = vsel %vm2543, %v4343, %v4344
      %v4396 = vsel %vm2543, %v4342, %v4343
      %v4397 = vsel %vm2543, %v4341, %v4342
      %v4398 = vsel %vm2543, %v4340, %v4341
      %v4399 = vsel %vm2543, %v4339, %v4340
      %v4400 = vsel %vm2543, %v4338, %v4339
      %v4401 = vsel %vm2543, %v4369, %v4338
      %v4402 = vsel %vm2704, %v4400, -inf
      %v4403 = vsel %vm2705, %v4399, -inf
      %v4404 = vsel %vm2706, %v4398, -inf
      %v4405 = vsel %vm2707, %v4397, -inf
      %v4406 = vsel %vm2708, %v4396, -inf
      %v4407 = vsel %vm2709, %v4395, -inf
      %v4408 = vsel %vm2710, %v4394, -inf
      %v4409 = vsel %vm2711, %v4393, -inf
      %v4410 = vsel %vm2712, %v4392, -inf
      %v4411 = vsel %vm2713, %v4391, -inf
      %v4412 = vsel %vm2714, %v4390, -inf
      %v4413 = vsel %vm2715, %v4389, -inf
      %v4414 = vsel %vm2716, %v4388, -inf
      %v4415 = vsel %vm2717, %v4387, -inf
      %v4416 = vsel %vm2718, %v4386, -inf
      %v4417 = vsel %vm2719, %v4385, -inf
      %v4418 = vsel %vm2720, %v4384, -inf
      %v4419 = vsel %vm2721, %v4383, -inf
      %v4420 = vsel %vm2722, %v4382, -inf
      %v4421 = vsel %vm2723, %v4381, -inf
      %v4422 = vsel %vm2724, %v4380, -inf
      %v4423 = vsel %vm2725, %v4379, -inf
      %v4424 = vsel %vm2726, %v4378, -inf
      %v4425 = vsel %vm2727, %v4377, -inf
      %v4426 = vsel %vm2728, %v4376, -inf
      %v4427 = vsel %vm2729, %v4375, -inf
      %v4428 = vsel %vm2730, %v4374, -inf
      %v4429 = vsel %vm2731, %v4373, -inf
      %v4430 = vsel %vm2732, %v4372, -inf
      %v4431 = vsel %vm2733, %v4371, -inf
      %v4432 = vsel %vm2734, %v4370, -inf
      %v4433 = vsel %vm2735, %v4401, -inf
      %v4434 = vmax.f32 %v4306, %v4402
      %v4435 = vmax.f32 %v4307, %v4403
      %v4436 = vmax.f32 %v4308, %v4404
      %v4437 = vmax.f32 %v4309, %v4405
      %v4438 = vmax.f32 %v4310, %v4406
      %v4439 = vmax.f32 %v4311, %v4407
      %v4440 = vmax.f32 %v4312, %v4408
      %v4441 = vmax.f32 %v4313, %v4409
      %v4442 = vmax.f32 %v4314, %v4410
      %v4443 = vmax.f32 %v4315, %v4411
      %v4444 = vmax.f32 %v4316, %v4412
      %v4445 = vmax.f32 %v4317, %v4413
      %v4446 = vmax.f32 %v4318, %v4414
      %v4447 = vmax.f32 %v4319, %v4415
      %v4448 = vmax.f32 %v4320, %v4416
      %v4449 = vmax.f32 %v4321, %v4417
      %v4450 = vmax.f32 %v4322, %v4418
      %v4451 = vmax.f32 %v4323, %v4419
      %v4452 = vmax.f32 %v4324, %v4420
      %v4453 = vmax.f32 %v4325, %v4421
      %v4454 = vmax.f32 %v4326, %v4422
      %v4455 = vmax.f32 %v4327, %v4423
      %v4456 = vmax.f32 %v4328, %v4424
      %v4457 = vmax.f32 %v4329, %v4425
      %v4458 = vmax.f32 %v4330, %v4426
      %v4459 = vmax.f32 %v4331, %v4427
      %v4460 = vmax.f32 %v4332, %v4428
      %v4461 = vmax.f32 %v4333, %v4429
      %v4462 = vmax.f32 %v4334, %v4430
      %v4463 = vmax.f32 %v4335, %v4431
      %v4464 = vmax.f32 %v4336, %v4432
      %v4465 = vmax.f32 %v4337, %v4433
      %v4466 = vpack.c.bf16 %v3667, %v3666
      %v4467 = vpack.c.bf16 %v3669, %v3668
      %v4468 = vpack.c.bf16 %v3671, %v3670
      %v4469 = vpack.c.bf16 %v3673, %v3672
      %v4470 = vpack.c.bf16 %v3675, %v3674
      %v4471 = vpack.c.bf16 %v3677, %v3676
      %v4472 = vpack.c.bf16 %v3679, %v3678
      %v4473 = vpack.c.bf16 %v3681, %v3680
      %v4474 = vpack.c.bf16 %v3683, %v3682
      %v4475 = vpack.c.bf16 %v3685, %v3684
      %v4476 = vpack.c.bf16 %v3687, %v3686
      %v4477 = vpack.c.bf16 %v3689, %v3688
      %v4478 = vpack.c.bf16 %v3691, %v3690
      %v4479 = vpack.c.bf16 %v3693, %v3692
      %v4480 = vpack.c.bf16 %v3695, %v3694
      %v4481 = vpack.c.bf16 %v3697, %v3696
      %v4482 = vpack.c.bf16 %v4435, %v4434
      %v4483 = vpack.c.bf16 %v4437, %v4436
      %v4484 = vpack.c.bf16 %v4439, %v4438
      %v4485 = vpack.c.bf16 %v4441, %v4440
      %v4486 = vpack.c.bf16 %v4443, %v4442
      %v4487 = vpack.c.bf16 %v4445, %v4444
      %v4488 = vpack.c.bf16 %v4447, %v4446
      %v4489 = vpack.c.bf16 %v4449, %v4448
      %v4490 = vpack.c.bf16 %v4451, %v4450
      %v4491 = vpack.c.bf16 %v4453, %v4452
      %v4492 = vpack.c.bf16 %v4455, %v4454
      %v4493 = vpack.c.bf16 %v4457, %v4456
      %v4494 = vpack.c.bf16 %v4459, %v4458
      %v4495 = vpack.c.bf16 %v4461, %v4460
      %v4496 = vpack.c.bf16 %v4463, %v4462
      %v4497 = vpack.c.bf16 %v4465, %v4464
      %4514 = vrot.lane.b32.xlu0 %v4482, 8
      %v4515 = vpop.permute.xlu0 %4514
      %4516 = vrot.lane.b32.xlu0 %v4483, 8
      %v4517 = vpop.permute.xlu0 %4516
      %4518 = vrot.lane.b32.xlu0 %v4484, 8
      %v4519 = vpop.permute.xlu0 %4518
      %4520 = vrot.lane.b32.xlu0 %v4485, 8
      %v4521 = vpop.permute.xlu0 %4520
      %4522 = vrot.lane.b32.xlu0 %v4486, 8
      %v4523 = vpop.permute.xlu0 %4522
      %4524 = vrot.lane.b32.xlu0 %v4487, 8
      %v4525 = vpop.permute.xlu0 %4524
      %4526 = vrot.lane.b32.xlu0 %v4488, 8
      %v4527 = vpop.permute.xlu0 %4526
      %4528 = vrot.lane.b32.xlu0 %v4489, 8
      %v4529 = vpop.permute.xlu0 %4528
      %4530 = vrot.lane.b32.xlu0 %v4490, 8
      %v4531 = vpop.permute.xlu0 %4530
      %4532 = vrot.lane.b32.xlu0 %v4491, 8
      %v4533 = vpop.permute.xlu0 %4532
      %4534 = vrot.lane.b32.xlu0 %v4492, 8
      %v4535 = vpop.permute.xlu0 %4534
      %4536 = vrot.lane.b32.xlu0 %v4493, 8
      %v4537 = vpop.permute.xlu0 %4536
      %4538 = vrot.lane.b32.xlu0 %v4494, 8
      %v4539 = vpop.permute.xlu0 %4538
      %4540 = vrot.lane.b32.xlu0 %v4495, 8
      %v4541 = vpop.permute.xlu0 %4540
      %4542 = vrot.lane.b32.xlu0 %v4496, 8
      %v4543 = vpop.permute.xlu0 %4542
      %4544 = vrot.lane.b32.xlu0 %v4497, 8
      %v4545 = vpop.permute.xlu0 %4544
      %v4548 = vsel %vm694, %v4466, %v4515
      %v4551 = vsel %vm694, %v4467, %v4517
      %v4554 = vsel %vm694, %v4468, %v4519
      %v4557 = vsel %vm694, %v4469, %v4521
      %v4560 = vsel %vm694, %v4470, %v4523
      %v4563 = vsel %vm694, %v4471, %v4525
      %v4566 = vsel %vm694, %v4472, %v4527
      %v4569 = vsel %vm694, %v4473, %v4529
      %v4572 = vsel %vm694, %v4474, %v4531
      %v4575 = vsel %vm694, %v4475, %v4533
      %v4578 = vsel %vm694, %v4476, %v4535
      %v4581 = vsel %vm694, %v4477, %v4537
      %v4584 = vsel %vm694, %v4478, %v4539
      %v4587 = vsel %vm694, %v4479, %v4541
      %v4590 = vsel %vm694, %v4480, %v4543
      %v4593 = vsel %vm694, %v4481, %v4545
      %s4594 = scalar_lea.vmem %s4, 8
      %v4595 = vld [vmem:[%s4594] sm:$0xf]
      %v4596 = vld [vmem:[%s4594 + $0x4] sm:$0xf]
      %v4599 = vunpack.c.l.b16 %v4595
      %v4600 = vunpack.c.l.b16 %v4596
      %v4601 = vpack.c.b16 %v4600, %v4599
      %vm4603 = vcmask 130048
      %v4604 = vsel %vm4603, %v4548, 0
      %v4606 = vsel %vm4603, %v4551, 0
      %v4608 = vsel %vm4603, %v4554, 0
      %v4610 = vsel %vm4603, %v4557, 0
      %v4612 = vsel %vm4603, %v4560, 0
      %v4614 = vsel %vm4603, %v4563, 0
      %v4616 = vsel %vm4603, %v4566, 0
      %v4618 = vsel %vm4603, %v4569, 0
      %v4620 = vsel %vm4603, %v4572, 0
      %v4622 = vsel %vm4603, %v4575, 0
      %v4624 = vsel %vm4603, %v4578, 0
      %v4626 = vsel %vm4603, %v4581, 0
      %v4628 = vsel %vm4603, %v4584, 0
      %v4630 = vsel %vm4603, %v4587, 0
      %v4632 = vsel %vm4603, %v4590, 0
      %v4634 = vsel %vm4603, %v4593, 0
      %4636 = vmatprep.subr.bf16.mxu0 0
      %4637 = vmatpush1.bf16.msra.mxu0 %v4601
      %4638 = vmatprep.subr.bf16.mxu0 0
      %4639 = vmatpush1.bf16.msra.mxu0 0
      %4640 = vmatprep.subr.bf16.mxu0 0
      %4641 = vmatpush1.bf16.msra.mxu0 0
      %4642 = vmatprep.subr.bf16.mxu0 0
      %4643 = vmatpush1.bf16.msra.mxu0 0
      %4644 = vmatprep.subr.bf16.mxu0 0
      %4645 = vmatpush1.bf16.msra.mxu0 0
      %4646 = vmatprep.subr.bf16.mxu0 0
      %4647 = vmatpush1.bf16.msra.mxu0 0
      %4648 = vmatprep.subr.bf16.mxu0 0
      %4649 = vmatpush1.bf16.msra.mxu0 0
      %4650 = vmatprep.subr.bf16.mxu0 0
      %4651 = vmatpush1.bf16.msra.mxu0 0
      %4652 = vmatprep.subr.bf16.mxu0 0
      %4653 = vmatpush1.bf16.msra.mxu0 0
      %4654 = vmatprep.subr.bf16.mxu0 0
      %4655 = vmatpush1.bf16.msra.mxu0 0
      %4656 = vmatprep.subr.bf16.mxu0 0
      %4657 = vmatpush1.bf16.msra.mxu0 0
      %4658 = vmatprep.subr.bf16.mxu0 0
      %4659 = vmatpush1.bf16.msra.mxu0 0
      %4660 = vmatprep.subr.bf16.mxu0 0
      %4661 = vmatpush1.bf16.msra.mxu0 0
      %4662 = vmatprep.subr.bf16.mxu0 0
      %4663 = vmatpush1.bf16.msra.mxu0 0
      %4664 = vmatprep.subr.bf16.mxu0 0
      %4665 = vmatpush1.bf16.msra.mxu0 0
      %4666 = vmatprep.subr.bf16.mxu0 0
      %4667 = vmatpush1.bf16.msra.mxu0 0
      %4668 = vmatprep.mubr.bf16.mxu0 0
      %4669 = vmatmul.mubr.bf16.gmra.mrb[0].mxu0 %v4604
      %v4670 = vpop.f32.mrb[0].mxu0
      %v4671 = vadd.f32 0.0, %v4670
      %v4672 = vpop.f32.mrb[0].mxu0
      %v4673 = vpop.f32.mrb[0].mxu0
      %v4674 = vadd.f32 0.0, %v4673
      %v4675 = vpop.f32.mrb[0].mxu0
      %4676 = vmatprep.mubr.bf16.mxu0 0
      %4677 = vmatmul.mubr.bf16.gmra.mrb[0].mxu0 %v4606
      %v4678 = vpop.f32.mrb[0].mxu0
      %v4679 = vadd.f32 0.0, %v4678
      %v4680 = vpop.f32.mrb[0].mxu0
      %v4681 = vpop.f32.mrb[0].mxu0
      %v4682 = vadd.f32 0.0, %v4681
      %v4683 = vpop.f32.mrb[0].mxu0
      %4684 = vmatprep.mubr.bf16.mxu0 0
      %4685 = vmatmul.mubr.bf16.gmra.mrb[0].mxu0 %v4608
      %v4686 = vpop.f32.mrb[0].mxu0
      %v4687 = vadd.f32 0.0, %v4686
      %v4688 = vpop.f32.mrb[0].mxu0
      %v4689 = vpop.f32.mrb[0].mxu0
      %v4690 = vadd.f32 0.0, %v4689
      %v4691 = vpop.f32.mrb[0].mxu0
      %4692 = vmatprep.mubr.bf16.mxu0 0
      %4693 = vmatmul.mubr.bf16.gmra.mrb[0].mxu0 %v4610
      %v4694 = vpop.f32.mrb[0].mxu0
      %v4695 = vadd.f32 0.0, %v4694
      %v4696 = vpop.f32.mrb[0].mxu0
      %v4697 = vpop.f32.mrb[0].mxu0
      %v4698 = vadd.f32 0.0, %v4697
      %v4699 = vpop.f32.mrb[0].mxu0
      %4700 = vmatprep.mubr.bf16.mxu0 0
      %4701 = vmatmul.mubr.bf16.gmra.mrb[0].mxu0 %v4612
      %v4702 = vpop.f32.mrb[0].mxu0
      %v4703 = vadd.f32 0.0, %v4702
      %v4704 = vpop.f32.mrb[0].mxu0
      %v4705 = vpop.f32.mrb[0].mxu0
      %v4706 = vadd.f32 0.0, %v4705
      %v4707 = vpop.f32.mrb[0].mxu0
      %4708 = vmatprep.mubr.bf16.mxu0 0
      %4709 = vmatmul.mubr.bf16.gmra.mrb[0].mxu0 %v4614
      %v4710 = vpop.f32.mrb[0].mxu0
      %v4711 = vadd.f32 0.0, %v4710
      %v4712 = vpop.f32.mrb[0].mxu0
      %v4713 = vpop.f32.mrb[0].mxu0
      %v4714 = vadd.f32 0.0, %v4713
      %v4715 = vpop.f32.mrb[0].mxu0
      %4716 = vmatprep.mubr.bf16.mxu0 0
      %4717 = vmatmul.mubr.bf16.gmra.mrb[0].mxu0 %v4616
      %v4718 = vpop.f32.mrb[0].mxu0
      %v4719 = vadd.f32 0.0, %v4718
      %v4720 = vpop.f32.mrb[0].mxu0
      %v4721 = vpop.f32.mrb[0].mxu0
      %v4722 = vadd.f32 0.0, %v4721
      %v4723 = vpop.f32.mrb[0].mxu0
      %4724 = vmatprep.mubr.bf16.mxu0 0
      %4725 = vmatmul.mubr.bf16.gmra.mrb[0].mxu0 %v4618
      %v4726 = vpop.f32.mrb[0].mxu0
      %v4727 = vadd.f32 0.0, %v4726
      %v4728 = vpop.f32.mrb[0].mxu0
      %v4729 = vpop.f32.mrb[0].mxu0
      %v4730 = vadd.f32 0.0, %v4729
      %v4731 = vpop.f32.mrb[0].mxu0
      %4732 = vmatprep.mubr.bf16.mxu0 0
      %4733 = vmatmul.mubr.bf16.gmra.mrb[0].mxu0 %v4620
      %v4734 = vpop.f32.mrb[0].mxu0
      %v4735 = vadd.f32 0.0, %v4734
      %v4736 = vpop.f32.mrb[0].mxu0
      %v4737 = vpop.f32.mrb[0].mxu0
      %v4738 = vadd.f32 0.0, %v4737
      %v4739 = vpop.f32.mrb[0].mxu0
      %4740 = vmatprep.mubr.bf16.mxu0 0
      %4741 = vmatmul.mubr.bf16.gmra.mrb[0].mxu0 %v4622
      %v4742 = vpop.f32.mrb[0].mxu0
      %v4743 = vadd.f32 0.0, %v4742
      %v4744 = vpop.f32.mrb[0].mxu0
      %v4745 = vpop.f32.mrb[0].mxu0
      %v4746 = vadd.f32 0.0, %v4745
      %v4747 = vpop.f32.mrb[0].mxu0
      %4748 = vmatprep.mubr.bf16.mxu0 0
      %4749 = vmatmul.mubr.bf16.gmra.mrb[0].mxu0 %v4624
      %v4750 = vpop.f32.mrb[0].mxu0
      %v4751 = vadd.f32 0.0, %v4750
      %v4752 = vpop.f32.mrb[0].mxu0
      %v4753 = vpop.f32.mrb[0].mxu0
      %v4754 = vadd.f32 0.0, %v4753
      %v4755 = vpop.f32.mrb[0].mxu0
      %4756 = vmatprep.mubr.bf16.mxu0 0
      %4757 = vmatmul.mubr.bf16.gmra.mrb[0].mxu0 %v4626
      %v4758 = vpop.f32.mrb[0].mxu0
      %v4759 = vadd.f32 0.0, %v4758
      %v4760 = vpop.f32.mrb[0].mxu0
      %v4761 = vpop.f32.mrb[0].mxu0
      %v4762 = vadd.f32 0.0, %v4761
      %v4763 = vpop.f32.mrb[0].mxu0
      %4764 = vmatprep.mubr.bf16.mxu0 0
      %4765 = vmatmul.mubr.bf16.gmra.mrb[0].mxu0 %v4628
      %v4766 = vpop.f32.mrb[0].mxu0
      %v4767 = vadd.f32 0.0, %v4766
      %v4768 = vpop.f32.mrb[0].mxu0
      %v4769 = vpop.f32.mrb[0].mxu0
      %v4770 = vadd.f32 0.0, %v4769
      %v4771 = vpop.f32.mrb[0].mxu0
      %4772 = vmatprep.mubr.bf16.mxu0 0
      %4773 = vmatmul.mubr.bf16.gmra.mrb[0].mxu0 %v4630
      %v4774 = vpop.f32.mrb[0].mxu0
      %v4775 = vadd.f32 0.0, %v4774
      %v4776 = vpop.f32.mrb[0].mxu0
      %v4777 = vpop.f32.mrb[0].mxu0
      %v4778 = vadd.f32 0.0, %v4777
      %v4779 = vpop.f32.mrb[0].mxu0
      %4780 = vmatprep.mubr.bf16.mxu0 0
      %4781 = vmatmul.mubr.bf16.gmra.mrb[0].mxu0 %v4632
      %v4782 = vpop.f32.mrb[0].mxu0
      %v4783 = vadd.f32 0.0, %v4782
      %v4784 = vpop.f32.mrb[0].mxu0
      %v4785 = vpop.f32.mrb[0].mxu0
      %v4786 = vadd.f32 0.0, %v4785
      %v4787 = vpop.f32.mrb[0].mxu0
      %4788 = vmatprep.mubr.bf16.mxu0 0
      %4789 = vmatmul.mubr.bf16.gmra.mrb[0].mxu0 %v4634
      %v4790 = vpop.f32.mrb[0].mxu0
      %v4791 = vadd.f32 0.0, %v4790
      %v4792 = vpop.f32.mrb[0].mxu0
      %v4793 = vpop.f32.mrb[0].mxu0
      %v4794 = vadd.f32 0.0, %v4793
      %v4795 = vpop.f32.mrb[0].mxu0
      %4796 = vdwg.mxu0
      %v4799 = vunpack.c.l.b16 %v2928
      %v4800 = vunpack.c.l.b16 %v2929
      %v4801 = vpack.c.b16 %v4800, %v4799
      %v4803 = vsel %vm4603, %v2882, 0
      %v4805 = vsel %vm4603, %v2885, 0
      %v4807 = vsel %vm4603, %v2888, 0
      %v4809 = vsel %vm4603, %v2891, 0
      %v4811 = vsel %vm4603, %v2894, 0
      %v4813 = vsel %vm4603, %v2897, 0
      %v4815 = vsel %vm4603, %v2900, 0
      %v4817 = vsel %vm4603, %v2903, 0
      %v4819 = vsel %vm4603, %v2906, 0
      %v4821 = vsel %vm4603, %v2909, 0
      %v4823 = vsel %vm4603, %v2912, 0
      %v4825 = vsel %vm4603, %v2915, 0
      %v4827 = vsel %vm4603, %v2918, 0
      %v4829 = vsel %vm4603, %v2921, 0
      %v4831 = vsel %vm4603, %v2924, 0
      %v4833 = vsel %vm4603, %v2927, 0
      %4835 = vmatprep.subr.bf16.mxu0 0
      %4836 = vmatpush1.bf16.msra.mxu0 %v4801
      %4837 = vmatprep.subr.bf16.mxu0 0
      %4838 = vmatpush1.bf16.msra.mxu0 0
      %4839 = vmatprep.subr.bf16.mxu0 0
      %4840 = vmatpush1.bf16.msra.mxu0 0
      %4841 = vmatprep.subr.bf16.mxu0 0
      %4842 = vmatpush1.bf16.msra.mxu0 0
      %4843 = vmatprep.subr.bf16.mxu0 0
      %4844 = vmatpush1.bf16.msra.mxu0 0
      %4845 = vmatprep.subr.bf16.mxu0 0
      %4846 = vmatpush1.bf16.msra.mxu0 0
      %4847 = vmatprep.subr.bf16.mxu0 0
      %4848 = vmatpush1.bf16.msra.mxu0 0
      %4849 = vmatprep.subr.bf16.mxu0 0
      %4850 = vmatpush1.bf16.msra.mxu0 0
      %4851 = vmatprep.subr.bf16.mxu0 0
      %4852 = vmatpush1.bf16.msra.mxu0 0
      %4853 = vmatprep.subr.bf16.mxu0 0
      %4854 = vmatpush1.bf16.msra.mxu0 0
      %4855 = vmatprep.subr.bf16.mxu0 0
      %4856 = vmatpush1.bf16.msra.mxu0 0
      %4857 = vmatprep.subr.bf16.mxu0 0
      %4858 = vmatpush1.bf16.msra.mxu0 0
      %4859 = vmatprep.subr.bf16.mxu0 0
      %4860 = vmatpush1.bf16.msra.mxu0 0
      %4861 = vmatprep.subr.bf16.mxu0 0
      %4862 = vmatpush1.bf16.msra.mxu0 0
      %4863 = vmatprep.subr.bf16.mxu0 0
      %4864 = vmatpush1.bf16.msra.mxu0 0
      %4865 = vmatprep.subr.bf16.mxu0 0
      %4866 = vmatpush1.bf16.msra.mxu0 0
      %4867 = vmatprep.mubr.bf16.mxu0 0
      %4868 = vmatmul.mubr.bf16.gmra.mrb[0].mxu0 %v4803
      %v4869 = vpop.f32.mrb[0].mxu0
      %v4870 = vadd.f32 %v4671, %v4869
      %v4871 = vpop.f32.mrb[0].mxu0
      %v4872 = vpop.f32.mrb[0].mxu0
      %v4873 = vadd.f32 %v4674, %v4872
      %v4874 = vpop.f32.mrb[0].mxu0
      %4875 = vmatprep.mubr.bf16.mxu0 0
      %4876 = vmatmul.mubr.bf16.gmra.mrb[0].mxu0 %v4805
      %v4877 = vpop.f32.mrb[0].mxu0
      %v4878 = vadd.f32 %v4679, %v4877
      %v4879 = vpop.f32.mrb[0].mxu0
      %v4880 = vpop.f32.mrb[0].mxu0
      %v4881 = vadd.f32 %v4682, %v4880
      %v4882 = vpop.f32.mrb[0].mxu0
      %4883 = vmatprep.mubr.bf16.mxu0 0
      %4884 = vmatmul.mubr.bf16.gmra.mrb[0].mxu0 %v4807
      %v4885 = vpop.f32.mrb[0].mxu0
      %v4886 = vadd.f32 %v4687, %v4885
      %v4887 = vpop.f32.mrb[0].mxu0
      %v4888 = vpop.f32.mrb[0].mxu0
      %v4889 = vadd.f32 %v4690, %v4888
      %v4890 = vpop.f32.mrb[0].mxu0
      %4891 = vmatprep.mubr.bf16.mxu0 0
      %4892 = vmatmul.mubr.bf16.gmra.mrb[0].mxu0 %v4809
      %v4893 = vpop.f32.mrb[0].mxu0
      %v4894 = vadd.f32 %v4695, %v4893
      %v4895 = vpop.f32.mrb[0].mxu0
      %v4896 = vpop.f32.mrb[0].mxu0
      %v4897 = vadd.f32 %v4698, %v4896
      %v4898 = vpop.f32.mrb[0].mxu0
      %4899 = vmatprep.mubr.bf16.mxu0 0
      %4900 = vmatmul.mubr.bf16.gmra.mrb[0].mxu0 %v4811
      %v4901 = vpop.f32.mrb[0].mxu0
      %v4902 = vadd.f32 %v4703, %v4901
      %v4903 = vpop.f32.mrb[0].mxu0
      %v4904 = vpop.f32.mrb[0].mxu0
      %v4905 = vadd.f32 %v4706, %v4904
      %v4906 = vpop.f32.mrb[0].mxu0
      %4907 = vmatprep.mubr.bf16.mxu0 0
      %4908 = vmatmul.mubr.bf16.gmra.mrb[0].mxu0 %v4813
      %v4909 = vpop.f32.mrb[0].mxu0
      %v4910 = vadd.f32 %v4711, %v4909
      %v4911 = vpop.f32.mrb[0].mxu0
      %v4912 = vpop.f32.mrb[0].mxu0
      %v4913 = vadd.f32 %v4714, %v4912
      %v4914 = vpop.f32.mrb[0].mxu0
      %4915 = vmatprep.mubr.bf16.mxu0 0
      %4916 = vmatmul.mubr.bf16.gmra.mrb[0].mxu0 %v4815
      %v4917 = vpop.f32.mrb[0].mxu0
      %v4918 = vadd.f32 %v4719, %v4917
      %v4919 = vpop.f32.mrb[0].mxu0
      %v4920 = vpop.f32.mrb[0].mxu0
      %v4921 = vadd.f32 %v4722, %v4920
      %v4922 = vpop.f32.mrb[0].mxu0
      %4923 = vmatprep.mubr.bf16.mxu0 0
      %4924 = vmatmul.mubr.bf16.gmra.mrb[0].mxu0 %v4817
      %v4925 = vpop.f32.mrb[0].mxu0
      %v4926 = vadd.f32 %v4727, %v4925
      %v4927 = vpop.f32.mrb[0].mxu0
      %v4928 = vpop.f32.mrb[0].mxu0
      %v4929 = vadd.f32 %v4730, %v4928
      %v4930 = vpop.f32.mrb[0].mxu0
      %4931 = vmatprep.mubr.bf16.mxu0 0
      %4932 = vmatmul.mubr.bf16.gmra.mrb[0].mxu0 %v4819
      %v4933 = vpop.f32.mrb[0].mxu0
      %v4934 = vadd.f32 %v4735, %v4933
      %v4935 = vpop.f32.mrb[0].mxu0
      %v4936 = vpop.f32.mrb[0].mxu0
      %v4937 = vadd.f32 %v4738, %v4936
      %v4938 = vpop.f32.mrb[0].mxu0
      %4939 = vmatprep.mubr.bf16.mxu0 0
      %4940 = vmatmul.mubr.bf16.gmra.mrb[0].mxu0 %v4821
      %v4941 = vpop.f32.mrb[0].mxu0
      %v4942 = vadd.f32 %v4743, %v4941
      %v4943 = vpop.f32.mrb[0].mxu0
      %v4944 = vpop.f32.mrb[0].mxu0
      %v4945 = vadd.f32 %v4746, %v4944
      %v4946 = vpop.f32.mrb[0].mxu0
      %4947 = vmatprep.mubr.bf16.mxu0 0
      %4948 = vmatmul.mubr.bf16.gmra.mrb[0].mxu0 %v4823
      %v4949 = vpop.f32.mrb[0].mxu0
      %v4950 = vadd.f32 %v4751, %v4949
      %v4951 = vpop.f32.mrb[0].mxu0
      %v4952 = vpop.f32.mrb[0].mxu0
      %v4953 = vadd.f32 %v4754, %v4952
      %v4954 = vpop.f32.mrb[0].mxu0
      %4955 = vmatprep.mubr.bf16.mxu0 0
      %4956 = vmatmul.mubr.bf16.gmra.mrb[0].mxu0 %v4825
      %v4957 = vpop.f32.mrb[0].mxu0
      %v4958 = vadd.f32 %v4759, %v4957
      %v4959 = vpop.f32.mrb[0].mxu0
      %v4960 = vpop.f32.mrb[0].mxu0
      %v4961 = vadd.f32 %v4762, %v4960
      %v4962 = vpop.f32.mrb[0].mxu0
      %4963 = vmatprep.mubr.bf16.mxu0 0
      %4964 = vmatmul.mubr.bf16.gmra.mrb[0].mxu0 %v4827
      %v4965 = vpop.f32.mrb[0].mxu0
      %v4966 = vadd.f32 %v4767, %v4965
      %v4967 = vpop.f32.mrb[0].mxu0
      %v4968 = vpop.f32.mrb[0].mxu0
      %v4969 = vadd.f32 %v4770, %v4968
      %v4970 = vpop.f32.mrb[0].mxu0
      %4971 = vmatprep.mubr.bf16.mxu0 0
      %4972 = vmatmul.mubr.bf16.gmra.mrb[0].mxu0 %v4829
      %v4973 = vpop.f32.mrb[0].mxu0
      %v4974 = vadd.f32 %v4775, %v4973
      %v4975 = vpop.f32.mrb[0].mxu0
      %v4976 = vpop.f32.mrb[0].mxu0
      %v4977 = vadd.f32 %v4778, %v4976
      %v4978 = vpop.f32.mrb[0].mxu0
      %4979 = vmatprep.mubr.bf16.mxu0 0
      %4980 = vmatmul.mubr.bf16.gmra.mrb[0].mxu0 %v4831
      %v4981 = vpop.f32.mrb[0].mxu0
      %v4982 = vadd.f32 %v4783, %v4981
      %v4983 = vpop.f32.mrb[0].mxu0
      %v4984 = vpop.f32.mrb[0].mxu0
      %v4985 = vadd.f32 %v4786, %v4984
      %v4986 = vpop.f32.mrb[0].mxu0
      %4987 = vmatprep.mubr.bf16.mxu0 0
      %4988 = vmatmul.mubr.bf16.gmra.mrb[0].mxu0 %v4833
      %v4989 = vpop.f32.mrb[0].mxu0
      %v4990 = vadd.f32 %v4791, %v4989
      %v4991 = vpop.f32.mrb[0].mxu0
      %v4992 = vpop.f32.mrb[0].mxu0
      %v4993 = vadd.f32 %v4794, %v4992
      %v4994 = vpop.f32.mrb[0].mxu0
      %4995 = vdwg.mxu0
      %v4996 = vld [vmem:[%s5] sm:$0x1]
      %v4998 = vlaneseq
      %v4999 = vshrl.u32 %v4998, 7
      %v5000 = vsub.s32 0, %v4999
      %v5001 = vrot.slane %v4996, %v5000
      %v5003 = vadd.f32 %v4870, %v5001
      %v5004 = vadd.f32 %v4873, %v5001
      %v5005 = vadd.f32 %v4878, %v5001
      %v5006 = vadd.f32 %v4881, %v5001
      %v5007 = vadd.f32 %v4886, %v5001
      %v5008 = vadd.f32 %v4889, %v5001
      %v5009 = vadd.f32 %v4894, %v5001
      %v5010 = vadd.f32 %v4897, %v5001
      %v5011 = vadd.f32 %v4902, %v5001
      %v5012 = vadd.f32 %v4905, %v5001
      %v5013 = vadd.f32 %v4910, %v5001
      %v5014 = vadd.f32 %v4913, %v5001
      %v5015 = vadd.f32 %v4918, %v5001
      %v5016 = vadd.f32 %v4921, %v5001
      %v5017 = vadd.f32 %v4926, %v5001
      %v5018 = vadd.f32 %v4929, %v5001
      %v5019 = vadd.f32 %v4934, %v5001
      %v5020 = vadd.f32 %v4937, %v5001
      %v5021 = vadd.f32 %v4942, %v5001
      %v5022 = vadd.f32 %v4945, %v5001
      %v5023 = vadd.f32 %v4950, %v5001
      %v5024 = vadd.f32 %v4953, %v5001
      %v5025 = vadd.f32 %v4958, %v5001
      %v5026 = vadd.f32 %v4961, %v5001
      %v5027 = vadd.f32 %v4966, %v5001
      %v5028 = vadd.f32 %v4969, %v5001
      %v5029 = vadd.f32 %v4974, %v5001
      %v5030 = vadd.f32 %v4977, %v5001
      %v5031 = vadd.f32 %v4982, %v5001
      %v5032 = vadd.f32 %v4985, %v5001
      %v5033 = vadd.f32 %v4990, %v5001
      %v5034 = vadd.f32 %v4993, %v5001
      %v5035 = vxor.u32 %v5003, 2147483648
      %v5036 = vxor.u32 %v5004, 2147483648
      %v5037 = vxor.u32 %v5005, 2147483648
      %v5038 = vxor.u32 %v5006, 2147483648
      %v5039 = vxor.u32 %v5007, 2147483648
      %v5040 = vxor.u32 %v5008, 2147483648
      %v5041 = vxor.u32 %v5009, 2147483648
      %v5042 = vxor.u32 %v5010, 2147483648
      %v5043 = vxor.u32 %v5011, 2147483648
      %v5044 = vxor.u32 %v5012, 2147483648
      %v5045 = vxor.u32 %v5013, 2147483648
      %v5046 = vxor.u32 %v5014, 2147483648
      %v5047 = vxor.u32 %v5015, 2147483648
      %v5048 = vxor.u32 %v5016, 2147483648
      %v5049 = vxor.u32 %v5017, 2147483648
      %v5050 = vxor.u32 %v5018, 2147483648
      %v5051 = vxor.u32 %v5019, 2147483648
      %v5052 = vxor.u32 %v5020, 2147483648
      %v5053 = vxor.u32 %v5021, 2147483648
      %v5054 = vxor.u32 %v5022, 2147483648
      %v5055 = vxor.u32 %v5023, 2147483648
      %v5056 = vxor.u32 %v5024, 2147483648
      %v5057 = vxor.u32 %v5025, 2147483648
      %v5058 = vxor.u32 %v5026, 2147483648
      %v5059 = vxor.u32 %v5027, 2147483648
      %v5060 = vxor.u32 %v5028, 2147483648
      %v5061 = vxor.u32 %v5029, 2147483648
      %v5062 = vxor.u32 %v5030, 2147483648
      %v5063 = vxor.u32 %v5031, 2147483648
      %v5064 = vxor.u32 %v5032, 2147483648
      %v5065 = vxor.u32 %v5033, 2147483648
      %v5066 = vxor.u32 %v5034, 2147483648
      %v5067 = vmul.f32 %v5035, 1.442695
      %v5068 = vpow.pop %v5067
      %v5069 = vmul.f32 %v5036, 1.442695
      %v5070 = vpow.pop %v5069
      %v5071 = vmul.f32 %v5037, 1.442695
      %v5072 = vpow.pop %v5071
      %v5073 = vmul.f32 %v5038, 1.442695
      %v5074 = vpow.pop %v5073
      %v5075 = vmul.f32 %v5039, 1.442695
      %v5076 = vpow.pop %v5075
      %v5077 = vmul.f32 %v5040, 1.442695
      %v5078 = vpow.pop %v5077
      %v5079 = vmul.f32 %v5041, 1.442695
      %v5080 = vpow.pop %v5079
      %v5081 = vmul.f32 %v5042, 1.442695
      %v5082 = vpow.pop %v5081
      %v5083 = vmul.f32 %v5043, 1.442695
      %v5084 = vpow.pop %v5083
      %v5085 = vmul.f32 %v5044, 1.442695
      %v5086 = vpow.pop %v5085
      %v5087 = vmul.f32 %v5045, 1.442695
      %v5088 = vpow.pop %v5087
      %v5089 = vmul.f32 %v5046, 1.442695
      %v5090 = vpow.pop %v5089
      %v5091 = vmul.f32 %v5047, 1.442695
      %v5092 = vpow.pop %v5091
      %v5093 = vmul.f32 %v5048, 1.442695
      %v5094 = vpow.pop %v5093
      %v5095 = vmul.f32 %v5049, 1.442695
      %v5096 = vpow.pop %v5095
      %v5097 = vmul.f32 %v5050, 1.442695
      %v5098 = vpow.pop %v5097
      %v5099 = vmul.f32 %v5051, 1.442695
      %v5100 = vpow.pop %v5099
      %v5101 = vmul.f32 %v5052, 1.442695
      %v5102 = vpow.pop %v5101
      %v5103 = vmul.f32 %v5053, 1.442695
      %v5104 = vpow.pop %v5103
      %v5105 = vmul.f32 %v5054, 1.442695
      %v5106 = vpow.pop %v5105
      %v5107 = vmul.f32 %v5055, 1.442695
      %v5108 = vpow.pop %v5107
      %v5109 = vmul.f32 %v5056, 1.442695
      %v5110 = vpow.pop %v5109
      %v5111 = vmul.f32 %v5057, 1.442695
      %v5112 = vpow.pop %v5111
      %v5113 = vmul.f32 %v5058, 1.442695
      %v5114 = vpow.pop %v5113
      %v5115 = vmul.f32 %v5059, 1.442695
      %v5116 = vpow.pop %v5115
      %v5117 = vmul.f32 %v5060, 1.442695
      %v5118 = vpow.pop %v5117
      %v5119 = vmul.f32 %v5061, 1.442695
      %v5120 = vpow.pop %v5119
      %v5121 = vmul.f32 %v5062, 1.442695
      %v5122 = vpow.pop %v5121
      %v5123 = vmul.f32 %v5063, 1.442695
      %v5124 = vpow.pop %v5123
      %v5125 = vmul.f32 %v5064, 1.442695
      %v5126 = vpow.pop %v5125
      %v5127 = vmul.f32 %v5065, 1.442695
      %v5128 = vpow.pop %v5127
      %v5129 = vmul.f32 %v5066, 1.442695
      %v5130 = vpow.pop %v5129
      %v5131 = vadd.f32 %v5068, 1.0
      %v5132 = vadd.f32 %v5070, 1.0
      %v5133 = vadd.f32 %v5072, 1.0
      %v5134 = vadd.f32 %v5074, 1.0
      %v5135 = vadd.f32 %v5076, 1.0
      %v5136 = vadd.f32 %v5078, 1.0
      %v5137 = vadd.f32 %v5080, 1.0
      %v5138 = vadd.f32 %v5082, 1.0
      %v5139 = vadd.f32 %v5084, 1.0
      %v5140 = vadd.f32 %v5086, 1.0
      %v5141 = vadd.f32 %v5088, 1.0
      %v5142 = vadd.f32 %v5090, 1.0
      %v5143 = vadd.f32 %v5092, 1.0
      %v5144 = vadd.f32 %v5094, 1.0
      %v5145 = vadd.f32 %v5096, 1.0
      %v5146 = vadd.f32 %v5098, 1.0
      %v5147 = vadd.f32 %v5100, 1.0
      %v5148 = vadd.f32 %v5102, 1.0
      %v5149 = vadd.f32 %v5104, 1.0
      %v5150 = vadd.f32 %v5106, 1.0
      %v5151 = vadd.f32 %v5108, 1.0
      %v5152 = vadd.f32 %v5110, 1.0
      %v5153 = vadd.f32 %v5112, 1.0
      %v5154 = vadd.f32 %v5114, 1.0
      %v5155 = vadd.f32 %v5116, 1.0
      %v5156 = vadd.f32 %v5118, 1.0
      %v5157 = vadd.f32 %v5120, 1.0
      %v5158 = vadd.f32 %v5122, 1.0
      %v5159 = vadd.f32 %v5124, 1.0
      %v5160 = vadd.f32 %v5126, 1.0
      %v5161 = vadd.f32 %v5128, 1.0
      %v5162 = vadd.f32 %v5130, 1.0
      %v5163 = vrcp.pop %v5131
      %v5164 = vmul.f32 1.0, %v5163
      %v5165 = vrcp.pop %v5132
      %v5166 = vmul.f32 1.0, %v5165
      %v5167 = vrcp.pop %v5133
      %v5168 = vmul.f32 1.0, %v5167
      %v5169 = vrcp.pop %v5134
      %v5170 = vmul.f32 1.0, %v5169
      %v5171 = vrcp.pop %v5135
      %v5172 = vmul.f32 1.0, %v5171
      %v5173 = vrcp.pop %v5136
      %v5174 = vmul.f32 1.0, %v5173
      %v5175 = vrcp.pop %v5137
      %v5176 = vmul.f32 1.0, %v5175
      %v5177 = vrcp.pop %v5138
      %v5178 = vmul.f32 1.0, %v5177
      %v5179 = vrcp.pop %v5139
      %v5180 = vmul.f32 1.0, %v5179
      %v5181 = vrcp.pop %v5140
      %v5182 = vmul.f32 1.0, %v5181
      %v5183 = vrcp.pop %v5141
      %v5184 = vmul.f32 1.0, %v5183
      %v5185 = vrcp.pop %v5142
      %v5186 = vmul.f32 1.0, %v5185
      %v5187 = vrcp.pop %v5143
      %v5188 = vmul.f32 1.0, %v5187
      %v5189 = vrcp.pop %v5144
      %v5190 = vmul.f32 1.0, %v5189
      %v5191 = vrcp.pop %v5145
      %v5192 = vmul.f32 1.0, %v5191
      %v5193 = vrcp.pop %v5146
      %v5194 = vmul.f32 1.0, %v5193
      %v5195 = vrcp.pop %v5147
      %v5196 = vmul.f32 1.0, %v5195
      %v5197 = vrcp.pop %v5148
      %v5198 = vmul.f32 1.0, %v5197
      %v5199 = vrcp.pop %v5149
      %v5200 = vmul.f32 1.0, %v5199
      %v5201 = vrcp.pop %v5150
      %v5202 = vmul.f32 1.0, %v5201
      %v5203 = vrcp.pop %v5151
      %v5204 = vmul.f32 1.0, %v5203
      %v5205 = vrcp.pop %v5152
      %v5206 = vmul.f32 1.0, %v5205
      %v5207 = vrcp.pop %v5153
      %v5208 = vmul.f32 1.0, %v5207
      %v5209 = vrcp.pop %v5154
      %v5210 = vmul.f32 1.0, %v5209
      %v5211 = vrcp.pop %v5155
      %v5212 = vmul.f32 1.0, %v5211
      %v5213 = vrcp.pop %v5156
      %v5214 = vmul.f32 1.0, %v5213
      %v5215 = vrcp.pop %v5157
      %v5216 = vmul.f32 1.0, %v5215
      %v5217 = vrcp.pop %v5158
      %v5218 = vmul.f32 1.0, %v5217
      %v5219 = vrcp.pop %v5159
      %v5220 = vmul.f32 1.0, %v5219
      %v5221 = vrcp.pop %v5160
      %v5222 = vmul.f32 1.0, %v5221
      %v5223 = vrcp.pop %v5161
      %v5224 = vmul.f32 1.0, %v5223
      %v5225 = vrcp.pop %v5162
      %v5226 = vmul.f32 1.0, %v5225
      %v5227 = vmul.f32 %v5003, %v5164
      %v5228 = vmul.f32 %v5004, %v5166
      %v5229 = vmul.f32 %v5005, %v5168
      %v5230 = vmul.f32 %v5006, %v5170
      %v5231 = vmul.f32 %v5007, %v5172
      %v5232 = vmul.f32 %v5008, %v5174
      %v5233 = vmul.f32 %v5009, %v5176
      %v5234 = vmul.f32 %v5010, %v5178
      %v5235 = vmul.f32 %v5011, %v5180
      %v5236 = vmul.f32 %v5012, %v5182
      %v5237 = vmul.f32 %v5013, %v5184
      %v5238 = vmul.f32 %v5014, %v5186
      %v5239 = vmul.f32 %v5015, %v5188
      %v5240 = vmul.f32 %v5016, %v5190
      %v5241 = vmul.f32 %v5017, %v5192
      %v5242 = vmul.f32 %v5018, %v5194
      %v5243 = vmul.f32 %v5019, %v5196
      %v5244 = vmul.f32 %v5020, %v5198
      %v5245 = vmul.f32 %v5021, %v5200
      %v5246 = vmul.f32 %v5022, %v5202
      %v5247 = vmul.f32 %v5023, %v5204
      %v5248 = vmul.f32 %v5024, %v5206
      %v5249 = vmul.f32 %v5025, %v5208
      %v5250 = vmul.f32 %v5026, %v5210
      %v5251 = vmul.f32 %v5027, %v5212
      %v5252 = vmul.f32 %v5028, %v5214
      %v5253 = vmul.f32 %v5029, %v5216
      %v5254 = vmul.f32 %v5030, %v5218
      %v5255 = vmul.f32 %v5031, %v5220
      %v5256 = vmul.f32 %v5032, %v5222
      %v5257 = vmul.f32 %v5033, %v5224
      %v5258 = vmul.f32 %v5034, %v5226
      %5259 = vst.msk [vmem:[%s251] sm:$0xff] %vm4603, %v5227
      %5260 = vst.msk [vmem:[%s251 + $0x8] sm:$0xff] %vm4603, %v5228
      %5261 = vst.msk [vmem:[%s251 + $0x10] sm:$0xff] %vm4603, %v5229
      %5262 = vst.msk [vmem:[%s251 + $0x18] sm:$0xff] %vm4603, %v5230
      %5263 = vst.msk [vmem:[%s251 + $0x20] sm:$0xff] %vm4603, %v5231
      %5264 = vst.msk [vmem:[%s251 + $0x28] sm:$0xff] %vm4603, %v5232
      %5265 = vst.msk [vmem:[%s251 + $0x30] sm:$0xff] %vm4603, %v5233
      %5266 = vst.msk [vmem:[%s251 + $0x38] sm:$0xff] %vm4603, %v5234
      %5267 = vst.msk [vmem:[%s251 + $0x40] sm:$0xff] %vm4603, %v5235
      %5268 = vst.msk [vmem:[%s251 + $0x48] sm:$0xff] %vm4603, %v5236
      %5269 = vst.msk [vmem:[%s251 + $0x50] sm:$0xff] %vm4603, %v5237
      %5270 = vst.msk [vmem:[%s251 + $0x58] sm:$0xff] %vm4603, %v5238
      %5271 = vst.msk [vmem:[%s251 + $0x60] sm:$0xff] %vm4603, %v5239
      %5272 = vst.msk [vmem:[%s251 + $0x68] sm:$0xff] %vm4603, %v5240
      %5273 = vst.msk [vmem:[%s251 + $0x70] sm:$0xff] %vm4603, %v5241
      %5274 = vst.msk [vmem:[%s251 + $0x78] sm:$0xff] %vm4603, %v5242
      %5275 = vst.msk [vmem:[%s251 + $0x80] sm:$0xff] %vm4603, %v5243
      %5276 = vst.msk [vmem:[%s251 + $0x88] sm:$0xff] %vm4603, %v5244
      %5277 = vst.msk [vmem:[%s251 + $0x90] sm:$0xff] %vm4603, %v5245
      %5278 = vst.msk [vmem:[%s251 + $0x98] sm:$0xff] %vm4603, %v5246
      %5279 = vst.msk [vmem:[%s251 + $0xa0] sm:$0xff] %vm4603, %v5247
      %5280 = vst.msk [vmem:[%s251 + $0xa8] sm:$0xff] %vm4603, %v5248
      %5281 = vst.msk [vmem:[%s251 + $0xb0] sm:$0xff] %vm4603, %v5249
      %5282 = vst.msk [vmem:[%s251 + $0xb8] sm:$0xff] %vm4603, %v5250
      %5283 = vst.msk [vmem:[%s251 + $0xc0] sm:$0xff] %vm4603, %v5251
      %5284 = vst.msk [vmem:[%s251 + $0xc8] sm:$0xff] %vm4603, %v5252
      %5285 = vst.msk [vmem:[%s251 + $0xd0] sm:$0xff] %vm4603, %v5253
      %5286 = vst.msk [vmem:[%s251 + $0xd8] sm:$0xff] %vm4603, %v5254
      %5287 = vst.msk [vmem:[%s251 + $0xe0] sm:$0xff] %vm4603, %v5255
      %5288 = vst.msk [vmem:[%s251 + $0xe8] sm:$0xff] %vm4603, %v5256
      %5289 = vst.msk [vmem:[%s251 + $0xf0] sm:$0xff] %vm4603, %v5257
      %5290 = vst.msk [vmem:[%s251 + $0xf8] sm:$0xff] %vm4603, %v5258
      %p5291 = scmp.lt.s32.totalorder %s17, 1
      %s5292 = scalar_select %p5291, %s17, 1
      %s5293 = smul.addr %s5292, 32
      %s5294 = smul.addr %s5293, 8
      %s5295 = scalar_lea.vmem %s6, %s5294
      // Predicated region
      $region45: #{tpu_custom_call.1} parent=43 // pred_check
        %p5296 = pneg %p166
      $region46: #{tpu_custom_call.1} parent=43 // pred_check_branch
        %5298 = sbr.rel (%p5296) target = $region48
      $region47: #{tpu_custom_call.1} parent=43 // pred_region
        _
      $region48: #{tpu_custom_call.1} parent=43 // pred_fallthru
        _
    $region44: #{tpu_custom_call.1} parent=5 // pred_fallthru
      _
    %p5299 = scmp.le.s32.totalorder 2, %s12
    // Predicated region
    $region49: #{tpu_custom_call.1} parent=5 // pred_check
      %p5300 = pneg %p5299
    $region50: #{tpu_custom_call.1} parent=5 // pred_check_branch
      %5302 = sbr.rel (%p5300) target = $region52
    $region51: #{tpu_custom_call.1} parent=5 // pred_region
      %s5303 = ssub.s32 %s12, 2
      // Predicated region
      $region53: #{tpu_custom_call.1} parent=51 // pred_check
        %p5304 = pneg %p172
      $region54: #{tpu_custom_call.1} parent=51 // pred_check_branch
        %5306 = sbr.rel (%p5304) target = $region56
      $region55: #{tpu_custom_call.1} parent=51 // pred_region
        %p5307 = scmp.lt.s32.totalorder %s18, 1
        %s5308 = scalar_select %p5307, %s18, 1
        %s5309 = smul.addr %s5308, 32
        %s5310 = smul.addr %s5309, 8
        %s5311 = scalar_lea.vmem %s6, %s5310
      $region56: #{tpu_custom_call.1} parent=51 // pred_fallthru
        _
    $region52: #{tpu_custom_call.1} parent=5 // pred_fallthru
      _
  $region6: #{tpu_custom_call.1} parent=0 // loop_footer
    %s16 = sadd.s32 1, %s12
  $region7: #{tpu_custom_call.1} parent=0 // loop_footer_branch
    %11 = sbr.rel target = $region3
  $region8: #{tpu_custom_call.1} parent=0 // loop_exit
    _

</llo_original>
